<compile_context>
chip_gen: v7x
topology: tpu7x:2x2x1
jax: 0.10.0
libtpu: 0.0.40
codegen_flags: <defaults>
</compile_context>

<pallas_src>
from functools import partial

import jax
import jax.numpy as jnp
from jax.experimental import pallas as pl
from jax.experimental.pallas import tpu as pltpu

NEG_SLOPE = 0.01  # PyTorch nn.LeakyReLU() default


def _leaky_relu(x):
    return jnp.where(x >= 0, x, NEG_SLOPE * x)


def _residual_block_kernel(x_ref, w1_ref, b1_ref, w2_ref, b2_ref,
                           out_ref, pad_ref, *, H, W, C, K, PAD):
    Hp, Wp = H + 2 * PAD, W + 2 * PAD

    # ---- zero only the halo border of the shared padded scratch ----------
    # (interior is fully overwritten below; done every step so it is correct
    #  even when the parallel batch axis is sharded across TensorCores.)
    pad_ref[0:PAD, :, :] = jnp.zeros((PAD, Wp, C), jnp.float32)
    pad_ref[PAD + H:Hp, :, :] = jnp.zeros((PAD, Wp, C), jnp.float32)
    pad_ref[:, 0:PAD, :] = jnp.zeros((Hp, PAD, C), jnp.float32)
    pad_ref[:, PAD + W:Wp, :] = jnp.zeros((Hp, PAD, C), jnp.float32)

    # ---- single HBM input stream: x is both conv1 input and the residual ---
    x = x_ref[0]                                   # (H, W, C) f32
    pad_ref[PAD:PAD + H, PAD:PAD + W, :] = x

    def im2col():
        # 9 shifted windows concatenated along lanes -> (H*W, K*K*C), bf16
        cols = [pad_ref[kh:kh + H, kw:kw + W, :].reshape(H * W, C)
                for kh in range(K) for kw in range(K)]
        return jnp.concatenate(cols, axis=-1).astype(jnp.bfloat16)

    # ---- conv1: one bf16 MXU matmul, f32 accumulation ----------------------
    acc1 = jnp.dot(im2col(), w1_ref[...], preferred_element_type=jnp.float32)
    h = _leaky_relu(acc1 + b1_ref[...])            # (H*W, C) f32

    # ---- re-pad the intermediate into the SAME scratch ---------------------
    pad_ref[PAD:PAD + H, PAD:PAD + W, :] = h.reshape(H, W, C)

    # ---- conv2 + bias + residual + leaky relu -------------------------------
    acc2 = jnp.dot(im2col(), w2_ref[...], preferred_element_type=jnp.float32)
    y = _leaky_relu(acc2 + b2_ref[...] + x.reshape(H * W, C))
    out_ref[0] = y.reshape(H, W, C).astype(out_ref.dtype)


def residual_block(x, w1, b1, w2, b2, *, padding=1):
    """x: (N, H, W, C) NHWC; w*: (K, K, Cin, Cout) HWIO; b*: (Cout,)."""
    N, H, W, C = x.shape
    K = w1.shape[0]
    assert w1.shape == (K, K, C, C) and w2.shape == (K, K, C, C)
    Hp, Wp = H + 2 * padding, W + 2 * padding

    # im2col weight layout: feature index = (kh*K + kw)*Cin + cin (row-major
    # reshape of HWIO), pre-cast to bf16 for the MXU.
    w1_r = w1.reshape(K * K * C, C).astype(jnp.bfloat16)
    w2_r = w2.reshape(K * K * C, C).astype(jnp.bfloat16)
    b1_r = b1.reshape(1, C).astype(jnp.float32)
    b2_r = b2.reshape(1, C).astype(jnp.float32)

    kernel = partial(_residual_block_kernel, H=H, W=W, C=C, K=K, PAD=padding)

    flops = N * 2 * (2 * K * K * H * W * C * C)          # 2 convs, 2 flops/MAC
    bytes_accessed = (2 * N * H * W * C * 4              # x in + y out (f32)
                      + 2 * K * K * C * C * 2            # bf16 weights
                      + 2 * C * 4)                       # biases

    return pl.pallas_call(
        kernel,
        out_shape=jax.ShapeDtypeStruct((N, H, W, C), x.dtype),
        grid_spec=pltpu.PrefetchScalarGridSpec(
            num_scalar_prefetch=0,
            grid=(N,),
            in_specs=[
                pl.BlockSpec((1, H, W, C), lambda n: (n, 0, 0, 0)),   # x
                pl.BlockSpec((K * K * C, C), lambda n: (0, 0)),       # w1
                pl.BlockSpec((1, C), lambda n: (0, 0)),               # b1
                pl.BlockSpec((K * K * C, C), lambda n: (0, 0)),       # w2
                pl.BlockSpec((1, C), lambda n: (0, 0)),               # b2
            ],
            out_specs=pl.BlockSpec((1, H, W, C), lambda n: (n, 0, 0, 0)),
            # one shared f32 padded scratch, reused for both convs
            scratch_shapes=[pltpu.VMEM((Hp, Wp, C), jnp.float32)],
        ),
        compiler_params=pltpu.CompilerParams(
            dimension_semantics=("parallel",)),
        cost_estimate=pl.CostEstimate(
            flops=flops, transcendentals=0, bytes_accessed=bytes_accessed),
    )(x, w1_r, b1_r, w2_r, b2_r)


# ---------------- pure-JAX f32 reference (same math) ----------------
def _ref_conv(x, w, b, padding=1):
    N, H, W, C = x.shape
    K = w.shape[0]
    xp = jnp.pad(x, ((0, 0), (padding, padding), (padding, padding), (0, 0)))
    out = jnp.zeros((N, H, W, w.shape[-1]), jnp.float32)
    for kh in range(K):
        for kw in range(K):
            out = out + jnp.einsum('nhwc,co->nhwo',
                                   xp[:, kh:kh + H, kw:kw + W, :], w[kh, kw])
    return out + b.reshape(1, 1, 1, -1)


def _ref_residual_block(x, w1, b1, w2, b2):
    h = _leaky_relu(_ref_conv(x, w1, b1))
    y = _ref_conv(h, w2, b2) + x
    return _leaky_relu(y)


if __name__ == "__main__":
    # Module config consistent with the residual add: in_ch == out_ch, stride 1.
    N, H, W, C = 2, 16, 16, 4
    K = 3

    key = jax.random.PRNGKey(0)
    k_x, k_w1, k_b1, k_w2, k_b2 = jax.random.split(key, 5)

    x = jax.random.normal(k_x, (N, H, W, C), jnp.float32)
    # Build weights in PyTorch OIHW then convert to HWIO for the kernel.
    w1_oihw = jax.random.normal(k_w1, (C, C, K, K), jnp.float32) * 0.1
    w2_oihw = jax.random.normal(k_w2, (C, C, K, K), jnp.float32) * 0.1
    b1 = jax.random.normal(k_b1, (C,), jnp.float32) * 0.1
    b2 = jax.random.normal(k_b2, (C,), jnp.float32) * 0.1

    w1 = jnp.transpose(w1_oihw, (2, 3, 1, 0))  # (K, K, Cin, Cout)
    w2 = jnp.transpose(w2_oihw, (2, 3, 1, 0))

    out = residual_block(x, w1, b1, w2, b2)
    out = jax.block_until_ready(out)

    ref = _ref_residual_block(x, w1, b1, w2, b2)
    assert out.shape == (N, H, W, C)
    # bf16 matmul inputs (f32 accumulation) -> loosened tolerance vs f32 ref.
    assert jnp.allclose(out, ref, rtol=5e-2, atol=5e-2), (
        float(jnp.max(jnp.abs(out - ref))))

    print("KERNEL_OK")
</pallas_src>

<mosaic_0001>
module attributes {stable_mosaic.version = 11 : i64} {
  func.func @_residual_block_kernel(%arg0: i32, %arg1: memref<1x16x16x4xf32, #tpu.memory_space<vmem>>, %arg2: memref<36x4xbf16, #tpu.memory_space<vmem>>, %arg3: memref<1x4xf32, #tpu.memory_space<vmem>>, %arg4: memref<36x4xbf16, #tpu.memory_space<vmem>>, %arg5: memref<1x4xf32, #tpu.memory_space<vmem>>, %arg6: memref<1x16x16x4xf32, #tpu.memory_space<vmem>>, %arg7: memref<18x18x4xf32, #tpu.memory_space<vmem>>) attributes {dimension_semantics = [#tpu.dimension_semantics<parallel>], iteration_bounds = array<i64: 2>, scalar_prefetch = 0 : i64, scratch_operands = 1 : i64, tpu.core_type = #tpu.core_type<tc>, window_params = [{transform_indices = @transform_0, window_bounds = array<i64: 1, 16, 16, 4>}, {pipeline_mode = #tpu.pipeline_mode<synchronous>, transform_indices = @transform_1, window_bounds = array<i64: 36, 4>}, {pipeline_mode = #tpu.pipeline_mode<synchronous>, transform_indices = @transform_2, window_bounds = array<i64: 1, 4>}, {pipeline_mode = #tpu.pipeline_mode<synchronous>, transform_indices = @transform_3, window_bounds = array<i64: 36, 4>}, {pipeline_mode = #tpu.pipeline_mode<synchronous>, transform_indices = @transform_4, window_bounds = array<i64: 1, 4>}, {transform_indices = @transform_5, window_bounds = array<i64: 1, 16, 16, 4>}]} {
    %cst = arith.constant 0.000000e+00 : f32
    %0 = vector.broadcast %cst : f32 to vector<1x18x4xf32>
    %c0 = arith.constant 0 : index
    %c0_0 = arith.constant 0 : index
    %c0_1 = arith.constant 0 : index
    %1 = vector.load %arg7[%c0, %c0_0, %c0_1] : memref<18x18x4xf32, #tpu.memory_space<vmem>>, vector<1x18x4xf32>
    tpu.vector_store %arg7[%c0, %c0_0, %c0_1], %0 {strides = array<i32>} : memref<18x18x4xf32, #tpu.memory_space<vmem>>, vector<1x18x4xf32>,
    %cst_2 = arith.constant 0.000000e+00 : f32
    %2 = vector.broadcast %cst_2 : f32 to vector<1x18x4xf32>
    %c17 = arith.constant 17 : index
    %c0_3 = arith.constant 0 : index
    %c0_4 = arith.constant 0 : index
    %3 = vector.load %arg7[%c17, %c0_3, %c0_4] : memref<18x18x4xf32, #tpu.memory_space<vmem>>, vector<1x18x4xf32>
    tpu.vector_store %arg7[%c17, %c0_3, %c0_4], %2 {strides = array<i32>} : memref<18x18x4xf32, #tpu.memory_space<vmem>>, vector<1x18x4xf32>,
    %cst_5 = arith.constant 0.000000e+00 : f32
    %4 = vector.broadcast %cst_5 : f32 to vector<18x1x4xf32>
    %c0_6 = arith.constant 0 : index
    %c0_7 = arith.constant 0 : index
    %c0_8 = arith.constant 0 : index
    %5 = vector.load %arg7[%c0_6, %c0_7, %c0_8] : memref<18x18x4xf32, #tpu.memory_space<vmem>>, vector<18x1x4xf32>
    tpu.vector_store %arg7[%c0_6, %c0_7, %c0_8], %4 {strides = array<i32>} : memref<18x18x4xf32, #tpu.memory_space<vmem>>, vector<18x1x4xf32>,
    %cst_9 = arith.constant 0.000000e+00 : f32
    %6 = vector.broadcast %cst_9 : f32 to vector<18x1x4xf32>
    %c0_10 = arith.constant 0 : index
    %c17_11 = arith.constant 17 : index
    %c0_12 = arith.constant 0 : index
    %7 = vector.load %arg7[%c0_10, %c17_11, %c0_12] : memref<18x18x4xf32, #tpu.memory_space<vmem>>, vector<18x1x4xf32>
    tpu.vector_store %arg7[%c0_10, %c17_11, %c0_12], %6 {strides = array<i32>} : memref<18x18x4xf32, #tpu.memory_space<vmem>>, vector<18x1x4xf32>,
    %c0_13 = arith.constant 0 : index
    %c0_14 = arith.constant 0 : index
    %c0_15 = arith.constant 0 : index
    %c0_16 = arith.constant 0 : index
    %8 = vector.load %arg1[%c0_13, %c0_14, %c0_15, %c0_16] : memref<1x16x16x4xf32, #tpu.memory_space<vmem>>, vector<1x16x16x4xf32>
    %9 = vector.shape_cast %8 : vector<1x16x16x4xf32> to vector<16x16x4xf32>
    %c1 = arith.constant 1 : index
    %c1_17 = arith.constant 1 : index
    %c0_18 = arith.constant 0 : index
    %10 = vector.load %arg7[%c1, %c1_17, %c0_18] : memref<18x18x4xf32, #tpu.memory_space<vmem>>, vector<16x16x4xf32>
    tpu.vector_store %arg7[%c1, %c1_17, %c0_18], %9 {strides = array<i32>} : memref<18x18x4xf32, #tpu.memory_space<vmem>>, vector<16x16x4xf32>,
    %c0_19 = arith.constant 0 : index
    %c0_20 = arith.constant 0 : index
    %c0_21 = arith.constant 0 : index
    %11 = vector.load %arg7[%c0_19, %c0_20, %c0_21] : memref<18x18x4xf32, #tpu.memory_space<vmem>>, vector<16x16x4xf32>
    %12 = vector.shape_cast %11 : vector<16x16x4xf32> to vector<256x4xf32>
    %c0_22 = arith.constant 0 : index
    %c1_23 = arith.constant 1 : index
    %c0_24 = arith.constant 0 : index
    %13 = vector.load %arg7[%c0_22, %c1_23, %c0_24] : memref<18x18x4xf32, #tpu.memory_space<vmem>>, vector<16x16x4xf32>
    %14 = vector.shape_cast %13 : vector<16x16x4xf32> to vector<256x4xf32>
    %c0_25 = arith.constant 0 : index
    %c2 = arith.constant 2 : index
    %c0_26 = arith.constant 0 : index
    %15 = vector.load %arg7[%c0_25, %c2, %c0_26] : memref<18x18x4xf32, #tpu.memory_space<vmem>>, vector<16x16x4xf32>
    %16 = vector.shape_cast %15 : vector<16x16x4xf32> to vector<256x4xf32>
    %c1_27 = arith.constant 1 : index
    %c0_28 = arith.constant 0 : index
    %c0_29 = arith.constant 0 : index
    %17 = vector.load %arg7[%c1_27, %c0_28, %c0_29] : memref<18x18x4xf32, #tpu.memory_space<vmem>>, vector<16x16x4xf32>
    %18 = vector.shape_cast %17 : vector<16x16x4xf32> to vector<256x4xf32>
    %c1_30 = arith.constant 1 : index
    %c1_31 = arith.constant 1 : index
    %c0_32 = arith.constant 0 : index
    %19 = vector.load %arg7[%c1_30, %c1_31, %c0_32] : memref<18x18x4xf32, #tpu.memory_space<vmem>>, vector<16x16x4xf32>
    %20 = vector.shape_cast %19 : vector<16x16x4xf32> to vector<256x4xf32>
    %c1_33 = arith.constant 1 : index
    %c2_34 = arith.constant 2 : index
    %c0_35 = arith.constant 0 : index
    %21 = vector.load %arg7[%c1_33, %c2_34, %c0_35] : memref<18x18x4xf32, #tpu.memory_space<vmem>>, vector<16x16x4xf32>
    %22 = vector.shape_cast %21 : vector<16x16x4xf32> to vector<256x4xf32>
    %c2_36 = arith.constant 2 : index
    %c0_37 = arith.constant 0 : index
    %c0_38 = arith.constant 0 : index
    %23 = vector.load %arg7[%c2_36, %c0_37, %c0_38] : memref<18x18x4xf32, #tpu.memory_space<vmem>>, vector<16x16x4xf32>
    %24 = vector.shape_cast %23 : vector<16x16x4xf32> to vector<256x4xf32>
    %c2_39 = arith.constant 2 : index
    %c1_40 = arith.constant 1 : index
    %c0_41 = arith.constant 0 : index
    %25 = vector.load %arg7[%c2_39, %c1_40, %c0_41] : memref<18x18x4xf32, #tpu.memory_space<vmem>>, vector<16x16x4xf32>
    %26 = vector.shape_cast %25 : vector<16x16x4xf32> to vector<256x4xf32>
    %c2_42 = arith.constant 2 : index
    %c2_43 = arith.constant 2 : index
    %c0_44 = arith.constant 0 : index
    %27 = vector.load %arg7[%c2_42, %c2_43, %c0_44] : memref<18x18x4xf32, #tpu.memory_space<vmem>>, vector<16x16x4xf32>
    %28 = vector.shape_cast %27 : vector<16x16x4xf32> to vector<256x4xf32>
    %29 = tpu.concatenate %12, %14, %16, %18, %20, %22, %24, %26, %28 in 1 : vector<256x4xf32>, vector<256x4xf32>, vector<256x4xf32>, vector<256x4xf32>, vector<256x4xf32>, vector<256x4xf32>, vector<256x4xf32>, vector<256x4xf32>, vector<256x4xf32> -> vector<256x36xf32>
    %30 = arith.truncf %29 : vector<256x36xf32> to vector<256x36xbf16>
    %c0_45 = arith.constant 0 : index
    %c0_46 = arith.constant 0 : index
    %31 = vector.load %arg2[%c0_45, %c0_46] : memref<36x4xbf16, #tpu.memory_space<vmem>>, vector<36x4xbf16>
    %cst_47 = arith.constant dense<0.000000e+00> : vector<256x4xf32>
    %32 = tpu.matmul %30, %31, %cst_47 {dimension_numbers = #tpu.dot_dimension_numbers<[1], [0], [0], [1], [0, 0, 1, 1], [], []>} : vector<256x36xbf16>, vector<36x4xbf16>, vector<256x4xf32> -> vector<256x4xf32>
    %c0_48 = arith.constant 0 : index
    %c0_49 = arith.constant 0 : index
    %33 = vector.load %arg3[%c0_48, %c0_49] : memref<1x4xf32, #tpu.memory_space<vmem>>, vector<1x4xf32>
    %34 = vector.broadcast %33 : vector<1x4xf32> to vector<256x4xf32>
    %35 = arith.addf %32, %34 : vector<256x4xf32>
    %cst_50 = arith.constant 0.000000e+00 : f32
    %36 = vector.broadcast %cst_50 : f32 to vector<256x4xf32>
    %37 = arith.cmpf oge, %35, %36 : vector<256x4xf32>
    %cst_51 = arith.constant 0.00999999977 : f32
    %38 = vector.broadcast %cst_51 : f32 to vector<256x4xf32>
    %39 = arith.mulf %38, %35 : vector<256x4xf32>
    %40 = arith.select %37, %35, %39 : vector<256x4xi1>, vector<256x4xf32>
    %41 = vector.shape_cast %40 : vector<256x4xf32> to vector<16x16x4xf32>
    %c1_52 = arith.constant 1 : index
    %c1_53 = arith.constant 1 : index
    %c0_54 = arith.constant 0 : index
    %42 = vector.load %arg7[%c1_52, %c1_53, %c0_54] : memref<18x18x4xf32, #tpu.memory_space<vmem>>, vector<16x16x4xf32>
    tpu.vector_store %arg7[%c1_52, %c1_53, %c0_54], %41 {strides = array<i32>} : memref<18x18x4xf32, #tpu.memory_space<vmem>>, vector<16x16x4xf32>,
    %c0_55 = arith.constant 0 : index
    %c0_56 = arith.constant 0 : index
    %c0_57 = arith.constant 0 : index
    %43 = vector.load %arg7[%c0_55, %c0_56, %c0_57] : memref<18x18x4xf32, #tpu.memory_space<vmem>>, vector<16x16x4xf32>
    %44 = vector.shape_cast %43 : vector<16x16x4xf32> to vector<256x4xf32>
    %c0_58 = arith.constant 0 : index
    %c1_59 = arith.constant 1 : index
    %c0_60 = arith.constant 0 : index
    %45 = vector.load %arg7[%c0_58, %c1_59, %c0_60] : memref<18x18x4xf32, #tpu.memory_space<vmem>>, vector<16x16x4xf32>
    %46 = vector.shape_cast %45 : vector<16x16x4xf32> to vector<256x4xf32>
    %c0_61 = arith.constant 0 : index
    %c2_62 = arith.constant 2 : index
    %c0_63 = arith.constant 0 : index
    %47 = vector.load %arg7[%c0_61, %c2_62, %c0_63] : memref<18x18x4xf32, #tpu.memory_space<vmem>>, vector<16x16x4xf32>
    %48 = vector.shape_cast %47 : vector<16x16x4xf32> to vector<256x4xf32>
    %c1_64 = arith.constant 1 : index
    %c0_65 = arith.constant 0 : index
    %c0_66 = arith.constant 0 : index
    %49 = vector.load %arg7[%c1_64, %c0_65, %c0_66] : memref<18x18x4xf32, #tpu.memory_space<vmem>>, vector<16x16x4xf32>
    %50 = vector.shape_cast %49 : vector<16x16x4xf32> to vector<256x4xf32>
    %c1_67 = arith.constant 1 : index
    %c1_68 = arith.constant 1 : index
    %c0_69 = arith.constant 0 : index
    %51 = vector.load %arg7[%c1_67, %c1_68, %c0_69] : memref<18x18x4xf32, #tpu.memory_space<vmem>>, vector<16x16x4xf32>
    %52 = vector.shape_cast %51 : vector<16x16x4xf32> to vector<256x4xf32>
    %c1_70 = arith.constant 1 : index
    %c2_71 = arith.constant 2 : index
    %c0_72 = arith.constant 0 : index
    %53 = vector.load %arg7[%c1_70, %c2_71, %c0_72] : memref<18x18x4xf32, #tpu.memory_space<vmem>>, vector<16x16x4xf32>
    %54 = vector.shape_cast %53 : vector<16x16x4xf32> to vector<256x4xf32>
    %c2_73 = arith.constant 2 : index
    %c0_74 = arith.constant 0 : index
    %c0_75 = arith.constant 0 : index
    %55 = vector.load %arg7[%c2_73, %c0_74, %c0_75] : memref<18x18x4xf32, #tpu.memory_space<vmem>>, vector<16x16x4xf32>
    %56 = vector.shape_cast %55 : vector<16x16x4xf32> to vector<256x4xf32>
    %c2_76 = arith.constant 2 : index
    %c1_77 = arith.constant 1 : index
    %c0_78 = arith.constant 0 : index
    %57 = vector.load %arg7[%c2_76, %c1_77, %c0_78] : memref<18x18x4xf32, #tpu.memory_space<vmem>>, vector<16x16x4xf32>
    %58 = vector.shape_cast %57 : vector<16x16x4xf32> to vector<256x4xf32>
    %c2_79 = arith.constant 2 : index
    %c2_80 = arith.constant 2 : index
    %c0_81 = arith.constant 0 : index
    %59 = vector.load %arg7[%c2_79, %c2_80, %c0_81] : memref<18x18x4xf32, #tpu.memory_space<vmem>>, vector<16x16x4xf32>
    %60 = vector.shape_cast %59 : vector<16x16x4xf32> to vector<256x4xf32>
    %61 = tpu.concatenate %44, %46, %48, %50, %52, %54, %56, %58, %60 in 1 : vector<256x4xf32>, vector<256x4xf32>, vector<256x4xf32>, vector<256x4xf32>, vector<256x4xf32>, vector<256x4xf32>, vector<256x4xf32>, vector<256x4xf32>, vector<256x4xf32> -> vector<256x36xf32>
    %62 = arith.truncf %61 : vector<256x36xf32> to vector<256x36xbf16>
    %c0_82 = arith.constant 0 : index
    %c0_83 = arith.constant 0 : index
    %63 = vector.load %arg4[%c0_82, %c0_83] : memref<36x4xbf16, #tpu.memory_space<vmem>>, vector<36x4xbf16>
    %cst_84 = arith.constant dense<0.000000e+00> : vector<256x4xf32>
    %64 = tpu.matmul %62, %63, %cst_84 {dimension_numbers = #tpu.dot_dimension_numbers<[1], [0], [0], [1], [0, 0, 1, 1], [], []>} : vector<256x36xbf16>, vector<36x4xbf16>, vector<256x4xf32> -> vector<256x4xf32>
    %c0_85 = arith.constant 0 : index
    %c0_86 = arith.constant 0 : index
    %65 = vector.load %arg5[%c0_85, %c0_86] : memref<1x4xf32, #tpu.memory_space<vmem>>, vector<1x4xf32>
    %66 = vector.broadcast %65 : vector<1x4xf32> to vector<256x4xf32>
    %67 = arith.addf %64, %66 : vector<256x4xf32>
    %68 = vector.shape_cast %9 : vector<16x16x4xf32> to vector<256x4xf32>
    %69 = arith.addf %67, %68 : vector<256x4xf32>
    %cst_87 = arith.constant 0.000000e+00 : f32
    %70 = vector.broadcast %cst_87 : f32 to vector<256x4xf32>
    %71 = arith.cmpf oge, %69, %70 : vector<256x4xf32>
    %cst_88 = arith.constant 0.00999999977 : f32
    %72 = vector.broadcast %cst_88 : f32 to vector<256x4xf32>
    %73 = arith.mulf %72, %69 : vector<256x4xf32>
    %74 = arith.select %71, %69, %73 : vector<256x4xi1>, vector<256x4xf32>
    %75 = vector.shape_cast %74 : vector<256x4xf32> to vector<16x16x4xf32>
    %c0_89 = arith.constant 0 : index
    %c0_90 = arith.constant 0 : index
    %c0_91 = arith.constant 0 : index
    %c0_92 = arith.constant 0 : index
    %76 = vector.load %arg6[%c0_89, %c0_90, %c0_91, %c0_92] : memref<1x16x16x4xf32, #tpu.memory_space<vmem>>, vector<1x16x16x4xf32>
    %77 = vector.shape_cast %76 : vector<1x16x16x4xf32> to vector<16x16x4xf32>
    %78 = vector.shape_cast %75 : vector<16x16x4xf32> to vector<1x16x16x4xf32>
    tpu.vector_store %arg6[%c0_89, %c0_90, %c0_91, %c0_92], %78 {strides = array<i32>} : memref<1x16x16x4xf32, #tpu.memory_space<vmem>>, vector<1x16x16x4xf32>,
    return
  }
  func.func @transform_0(%arg0: i32) -> (i32, i32, i32, i32) {
    %c0_i32 = arith.constant 0 : i32
    %c0_i32_0 = arith.constant 0 : i32
    %c0_i32_1 = arith.constant 0 : i32
    %c0_i32_2 = arith.constant 0 : i32
    return %arg0, %c0_i32, %c0_i32_0, %c0_i32_1 : i32, i32, i32, i32
  }
  func.func @transform_1(%arg0: i32) -> (i32, i32) {
    %c0_i32 = arith.constant 0 : i32
    %c0_i32_0 = arith.constant 0 : i32
    %c0_i32_1 = arith.constant 0 : i32
    return %c0_i32, %c0_i32_0 : i32, i32
  }
  func.func @transform_2(%arg0: i32) -> (i32, i32) {
    %c0_i32 = arith.constant 0 : i32
    %c0_i32_0 = arith.constant 0 : i32
    %c0_i32_1 = arith.constant 0 : i32
    return %c0_i32, %c0_i32_0 : i32, i32
  }
  func.func @transform_3(%arg0: i32) -> (i32, i32) {
    %c0_i32 = arith.constant 0 : i32
    %c0_i32_0 = arith.constant 0 : i32
    %c0_i32_1 = arith.constant 0 : i32
    return %c0_i32, %c0_i32_0 : i32, i32
  }
  func.func @transform_4(%arg0: i32) -> (i32, i32) {
    %c0_i32 = arith.constant 0 : i32
    %c0_i32_0 = arith.constant 0 : i32
    %c0_i32_1 = arith.constant 0 : i32
    return %c0_i32, %c0_i32_0 : i32, i32
  }
  func.func @transform_5(%arg0: i32) -> (i32, i32, i32, i32) {
    %c0_i32 = arith.constant 0 : i32
    %c0_i32_0 = arith.constant 0 : i32
    %c0_i32_1 = arith.constant 0 : i32
    %c0_i32_2 = arith.constant 0 : i32
    return %arg0, %c0_i32, %c0_i32_0, %c0_i32_1 : i32, i32, i32, i32
  }
}

</mosaic_0001>

<llo_original>
// kernel: tpu_custom_call.1
$region0: #{tpu_custom_call.1}
  #allocation0 [shape = 'u32[]', space=smem, size = 0x4, offset = 0x4, fixed_abs, tag = 'smem constant byte address 0x4 - core index']
  #allocation1 [shape = 'u32[144,128]{1,0:T(1,128)}', space=vmem, size = 0x12000, scoped, tag = 'internal scratch']
  #allocation2 [shape = 'f32[18,18,4]{2,1,0:T(8,128)}', space=vmem, size = 0x36000, scoped, tag = 'scratch operand']
  %s0 = inlined_call_operand.vmem [shape: f32[2,16,16,4], index: 0, kind: input, shape index: {}]
  %s1 = inlined_call_operand.vmem [shape: bf16[36,4], index: 1, kind: input, shape index: {}]
  %s2 = inlined_call_operand.vmem [shape: f32[1,4], index: 2, kind: input, shape index: {}]
  %s3 = inlined_call_operand.vmem [shape: bf16[36,4], index: 3, kind: input, shape index: {}]
  %s4 = inlined_call_operand.vmem [shape: f32[1,4], index: 4, kind: input, shape index: {}]
  %s5 = inlined_call_operand.vmem [shape: f32[2,16,16,4], index: 5, kind: output, shape index: {}]
  %s6 = sld [smem:[#allocation0]]
  $region53: #{tpu_custom_call.1} parent=0
    _
  %s8 = ssub.s32 1, %s6
  %s9 = scalar_select 0, %s8, %s6
  loop: start=0, step=1, limit=4
  $region2: #{tpu_custom_call.1} parent=0 // loop_pre_header
    _
  $region3: #{tpu_custom_call.1} parent=0 // loop_header
    %s11 = sphi 0, %s15
    %p12 = scmp.ge.s32.totalorder %s11, 4
    %s21 = sphi 0, %s23
    %s24 = sphi 0, %s21
    %s25 = sphi 0, %s24
    %s41 = sphi 0, %s25
    %s45 = sphi 0, %s45
    %s47 = sphi 0, %s45
    %s48 = sphi 0, %s47
    %s62 = sphi 0, %s48
    %s66 = sphi 0, %s66
    %s68 = sphi 0, %s66
    %s69 = sphi 0, %s68
    %s83 = sphi 0, %s69
    %s87 = sphi 0, %s87
    %s89 = sphi 0, %s87
    %s90 = sphi 0, %s89
    %s104 = sphi 0, %s90
    %s108 = sphi 0, %s108
    %s110 = sphi 0, %s108
    %s111 = sphi 0, %s110
    %s125 = sphi 0, %s111
    %s131 = sphi 0, %s133
    %s134 = sphi 0, %s131
    %s135 = sphi 0, %s134
    %s151 = sphi 0, %s135
  $region4: #{tpu_custom_call.1} parent=0 // loop_header_branch
    %14 = sbr.rel (%p12) target = $region8
  $region5: #{tpu_custom_call.1} parent=0 // loop_body
    %s16 = ssub.s32 %s11, 1
    %s17 = ssub.s32 %s11, 2
    %s18 = sadd.s32 %s11, 1
    %s19 = ssub.s32 %s11, %s18
    %p20 = scmp.eq.s32.totalorder %s19, 0
    %s22 = sadd.s32 %s21, 1
    %s23 = scalar_select %p20, %s21, %s22
    %p26 = pneg %p20
    %p27 = scmp.eq.s32.totalorder %s11, 1
    %p28 = por %p26, %p27
    %p29 = scmp.ne.s32.totalorder %s21, %s24
    %p30 = scmp.eq.s32.totalorder %s11, 0
    %p31 = por %p29, %p30
    %p32 = scmp.ne.s32.totalorder %s21, %s24
    %p33 = scmp.eq.s32.totalorder %s16, 1
    %p34 = por %p32, %p33
    %p35 = scmp.ne.s32.totalorder %s24, %s25
    %p36 = scmp.eq.s32.totalorder %s16, 0
    %p37 = por %p35, %p36
    %p38 = scmp.ne.s32.totalorder %s24, %s25
    %p39 = scmp.eq.s32.totalorder %s17, 1
    %p40 = por %p38, %p39
    %p42 = scmp.ne.s32.totalorder %s25, %s41
    %p43 = scmp.eq.s32.totalorder %s17, 0
    %p44 = por %p42, %p43
    %s46 = sadd.s32 %s45, 1
    %p49 = scmp.eq.s32.totalorder %s11, 1
    %p50 = scmp.ne.s32.totalorder %s45, %s47
    %p51 = scmp.eq.s32.totalorder %s11, 0
    %p52 = por %p50, %p51
    %p53 = scmp.ne.s32.totalorder %s45, %s47
    %p54 = scmp.eq.s32.totalorder %s16, 1
    %p55 = por %p53, %p54
    %p56 = scmp.ne.s32.totalorder %s47, %s48
    %p57 = scmp.eq.s32.totalorder %s16, 0
    %p58 = por %p56, %p57
    %p59 = scmp.ne.s32.totalorder %s47, %s48
    %p60 = scmp.eq.s32.totalorder %s17, 1
    %p61 = por %p59, %p60
    %p63 = scmp.ne.s32.totalorder %s48, %s62
    %p64 = scmp.eq.s32.totalorder %s17, 0
    %p65 = por %p63, %p64
    %s67 = sadd.s32 %s66, 1
    %p70 = scmp.eq.s32.totalorder %s11, 1
    %p71 = scmp.ne.s32.totalorder %s66, %s68
    %p72 = scmp.eq.s32.totalorder %s11, 0
    %p73 = por %p71, %p72
    %p74 = scmp.ne.s32.totalorder %s66, %s68
    %p75 = scmp.eq.s32.totalorder %s16, 1
    %p76 = por %p74, %p75
    %p77 = scmp.ne.s32.totalorder %s68, %s69
    %p78 = scmp.eq.s32.totalorder %s16, 0
    %p79 = por %p77, %p78
    %p80 = scmp.ne.s32.totalorder %s68, %s69
    %p81 = scmp.eq.s32.totalorder %s17, 1
    %p82 = por %p80, %p81
    %p84 = scmp.ne.s32.totalorder %s69, %s83
    %p85 = scmp.eq.s32.totalorder %s17, 0
    %p86 = por %p84, %p85
    %s88 = sadd.s32 %s87, 1
    %p91 = scmp.eq.s32.totalorder %s11, 1
    %p92 = scmp.ne.s32.totalorder %s87, %s89
    %p93 = scmp.eq.s32.totalorder %s11, 0
    %p94 = por %p92, %p93
    %p95 = scmp.ne.s32.totalorder %s87, %s89
    %p96 = scmp.eq.s32.totalorder %s16, 1
    %p97 = por %p95, %p96
    %p98 = scmp.ne.s32.totalorder %s89, %s90
    %p99 = scmp.eq.s32.totalorder %s16, 0
    %p100 = por %p98, %p99
    %p101 = scmp.ne.s32.totalorder %s89, %s90
    %p102 = scmp.eq.s32.totalorder %s17, 1
    %p103 = por %p101, %p102
    %p105 = scmp.ne.s32.totalorder %s90, %s104
    %p106 = scmp.eq.s32.totalorder %s17, 0
    %p107 = por %p105, %p106
    %s109 = sadd.s32 %s108, 1
    %p112 = scmp.eq.s32.totalorder %s11, 1
    %p113 = scmp.ne.s32.totalorder %s108, %s110
    %p114 = scmp.eq.s32.totalorder %s11, 0
    %p115 = por %p113, %p114
    %p116 = scmp.ne.s32.totalorder %s108, %s110
    %p117 = scmp.eq.s32.totalorder %s16, 1
    %p118 = por %p116, %p117
    %p119 = scmp.ne.s32.totalorder %s110, %s111
    %p120 = scmp.eq.s32.totalorder %s16, 0
    %p121 = por %p119, %p120
    %p122 = scmp.ne.s32.totalorder %s110, %s111
    %p123 = scmp.eq.s32.totalorder %s17, 1
    %p124 = por %p122, %p123
    %p126 = scmp.ne.s32.totalorder %s111, %s125
    %p127 = scmp.eq.s32.totalorder %s17, 0
    %p128 = por %p126, %p127
    %s129 = ssub.s32 %s11, %s18
    %p130 = scmp.eq.s32.totalorder %s129, 0
    %s132 = sadd.s32 %s131, 1
    %s133 = scalar_select %p130, %s131, %s132
    %p136 = pneg %p130
    %p137 = scmp.eq.s32.totalorder %s11, 1
    %p138 = por %p136, %p137
    %p139 = scmp.ne.s32.totalorder %s131, %s134
    %p140 = scmp.eq.s32.totalorder %s11, 0
    %p141 = por %p139, %p140
    %p142 = scmp.ne.s32.totalorder %s131, %s134
    %p143 = scmp.eq.s32.totalorder %s16, 1
    %p144 = por %p142, %p143
    %p145 = scmp.ne.s32.totalorder %s134, %s135
    %p146 = scmp.eq.s32.totalorder %s16, 0
    %p147 = por %p145, %p146
    %p148 = scmp.ne.s32.totalorder %s134, %s135
    %p149 = scmp.eq.s32.totalorder %s17, 1
    %p150 = por %p148, %p149
    %p152 = scmp.ne.s32.totalorder %s135, %s151
    %p153 = scmp.eq.s32.totalorder %s17, 0
    %p154 = por %p152, %p153
    %p155 = scmp.le.s32.totalorder 1, %s11
    %p156 = scmp.lt.s32.totalorder %s11, 3
    %p157 = pnand %p155, %p156
    %p158 = pneg %p157
    // Predicated region
    $region9: #{tpu_custom_call.1} parent=5 // pred_check
      _
    $region10: #{tpu_custom_call.1} parent=5 // pred_check_branch
      %160 = sbr.rel (%p157) target = $region12
    $region11: #{tpu_custom_call.1} parent=5 // pred_region
      %s161 = ssub.s32 %s11, 1
      // Predicated region
      $region13: #{tpu_custom_call.1} parent=11 // pred_check
        %p162 = pneg %p58
      $region14: #{tpu_custom_call.1} parent=11 // pred_check_branch
        %164 = sbr.rel (%p162) target = $region16
      $region15: #{tpu_custom_call.1} parent=11 // pred_region
        _
      $region16: #{tpu_custom_call.1} parent=11 // pred_fallthru
        _
      // Predicated region
      $region17: #{tpu_custom_call.1} parent=11 // pred_check
        %p165 = pneg %p79
      $region18: #{tpu_custom_call.1} parent=11 // pred_check_branch
        %167 = sbr.rel (%p165) target = $region20
      $region19: #{tpu_custom_call.1} parent=11 // pred_region
        _
      $region20: #{tpu_custom_call.1} parent=11 // pred_fallthru
        _
      // Predicated region
      $region21: #{tpu_custom_call.1} parent=11 // pred_check
        %p168 = pneg %p100
      $region22: #{tpu_custom_call.1} parent=11 // pred_check_branch
        %170 = sbr.rel (%p168) target = $region24
      $region23: #{tpu_custom_call.1} parent=11 // pred_region
        _
      $region24: #{tpu_custom_call.1} parent=11 // pred_fallthru
        _
      // Predicated region
      $region25: #{tpu_custom_call.1} parent=11 // pred_check
        %p171 = pneg %p121
      $region26: #{tpu_custom_call.1} parent=11 // pred_check_branch
        %173 = sbr.rel (%p171) target = $region28
      $region27: #{tpu_custom_call.1} parent=11 // pred_region
        _
      $region28: #{tpu_custom_call.1} parent=11 // pred_fallthru
        _
    $region12: #{tpu_custom_call.1} parent=5 // pred_fallthru
      _
    %p174 = scmp.lt.s32.totalorder %s11, 2
    // Predicated region
    $region29: #{tpu_custom_call.1} parent=5 // pred_check
      %p175 = pneg %p174
    $region30: #{tpu_custom_call.1} parent=5 // pred_check_branch
      %177 = sbr.rel (%p175) target = $region32
    $region31: #{tpu_custom_call.1} parent=5 // pred_region
      // Predicated region
      $region33: #{tpu_custom_call.1} parent=31 // pred_check
        %p178 = pneg %p31
      $region34: #{tpu_custom_call.1} parent=31 // pred_check_branch
        %180 = sbr.rel (%p178) target = $region36
      $region35: #{tpu_custom_call.1} parent=31 // pred_region
        %p181 = scmp.lt.s32.totalorder %s11, 1
        %s182 = scalar_select %p181, %s11, 1
        %s183 = smul.addr %s182, 32
        %s184 = smul.addr %s183, 8
        %s185 = scalar_lea.vmem %s0, %s184
      $region36: #{tpu_custom_call.1} parent=31 // pred_fallthru
        _
    $region32: #{tpu_custom_call.1} parent=5 // pred_fallthru
      _
    %p186 = scmp.le.s32.totalorder 1, %s11
    %p187 = scmp.lt.s32.totalorder %s11, 3
    %p188 = pnand %p186, %p187
    %p189 = pneg %p188
    // Predicated region
    $region37: #{tpu_custom_call.1} parent=5 // pred_check
      _
    $region38: #{tpu_custom_call.1} parent=5 // pred_check_branch
      %191 = sbr.rel (%p188) target = $region40
    $region39: #{tpu_custom_call.1} parent=5 // pred_region
      %s192 = ssub.s32 %s11, 1
      %p193 = scmp.lt.s32.totalorder %s16, 1
      %s194 = scalar_select %p193, %s16, 1
      %s195 = smul.addr %s194, 32
      %s196 = smul.addr %s195, 8
      %s197 = scalar_lea.vmem %s0, %s196
      %p198 = pneg %p37
      %p199 = pneg %p34
      %p200 = pneg %p58
      %p201 = pneg %p55
      %p202 = pneg %p79
      %p203 = pneg %p76
      %p204 = pneg %p100
      %p205 = pneg %p97
      %p206 = pneg %p121
      %p207 = pneg %p118
      %p208 = pneg %p147
      %p209 = pneg %p144
      %p210 = scmp.lt.s32.totalorder %s16, 1
      %s211 = scalar_select %p210, %s16, 1
      %s212 = smul.addr %s211, 32
      %s213 = smul.addr %s212, 8
      %s214 = scalar_lea.vmem %s5, %s213
      %p215 = scmp.lt.s32.totalorder %s16, 1
      %s216 = scalar_select %p215, %s16, 1
      %s217 = smul.addr %s216, 32
      %s218 = smul.addr %s217, 8
      %s219 = scalar_lea.vmem %s0, %s218
      %p220 = scmp.lt.s32.totalorder %s16, 1
      %s221 = scalar_select %p220, %s16, 1
      %s222 = smul.addr %s221, 32
      %s223 = smul.addr %s222, 8
      %s224 = scalar_lea.vmem %s5, %s223
      %vm226 = vcmask 31744
      %227 = vst.msk [vmem:[#allocation2] sm:$0xff] %vm226, 0.0
      %228 = vst.msk [vmem:[#allocation2 + $0x8] sm:$0xff] %vm226, 0.0
      %vm229 = vcmask 25600
      %230 = vst.msk [vmem:[#allocation2 + $0x10] sm:$0x3] %vm229, 0.0
      %s231 = scalar_lea.vmem [#allocation2], 408
      %232 = vst.msk [vmem:[%s231] sm:$0xff] %vm226, 0.0
      %233 = vst.msk [vmem:[%s231 + $0x8] sm:$0xff] %vm226, 0.0
      %234 = vst.msk [vmem:[%s231 + $0x10] sm:$0x3] %vm229, 0.0
      %vm235 = vcmask 24576
      %236 = vst.msk [vmem:[#allocation2] sm:$0x1] %vm235, 0.0
      %237 = vst.msk [vmem:[#allocation2 + $0x18] sm:$0x1] %vm235, 0.0
      %238 = vst.msk [vmem:[#allocation2 + $0x30] sm:$0x1] %vm235, 0.0
      %239 = vst.msk [vmem:[#allocation2 + $0x48] sm:$0x1] %vm235, 0.0
      %240 = vst.msk [vmem:[#allocation2 + $0x60] sm:$0x1] %vm235, 0.0
      %241 = vst.msk [vmem:[#allocation2 + $0x78] sm:$0x1] %vm235, 0.0
      %242 = vst.msk [vmem:[#allocation2 + $0x90] sm:$0x1] %vm235, 0.0
      %243 = vst.msk [vmem:[#allocation2 + $0xa8] sm:$0x1] %vm235, 0.0
      %244 = vst.msk [vmem:[#allocation2 + $0xc0] sm:$0x1] %vm235, 0.0
      %245 = vst.msk [vmem:[#allocation2 + $0xd8] sm:$0x1] %vm235, 0.0
      %246 = vst.msk [vmem:[#allocation2 + $0xf0] sm:$0x1] %vm235, 0.0
      %247 = vst.msk [vmem:[#allocation2 + $0x108] sm:$0x1] %vm235, 0.0
      %248 = vst.msk [vmem:[#allocation2 + $0x120] sm:$0x1] %vm235, 0.0
      %249 = vst.msk [vmem:[#allocation2 + $0x138] sm:$0x1] %vm235, 0.0
      %250 = vst.msk [vmem:[#allocation2 + $0x150] sm:$0x1] %vm235, 0.0
      %251 = vst.msk [vmem:[#allocation2 + $0x168] sm:$0x1] %vm235, 0.0
      %252 = vst.msk [vmem:[#allocation2 + $0x180] sm:$0x1] %vm235, 0.0
      %253 = vst.msk [vmem:[#allocation2 + $0x198] sm:$0x1] %vm235, 0.0
      %254 = vst.msk [vmem:[#allocation2 + $0x11] sm:$0x1] %vm235, 0.0
      %255 = vst.msk [vmem:[#allocation2 + $0x29] sm:$0x1] %vm235, 0.0
      %256 = vst.msk [vmem:[#allocation2 + $0x41] sm:$0x1] %vm235, 0.0
      %257 = vst.msk [vmem:[#allocation2 + $0x59] sm:$0x1] %vm235, 0.0
      %258 = vst.msk [vmem:[#allocation2 + $0x71] sm:$0x1] %vm235, 0.0
      %259 = vst.msk [vmem:[#allocation2 + $0x89] sm:$0x1] %vm235, 0.0
      %260 = vst.msk [vmem:[#allocation2 + $0xa1] sm:$0x1] %vm235, 0.0
      %261 = vst.msk [vmem:[#allocation2 + $0xb9] sm:$0x1] %vm235, 0.0
      %262 = vst.msk [vmem:[#allocation2 + $0xd1] sm:$0x1] %vm235, 0.0
      %263 = vst.msk [vmem:[#allocation2 + $0xe9] sm:$0x1] %vm235, 0.0
      %264 = vst.msk [vmem:[#allocation2 + $0x101] sm:$0x1] %vm235, 0.0
      %265 = vst.msk [vmem:[#allocation2 + $0x119] sm:$0x1] %vm235, 0.0
      %266 = vst.msk [vmem:[#allocation2 + $0x131] sm:$0x1] %vm235, 0.0
      %267 = vst.msk [vmem:[#allocation2 + $0x149] sm:$0x1] %vm235, 0.0
      %268 = vst.msk [vmem:[#allocation2 + $0x161] sm:$0x1] %vm235, 0.0
      %269 = vst.msk [vmem:[#allocation2 + $0x179] sm:$0x1] %vm235, 0.0
      %270 = vst.msk [vmem:[#allocation2 + $0x191] sm:$0x1] %vm235, 0.0
      %271 = vst.msk [vmem:[#allocation2 + $0x1a9] sm:$0x1] %vm235, 0.0
      %v272 = vld [vmem:[%s219] sm:$0xff]
      %v273 = vld [vmem:[%s219 + $0x8] sm:$0xff]
      %v274 = vld [vmem:[%s219 + $0x10] sm:$0xff]
      %v275 = vld [vmem:[%s219 + $0x18] sm:$0xff]
      %v276 = vld [vmem:[%s219 + $0x20] sm:$0xff]
      %v277 = vld [vmem:[%s219 + $0x28] sm:$0xff]
      %v278 = vld [vmem:[%s219 + $0x30] sm:$0xff]
      %v279 = vld [vmem:[%s219 + $0x38] sm:$0xff]
      %v280 = vld [vmem:[%s219 + $0x40] sm:$0xff]
      %v281 = vld [vmem:[%s219 + $0x48] sm:$0xff]
      %v282 = vld [vmem:[%s219 + $0x50] sm:$0xff]
      %v283 = vld [vmem:[%s219 + $0x58] sm:$0xff]
      %v284 = vld [vmem:[%s219 + $0x60] sm:$0xff]
      %v285 = vld [vmem:[%s219 + $0x68] sm:$0xff]
      %v286 = vld [vmem:[%s219 + $0x70] sm:$0xff]
      %v287 = vld [vmem:[%s219 + $0x78] sm:$0xff]
      %v288 = vld [vmem:[%s219 + $0x80] sm:$0xff]
      %v289 = vld [vmem:[%s219 + $0x88] sm:$0xff]
      %v290 = vld [vmem:[%s219 + $0x90] sm:$0xff]
      %v291 = vld [vmem:[%s219 + $0x98] sm:$0xff]
      %v292 = vld [vmem:[%s219 + $0xa0] sm:$0xff]
      %v293 = vld [vmem:[%s219 + $0xa8] sm:$0xff]
      %v294 = vld [vmem:[%s219 + $0xb0] sm:$0xff]
      %v295 = vld [vmem:[%s219 + $0xb8] sm:$0xff]
      %v296 = vld [vmem:[%s219 + $0xc0] sm:$0xff]
      %v297 = vld [vmem:[%s219 + $0xc8] sm:$0xff]
      %v298 = vld [vmem:[%s219 + $0xd0] sm:$0xff]
      %v299 = vld [vmem:[%s219 + $0xd8] sm:$0xff]
      %v300 = vld [vmem:[%s219 + $0xe0] sm:$0xff]
      %v301 = vld [vmem:[%s219 + $0xe8] sm:$0xff]
      %v302 = vld [vmem:[%s219 + $0xf0] sm:$0xff]
      %v303 = vld [vmem:[%s219 + $0xf8] sm:$0xff]
      %s304 = scalar_lea.vmem [#allocation2], 24
      %305 = vst.msk [vmem:[%s304 + $0x1] sm:$0xff] %vm226, %v272
      %306 = vst.msk [vmem:[%s304 + $0x9] sm:$0xff] %vm226, %v273
      %307 = vst.msk [vmem:[%s304 + $0x19] sm:$0xff] %vm226, %v274
      %308 = vst.msk [vmem:[%s304 + $0x21] sm:$0xff] %vm226, %v275
      %309 = vst.msk [vmem:[%s304 + $0x31] sm:$0xff] %vm226, %v276
      %310 = vst.msk [vmem:[%s304 + $0x39] sm:$0xff] %vm226, %v277
      %311 = vst.msk [vmem:[%s304 + $0x49] sm:$0xff] %vm226, %v278
      %312 = vst.msk [vmem:[%s304 + $0x51] sm:$0xff] %vm226, %v279
      %313 = vst.msk [vmem:[%s304 + $0x61] sm:$0xff] %vm226, %v280
      %314 = vst.msk [vmem:[%s304 + $0x69] sm:$0xff] %vm226, %v281
      %315 = vst.msk [vmem:[%s304 + $0x79] sm:$0xff] %vm226, %v282
      %316 = vst.msk [vmem:[%s304 + $0x81] sm:$0xff] %vm226, %v283
      %317 = vst.msk [vmem:[%s304 + $0x91] sm:$0xff] %vm226, %v284
      %318 = vst.msk [vmem:[%s304 + $0x99] sm:$0xff] %vm226, %v285
      %319 = vst.msk [vmem:[%s304 + $0xa9] sm:$0xff] %vm226, %v286
      %320 = vst.msk [vmem:[%s304 + $0xb1] sm:$0xff] %vm226, %v287
      %321 = vst.msk [vmem:[%s304 + $0xc1] sm:$0xff] %vm226, %v288
      %322 = vst.msk [vmem:[%s304 + $0xc9] sm:$0xff] %vm226, %v289
      %323 = vst.msk [vmem:[%s304 + $0xd9] sm:$0xff] %vm226, %v290
      %324 = vst.msk [vmem:[%s304 + $0xe1] sm:$0xff] %vm226, %v291
      %325 = vst.msk [vmem:[%s304 + $0xf1] sm:$0xff] %vm226, %v292
      %326 = vst.msk [vmem:[%s304 + $0xf9] sm:$0xff] %vm226, %v293
      %327 = vst.msk [vmem:[%s304 + $0x109] sm:$0xff] %vm226, %v294
      %328 = vst.msk [vmem:[%s304 + $0x111] sm:$0xff] %vm226, %v295
      %329 = vst.msk [vmem:[%s304 + $0x121] sm:$0xff] %vm226, %v296
      %330 = vst.msk [vmem:[%s304 + $0x129] sm:$0xff] %vm226, %v297
      %331 = vst.msk [vmem:[%s304 + $0x139] sm:$0xff] %vm226, %v298
      %332 = vst.msk [vmem:[%s304 + $0x141] sm:$0xff] %vm226, %v299
      %333 = vst.msk [vmem:[%s304 + $0x151] sm:$0xff] %vm226, %v300
      %334 = vst.msk [vmem:[%s304 + $0x159] sm:$0xff] %vm226, %v301
      %335 = vst.msk [vmem:[%s304 + $0x169] sm:$0xff] %vm226, %v302
      %336 = vst.msk [vmem:[%s304 + $0x171] sm:$0xff] %vm226, %v303
      %v337 = vld [vmem:[#allocation2] sm:$0xff]
      %v338 = vld [vmem:[#allocation2 + $0x8] sm:$0xff]
      %v339 = vld [vmem:[#allocation2 + $0x18] sm:$0xff]
      %v340 = vld [vmem:[#allocation2 + $0x20] sm:$0xff]
      %v341 = vld [vmem:[#allocation2 + $0x30] sm:$0xff]
      %v342 = vld [vmem:[#allocation2 + $0x38] sm:$0xff]
      %v343 = vld [vmem:[#allocation2 + $0x48] sm:$0xff]
      %v344 = vld [vmem:[#allocation2 + $0x50] sm:$0xff]
      %v345 = vld [vmem:[#allocation2 + $0x60] sm:$0xff]
      %v346 = vld [vmem:[#allocation2 + $0x68] sm:$0xff]
      %v347 = vld [vmem:[#allocation2 + $0x78] sm:$0xff]
      %v348 = vld [vmem:[#allocation2 + $0x80] sm:$0xff]
      %v349 = vld [vmem:[#allocation2 + $0x90] sm:$0xff]
      %v350 = vld [vmem:[#allocation2 + $0x98] sm:$0xff]
      %v351 = vld [vmem:[#allocation2 + $0xa8] sm:$0xff]
      %v352 = vld [vmem:[#allocation2 + $0xb0] sm:$0xff]
      %v353 = vld [vmem:[#allocation2 + $0xc0] sm:$0xff]
      %v354 = vld [vmem:[#allocation2 + $0xc8] sm:$0xff]
      %v355 = vld [vmem:[#allocation2 + $0xd8] sm:$0xff]
      %v356 = vld [vmem:[#allocation2 + $0xe0] sm:$0xff]
      %v357 = vld [vmem:[#allocation2 + $0xf0] sm:$0xff]
      %v358 = vld [vmem:[#allocation2 + $0xf8] sm:$0xff]
      %v359 = vld [vmem:[#allocation2 + $0x108] sm:$0xff]
      %v360 = vld [vmem:[#allocation2 + $0x110] sm:$0xff]
      %v361 = vld [vmem:[#allocation2 + $0x120] sm:$0xff]
      %v362 = vld [vmem:[#allocation2 + $0x128] sm:$0xff]
      %v363 = vld [vmem:[#allocation2 + $0x138] sm:$0xff]
      %v364 = vld [vmem:[#allocation2 + $0x140] sm:$0xff]
      %v365 = vld [vmem:[#allocation2 + $0x150] sm:$0xff]
      %v366 = vld [vmem:[#allocation2 + $0x158] sm:$0xff]
      %v367 = vld [vmem:[#allocation2 + $0x168] sm:$0xff]
      %v368 = vld [vmem:[#allocation2 + $0x170] sm:$0xff]
      %v369 = vld [vmem:[#allocation2 + $0x1] sm:$0xff]
      %v370 = vld [vmem:[#allocation2 + $0x9] sm:$0xff]
      %v371 = vld [vmem:[#allocation2 + $0x19] sm:$0xff]
      %v372 = vld [vmem:[#allocation2 + $0x21] sm:$0xff]
      %v373 = vld [vmem:[#allocation2 + $0x31] sm:$0xff]
      %v374 = vld [vmem:[#allocation2 + $0x39] sm:$0xff]
      %v375 = vld [vmem:[#allocation2 + $0x49] sm:$0xff]
      %v376 = vld [vmem:[#allocation2 + $0x51] sm:$0xff]
      %v377 = vld [vmem:[#allocation2 + $0x61] sm:$0xff]
      %v378 = vld [vmem:[#allocation2 + $0x69] sm:$0xff]
      %v379 = vld [vmem:[#allocation2 + $0x79] sm:$0xff]
      %v380 = vld [vmem:[#allocation2 + $0x81] sm:$0xff]
      %v381 = vld [vmem:[#allocation2 + $0x91] sm:$0xff]
      %v382 = vld [vmem:[#allocation2 + $0x99] sm:$0xff]
      %v383 = vld [vmem:[#allocation2 + $0xa9] sm:$0xff]
      %v384 = vld [vmem:[#allocation2 + $0xb1] sm:$0xff]
      %v385 = vld [vmem:[#allocation2 + $0xc1] sm:$0xff]
      %v386 = vld [vmem:[#allocation2 + $0xc9] sm:$0xff]
      %v387 = vld [vmem:[#allocation2 + $0xd9] sm:$0xff]
      %v388 = vld [vmem:[#allocation2 + $0xe1] sm:$0xff]
      %v389 = vld [vmem:[#allocation2 + $0xf1] sm:$0xff]
      %v390 = vld [vmem:[#allocation2 + $0xf9] sm:$0xff]
      %v391 = vld [vmem:[#allocation2 + $0x109] sm:$0xff]
      %v392 = vld [vmem:[#allocation2 + $0x111] sm:$0xff]
      %v393 = vld [vmem:[#allocation2 + $0x121] sm:$0xff]
      %v394 = vld [vmem:[#allocation2 + $0x129] sm:$0xff]
      %v395 = vld [vmem:[#allocation2 + $0x139] sm:$0xff]
      %v396 = vld [vmem:[#allocation2 + $0x141] sm:$0xff]
      %v397 = vld [vmem:[#allocation2 + $0x151] sm:$0xff]
      %v398 = vld [vmem:[#allocation2 + $0x159] sm:$0xff]
      %v399 = vld [vmem:[#allocation2 + $0x169] sm:$0xff]
      %v400 = vld [vmem:[#allocation2 + $0x171] sm:$0xff]
      %v401 = vld [vmem:[#allocation2 + $0x2] sm:$0xff]
      %v402 = vld [vmem:[#allocation2 + $0xa] sm:$0xff]
      %v403 = vld [vmem:[#allocation2 + $0x1a] sm:$0xff]
      %v404 = vld [vmem:[#allocation2 + $0x22] sm:$0xff]
      %v405 = vld [vmem:[#allocation2 + $0x32] sm:$0xff]
      %v406 = vld [vmem:[#allocation2 + $0x3a] sm:$0xff]
      %v407 = vld [vmem:[#allocation2 + $0x4a] sm:$0xff]
      %v408 = vld [vmem:[#allocation2 + $0x52] sm:$0xff]
      %v409 = vld [vmem:[#allocation2 + $0x62] sm:$0xff]
      %v410 = vld [vmem:[#allocation2 + $0x6a] sm:$0xff]
      %v411 = vld [vmem:[#allocation2 + $0x7a] sm:$0xff]
      %v412 = vld [vmem:[#allocation2 + $0x82] sm:$0xff]
      %v413 = vld [vmem:[#allocation2 + $0x92] sm:$0xff]
      %v414 = vld [vmem:[#allocation2 + $0x9a] sm:$0xff]
      %v415 = vld [vmem:[#allocation2 + $0xaa] sm:$0xff]
      %v416 = vld [vmem:[#allocation2 + $0xb2] sm:$0xff]
      %v417 = vld [vmem:[#allocation2 + $0xc2] sm:$0xff]
      %v418 = vld [vmem:[#allocation2 + $0xca] sm:$0xff]
      %v419 = vld [vmem:[#allocation2 + $0xda] sm:$0xff]
      %v420 = vld [vmem:[#allocation2 + $0xe2] sm:$0xff]
      %v421 = vld [vmem:[#allocation2 + $0xf2] sm:$0xff]
      %v422 = vld [vmem:[#allocation2 + $0xfa] sm:$0xff]
      %v423 = vld [vmem:[#allocation2 + $0x10a] sm:$0xff]
      %v424 = vld [vmem:[#allocation2 + $0x112] sm:$0xff]
      %v425 = vld [vmem:[#allocation2 + $0x122] sm:$0xff]
      %v426 = vld [vmem:[#allocation2 + $0x12a] sm:$0xff]
      %v427 = vld [vmem:[#allocation2 + $0x13a] sm:$0xff]
      %v428 = vld [vmem:[#allocation2 + $0x142] sm:$0xff]
      %v429 = vld [vmem:[#allocation2 + $0x152] sm:$0xff]
      %v430 = vld [vmem:[#allocation2 + $0x15a] sm:$0xff]
      %v431 = vld [vmem:[#allocation2 + $0x16a] sm:$0xff]
      %v432 = vld [vmem:[#allocation2 + $0x172] sm:$0xff]
      %v433 = vld [vmem:[%s304] sm:$0xff]
      %v434 = vld [vmem:[%s304 + $0x8] sm:$0xff]
      %v435 = vld [vmem:[%s304 + $0x18] sm:$0xff]
      %v436 = vld [vmem:[%s304 + $0x20] sm:$0xff]
      %v437 = vld [vmem:[%s304 + $0x30] sm:$0xff]
      %v438 = vld [vmem:[%s304 + $0x38] sm:$0xff]
      %v439 = vld [vmem:[%s304 + $0x48] sm:$0xff]
      %v440 = vld [vmem:[%s304 + $0x50] sm:$0xff]
      %v441 = vld [vmem:[%s304 + $0x60] sm:$0xff]
      %v442 = vld [vmem:[%s304 + $0x68] sm:$0xff]
      %v443 = vld [vmem:[%s304 + $0x78] sm:$0xff]
      %v444 = vld [vmem:[%s304 + $0x80] sm:$0xff]
      %v445 = vld [vmem:[%s304 + $0x90] sm:$0xff]
      %v446 = vld [vmem:[%s304 + $0x98] sm:$0xff]
      %v447 = vld [vmem:[%s304 + $0xa8] sm:$0xff]
      %v448 = vld [vmem:[%s304 + $0xb0] sm:$0xff]
      %v449 = vld [vmem:[%s304 + $0xc0] sm:$0xff]
      %v450 = vld [vmem:[%s304 + $0xc8] sm:$0xff]
      %v451 = vld [vmem:[%s304 + $0xd8] sm:$0xff]
      %v452 = vld [vmem:[%s304 + $0xe0] sm:$0xff]
      %v453 = vld [vmem:[%s304 + $0xf0] sm:$0xff]
      %v454 = vld [vmem:[%s304 + $0xf8] sm:$0xff]
      %v455 = vld [vmem:[%s304 + $0x108] sm:$0xff]
      %v456 = vld [vmem:[%s304 + $0x110] sm:$0xff]
      %v457 = vld [vmem:[%s304 + $0x120] sm:$0xff]
      %v458 = vld [vmem:[%s304 + $0x128] sm:$0xff]
      %v459 = vld [vmem:[%s304 + $0x138] sm:$0xff]
      %v460 = vld [vmem:[%s304 + $0x140] sm:$0xff]
      %v461 = vld [vmem:[%s304 + $0x150] sm:$0xff]
      %v462 = vld [vmem:[%s304 + $0x158] sm:$0xff]
      %v463 = vld [vmem:[%s304 + $0x168] sm:$0xff]
      %v464 = vld [vmem:[%s304 + $0x170] sm:$0xff]
      %v465 = vld [vmem:[%s304 + $0x1] sm:$0xff]
      %v466 = vld [vmem:[%s304 + $0x9] sm:$0xff]
      %v467 = vld [vmem:[%s304 + $0x19] sm:$0xff]
      %v468 = vld [vmem:[%s304 + $0x21] sm:$0xff]
      %v469 = vld [vmem:[%s304 + $0x31] sm:$0xff]
      %v470 = vld [vmem:[%s304 + $0x39] sm:$0xff]
      %v471 = vld [vmem:[%s304 + $0x49] sm:$0xff]
      %v472 = vld [vmem:[%s304 + $0x51] sm:$0xff]
      %v473 = vld [vmem:[%s304 + $0x61] sm:$0xff]
      %v474 = vld [vmem:[%s304 + $0x69] sm:$0xff]
      %v475 = vld [vmem:[%s304 + $0x79] sm:$0xff]
      %v476 = vld [vmem:[%s304 + $0x81] sm:$0xff]
      %v477 = vld [vmem:[%s304 + $0x91] sm:$0xff]
      %v478 = vld [vmem:[%s304 + $0x99] sm:$0xff]
      %v479 = vld [vmem:[%s304 + $0xa9] sm:$0xff]
      %v480 = vld [vmem:[%s304 + $0xb1] sm:$0xff]
      %v481 = vld [vmem:[%s304 + $0xc1] sm:$0xff]
      %v482 = vld [vmem:[%s304 + $0xc9] sm:$0xff]
      %v483 = vld [vmem:[%s304 + $0xd9] sm:$0xff]
      %v484 = vld [vmem:[%s304 + $0xe1] sm:$0xff]
      %v485 = vld [vmem:[%s304 + $0xf1] sm:$0xff]
      %v486 = vld [vmem:[%s304 + $0xf9] sm:$0xff]
      %v487 = vld [vmem:[%s304 + $0x109] sm:$0xff]
      %v488 = vld [vmem:[%s304 + $0x111] sm:$0xff]
      %v489 = vld [vmem:[%s304 + $0x121] sm:$0xff]
      %v490 = vld [vmem:[%s304 + $0x129] sm:$0xff]
      %v491 = vld [vmem:[%s304 + $0x139] sm:$0xff]
      %v492 = vld [vmem:[%s304 + $0x141] sm:$0xff]
      %v493 = vld [vmem:[%s304 + $0x151] sm:$0xff]
      %v494 = vld [vmem:[%s304 + $0x159] sm:$0xff]
      %v495 = vld [vmem:[%s304 + $0x169] sm:$0xff]
      %v496 = vld [vmem:[%s304 + $0x171] sm:$0xff]
      %v497 = vld [vmem:[%s304 + $0x2] sm:$0xff]
      %v498 = vld [vmem:[%s304 + $0xa] sm:$0xff]
      %v499 = vld [vmem:[%s304 + $0x1a] sm:$0xff]
      %v500 = vld [vmem:[%s304 + $0x22] sm:$0xff]
      %v501 = vld [vmem:[%s304 + $0x32] sm:$0xff]
      %v502 = vld [vmem:[%s304 + $0x3a] sm:$0xff]
      %v503 = vld [vmem:[%s304 + $0x4a] sm:$0xff]
      %v504 = vld [vmem:[%s304 + $0x52] sm:$0xff]
      %v505 = vld [vmem:[%s304 + $0x62] sm:$0xff]
      %v506 = vld [vmem:[%s304 + $0x6a] sm:$0xff]
      %v507 = vld [vmem:[%s304 + $0x7a] sm:$0xff]
      %v508 = vld [vmem:[%s304 + $0x82] sm:$0xff]
      %v509 = vld [vmem:[%s304 + $0x92] sm:$0xff]
      %v510 = vld [vmem:[%s304 + $0x9a] sm:$0xff]
      %v511 = vld [vmem:[%s304 + $0xaa] sm:$0xff]
      %v512 = vld [vmem:[%s304 + $0xb2] sm:$0xff]
      %v513 = vld [vmem:[%s304 + $0xc2] sm:$0xff]
      %v514 = vld [vmem:[%s304 + $0xca] sm:$0xff]
      %v515 = vld [vmem:[%s304 + $0xda] sm:$0xff]
      %v516 = vld [vmem:[%s304 + $0xe2] sm:$0xff]
      %v517 = vld [vmem:[%s304 + $0xf2] sm:$0xff]
      %v518 = vld [vmem:[%s304 + $0xfa] sm:$0xff]
      %v519 = vld [vmem:[%s304 + $0x10a] sm:$0xff]
      %v520 = vld [vmem:[%s304 + $0x112] sm:$0xff]
      %v521 = vld [vmem:[%s304 + $0x122] sm:$0xff]
      %v522 = vld [vmem:[%s304 + $0x12a] sm:$0xff]
      %v523 = vld [vmem:[%s304 + $0x13a] sm:$0xff]
      %v524 = vld [vmem:[%s304 + $0x142] sm:$0xff]
      %v525 = vld [vmem:[%s304 + $0x152] sm:$0xff]
      %v526 = vld [vmem:[%s304 + $0x15a] sm:$0xff]
      %v527 = vld [vmem:[%s304 + $0x16a] sm:$0xff]
      %v528 = vld [vmem:[%s304 + $0x172] sm:$0xff]
      %s529 = scalar_lea.vmem [#allocation2], 48
      %v530 = vld [vmem:[%s529] sm:$0xff]
      %v531 = vld [vmem:[%s529 + $0x8] sm:$0xff]
      %v532 = vld [vmem:[%s529 + $0x18] sm:$0xff]
      %v533 = vld [vmem:[%s529 + $0x20] sm:$0xff]
      %v534 = vld [vmem:[%s529 + $0x30] sm:$0xff]
      %v535 = vld [vmem:[%s529 + $0x38] sm:$0xff]
      %v536 = vld [vmem:[%s529 + $0x48] sm:$0xff]
      %v537 = vld [vmem:[%s529 + $0x50] sm:$0xff]
      %v538 = vld [vmem:[%s529 + $0x60] sm:$0xff]
      %v539 = vld [vmem:[%s529 + $0x68] sm:$0xff]
      %v540 = vld [vmem:[%s529 + $0x78] sm:$0xff]
      %v541 = vld [vmem:[%s529 + $0x80] sm:$0xff]
      %v542 = vld [vmem:[%s529 + $0x90] sm:$0xff]
      %v543 = vld [vmem:[%s529 + $0x98] sm:$0xff]
      %v544 = vld [vmem:[%s529 + $0xa8] sm:$0xff]
      %v545 = vld [vmem:[%s529 + $0xb0] sm:$0xff]
      %v546 = vld [vmem:[%s529 + $0xc0] sm:$0xff]
      %v547 = vld [vmem:[%s529 + $0xc8] sm:$0xff]
      %v548 = vld [vmem:[%s529 + $0xd8] sm:$0xff]
      %v549 = vld [vmem:[%s529 + $0xe0] sm:$0xff]
      %v550 = vld [vmem:[%s529 + $0xf0] sm:$0xff]
      %v551 = vld [vmem:[%s529 + $0xf8] sm:$0xff]
      %v552 = vld [vmem:[%s529 + $0x108] sm:$0xff]
      %v553 = vld [vmem:[%s529 + $0x110] sm:$0xff]
      %v554 = vld [vmem:[%s529 + $0x120] sm:$0xff]
      %v555 = vld [vmem:[%s529 + $0x128] sm:$0xff]
      %v556 = vld [vmem:[%s529 + $0x138] sm:$0xff]
      %v557 = vld [vmem:[%s529 + $0x140] sm:$0xff]
      %v558 = vld [vmem:[%s529 + $0x150] sm:$0xff]
      %v559 = vld [vmem:[%s529 + $0x158] sm:$0xff]
      %v560 = vld [vmem:[%s529 + $0x168] sm:$0xff]
      %v561 = vld [vmem:[%s529 + $0x170] sm:$0xff]
      %v562 = vld [vmem:[%s529 + $0x1] sm:$0xff]
      %v563 = vld [vmem:[%s529 + $0x9] sm:$0xff]
      %v564 = vld [vmem:[%s529 + $0x19] sm:$0xff]
      %v565 = vld [vmem:[%s529 + $0x21] sm:$0xff]
      %v566 = vld [vmem:[%s529 + $0x31] sm:$0xff]
      %v567 = vld [vmem:[%s529 + $0x39] sm:$0xff]
      %v568 = vld [vmem:[%s529 + $0x49] sm:$0xff]
      %v569 = vld [vmem:[%s529 + $0x51] sm:$0xff]
      %v570 = vld [vmem:[%s529 + $0x61] sm:$0xff]
      %v571 = vld [vmem:[%s529 + $0x69] sm:$0xff]
      %v572 = vld [vmem:[%s529 + $0x79] sm:$0xff]
      %v573 = vld [vmem:[%s529 + $0x81] sm:$0xff]
      %v574 = vld [vmem:[%s529 + $0x91] sm:$0xff]
      %v575 = vld [vmem:[%s529 + $0x99] sm:$0xff]
      %v576 = vld [vmem:[%s529 + $0xa9] sm:$0xff]
      %v577 = vld [vmem:[%s529 + $0xb1] sm:$0xff]
      %v578 = vld [vmem:[%s529 + $0xc1] sm:$0xff]
      %v579 = vld [vmem:[%s529 + $0xc9] sm:$0xff]
      %v580 = vld [vmem:[%s529 + $0xd9] sm:$0xff]
      %v581 = vld [vmem:[%s529 + $0xe1] sm:$0xff]
      %v582 = vld [vmem:[%s529 + $0xf1] sm:$0xff]
      %v583 = vld [vmem:[%s529 + $0xf9] sm:$0xff]
      %v584 = vld [vmem:[%s529 + $0x109] sm:$0xff]
      %v585 = vld [vmem:[%s529 + $0x111] sm:$0xff]
      %v586 = vld [vmem:[%s529 + $0x121] sm:$0xff]
      %v587 = vld [vmem:[%s529 + $0x129] sm:$0xff]
      %v588 = vld [vmem:[%s529 + $0x139] sm:$0xff]
      %v589 = vld [vmem:[%s529 + $0x141] sm:$0xff]
      %v590 = vld [vmem:[%s529 + $0x151] sm:$0xff]
      %v591 = vld [vmem:[%s529 + $0x159] sm:$0xff]
      %v592 = vld [vmem:[%s529 + $0x169] sm:$0xff]
      %v593 = vld [vmem:[%s529 + $0x171] sm:$0xff]
      %v594 = vld [vmem:[%s529 + $0x2] sm:$0xff]
      %v595 = vld [vmem:[%s529 + $0xa] sm:$0xff]
      %v596 = vld [vmem:[%s529 + $0x1a] sm:$0xff]
      %v597 = vld [vmem:[%s529 + $0x22] sm:$0xff]
      %v598 = vld [vmem:[%s529 + $0x32] sm:$0xff]
      %v599 = vld [vmem:[%s529 + $0x3a] sm:$0xff]
      %v600 = vld [vmem:[%s529 + $0x4a] sm:$0xff]
      %v601 = vld [vmem:[%s529 + $0x52] sm:$0xff]
      %v602 = vld [vmem:[%s529 + $0x62] sm:$0xff]
      %v603 = vld [vmem:[%s529 + $0x6a] sm:$0xff]
      %v604 = vld [vmem:[%s529 + $0x7a] sm:$0xff]
      %v605 = vld [vmem:[%s529 + $0x82] sm:$0xff]
      %v606 = vld [vmem:[%s529 + $0x92] sm:$0xff]
      %v607 = vld [vmem:[%s529 + $0x9a] sm:$0xff]
      %v608 = vld [vmem:[%s529 + $0xaa] sm:$0xff]
      %v609 = vld [vmem:[%s529 + $0xb2] sm:$0xff]
      %v610 = vld [vmem:[%s529 + $0xc2] sm:$0xff]
      %v611 = vld [vmem:[%s529 + $0xca] sm:$0xff]
      %v612 = vld [vmem:[%s529 + $0xda] sm:$0xff]
      %v613 = vld [vmem:[%s529 + $0xe2] sm:$0xff]
      %v614 = vld [vmem:[%s529 + $0xf2] sm:$0xff]
      %v615 = vld [vmem:[%s529 + $0xfa] sm:$0xff]
      %v616 = vld [vmem:[%s529 + $0x10a] sm:$0xff]
      %v617 = vld [vmem:[%s529 + $0x112] sm:$0xff]
      %v618 = vld [vmem:[%s529 + $0x122] sm:$0xff]
      %v619 = vld [vmem:[%s529 + $0x12a] sm:$0xff]
      %v620 = vld [vmem:[%s529 + $0x13a] sm:$0xff]
      %v621 = vld [vmem:[%s529 + $0x142] sm:$0xff]
      %v622 = vld [vmem:[%s529 + $0x152] sm:$0xff]
      %v623 = vld [vmem:[%s529 + $0x15a] sm:$0xff]
      %v624 = vld [vmem:[%s529 + $0x16a] sm:$0xff]
      %v625 = vld [vmem:[%s529 + $0x172] sm:$0xff]
      %658 = vrot.lane.b32.xlu0 %v369, 4
      %v659 = vpop.permute.xlu0 %658
      %660 = vrot.lane.b32.xlu0 %v370, 4
      %v661 = vpop.permute.xlu0 %660
      %662 = vrot.lane.b32.xlu0 %v371, 4
      %v663 = vpop.permute.xlu0 %662
      %664 = vrot.lane.b32.xlu0 %v372, 4
      %v665 = vpop.permute.xlu0 %664
      %666 = vrot.lane.b32.xlu0 %v373, 4
      %v667 = vpop.permute.xlu0 %666
      %668 = vrot.lane.b32.xlu0 %v374, 4
      %v669 = vpop.permute.xlu0 %668
      %670 = vrot.lane.b32.xlu0 %v375, 4
      %v671 = vpop.permute.xlu0 %670
      %672 = vrot.lane.b32.xlu0 %v376, 4
      %v673 = vpop.permute.xlu0 %672
      %674 = vrot.lane.b32.xlu0 %v377, 4
      %v675 = vpop.permute.xlu0 %674
      %676 = vrot.lane.b32.xlu0 %v378, 4
      %v677 = vpop.permute.xlu0 %676
      %678 = vrot.lane.b32.xlu0 %v379, 4
      %v679 = vpop.permute.xlu0 %678
      %680 = vrot.lane.b32.xlu0 %v380, 4
      %v681 = vpop.permute.xlu0 %680
      %682 = vrot.lane.b32.xlu0 %v381, 4
      %v683 = vpop.permute.xlu0 %682
      %684 = vrot.lane.b32.xlu0 %v382, 4
      %v685 = vpop.permute.xlu0 %684
      %686 = vrot.lane.b32.xlu0 %v383, 4
      %v687 = vpop.permute.xlu0 %686
      %688 = vrot.lane.b32.xlu0 %v384, 4
      %v689 = vpop.permute.xlu0 %688
      %690 = vrot.lane.b32.xlu0 %v385, 4
      %v691 = vpop.permute.xlu0 %690
      %692 = vrot.lane.b32.xlu0 %v386, 4
      %v693 = vpop.permute.xlu0 %692
      %694 = vrot.lane.b32.xlu0 %v387, 4
      %v695 = vpop.permute.xlu0 %694
      %696 = vrot.lane.b32.xlu0 %v388, 4
      %v697 = vpop.permute.xlu0 %696
      %698 = vrot.lane.b32.xlu0 %v389, 4
      %v699 = vpop.permute.xlu0 %698
      %700 = vrot.lane.b32.xlu0 %v390, 4
      %v701 = vpop.permute.xlu0 %700
      %702 = vrot.lane.b32.xlu0 %v391, 4
      %v703 = vpop.permute.xlu0 %702
      %704 = vrot.lane.b32.xlu0 %v392, 4
      %v705 = vpop.permute.xlu0 %704
      %706 = vrot.lane.b32.xlu0 %v393, 4
      %v707 = vpop.permute.xlu0 %706
      %708 = vrot.lane.b32.xlu0 %v394, 4
      %v709 = vpop.permute.xlu0 %708
      %710 = vrot.lane.b32.xlu0 %v395, 4
      %v711 = vpop.permute.xlu0 %710
      %712 = vrot.lane.b32.xlu0 %v396, 4
      %v713 = vpop.permute.xlu0 %712
      %714 = vrot.lane.b32.xlu0 %v397, 4
      %v715 = vpop.permute.xlu0 %714
      %716 = vrot.lane.b32.xlu0 %v398, 4
      %v717 = vpop.permute.xlu0 %716
      %718 = vrot.lane.b32.xlu0 %v399, 4
      %v719 = vpop.permute.xlu0 %718
      %720 = vrot.lane.b32.xlu0 %v400, 4
      %v721 = vpop.permute.xlu0 %720
      %786 = vrot.lane.b32.xlu0 %v401, 8
      %v787 = vpop.permute.xlu0 %786
      %788 = vrot.lane.b32.xlu0 %v402, 8
      %v789 = vpop.permute.xlu0 %788
      %790 = vrot.lane.b32.xlu0 %v403, 8
      %v791 = vpop.permute.xlu0 %790
      %792 = vrot.lane.b32.xlu0 %v404, 8
      %v793 = vpop.permute.xlu0 %792
      %794 = vrot.lane.b32.xlu0 %v405, 8
      %v795 = vpop.permute.xlu0 %794
      %796 = vrot.lane.b32.xlu0 %v406, 8
      %v797 = vpop.permute.xlu0 %796
      %798 = vrot.lane.b32.xlu0 %v407, 8
      %v799 = vpop.permute.xlu0 %798
      %800 = vrot.lane.b32.xlu0 %v408, 8
      %v801 = vpop.permute.xlu0 %800
      %802 = vrot.lane.b32.xlu0 %v409, 8
      %v803 = vpop.permute.xlu0 %802
      %804 = vrot.lane.b32.xlu0 %v410, 8
      %v805 = vpop.permute.xlu0 %804
      %806 = vrot.lane.b32.xlu0 %v411, 8
      %v807 = vpop.permute.xlu0 %806
      %808 = vrot.lane.b32.xlu0 %v412, 8
      %v809 = vpop.permute.xlu0 %808
      %810 = vrot.lane.b32.xlu0 %v413, 8
      %v811 = vpop.permute.xlu0 %810
      %812 = vrot.lane.b32.xlu0 %v414, 8
      %v813 = vpop.permute.xlu0 %812
      %814 = vrot.lane.b32.xlu0 %v415, 8
      %v815 = vpop.permute.xlu0 %814
      %816 = vrot.lane.b32.xlu0 %v416, 8
      %v817 = vpop.permute.xlu0 %816
      %818 = vrot.lane.b32.xlu0 %v417, 8
      %v819 = vpop.permute.xlu0 %818
      %820 = vrot.lane.b32.xlu0 %v418, 8
      %v821 = vpop.permute.xlu0 %820
      %822 = vrot.lane.b32.xlu0 %v419, 8
      %v823 = vpop.permute.xlu0 %822
      %824 = vrot.lane.b32.xlu0 %v420, 8
      %v825 = vpop.permute.xlu0 %824
      %826 = vrot.lane.b32.xlu0 %v421, 8
      %v827 = vpop.permute.xlu0 %826
      %828 = vrot.lane.b32.xlu0 %v422, 8
      %v829 = vpop.permute.xlu0 %828
      %830 = vrot.lane.b32.xlu0 %v423, 8
      %v831 = vpop.permute.xlu0 %830
      %832 = vrot.lane.b32.xlu0 %v424, 8
      %v833 = vpop.permute.xlu0 %832
      %834 = vrot.lane.b32.xlu0 %v425, 8
      %v835 = vpop.permute.xlu0 %834
      %836 = vrot.lane.b32.xlu0 %v426, 8
      %v837 = vpop.permute.xlu0 %836
      %838 = vrot.lane.b32.xlu0 %v427, 8
      %v839 = vpop.permute.xlu0 %838
      %840 = vrot.lane.b32.xlu0 %v428, 8
      %v841 = vpop.permute.xlu0 %840
      %842 = vrot.lane.b32.xlu0 %v429, 8
      %v843 = vpop.permute.xlu0 %842
      %844 = vrot.lane.b32.xlu0 %v430, 8
      %v845 = vpop.permute.xlu0 %844
      %846 = vrot.lane.b32.xlu0 %v431, 8
      %v847 = vpop.permute.xlu0 %846
      %848 = vrot.lane.b32.xlu0 %v432, 8
      %v849 = vpop.permute.xlu0 %848
      %914 = vrot.lane.b32.xlu0 %v433, 12
      %v915 = vpop.permute.xlu0 %914
      %916 = vrot.lane.b32.xlu0 %v434, 12
      %v917 = vpop.permute.xlu0 %916
      %918 = vrot.lane.b32.xlu0 %v435, 12
      %v919 = vpop.permute.xlu0 %918
      %920 = vrot.lane.b32.xlu0 %v436, 12
      %v921 = vpop.permute.xlu0 %920
      %922 = vrot.lane.b32.xlu0 %v437, 12
      %v923 = vpop.permute.xlu0 %922
      %924 = vrot.lane.b32.xlu0 %v438, 12
      %v925 = vpop.permute.xlu0 %924
      %926 = vrot.lane.b32.xlu0 %v439, 12
      %v927 = vpop.permute.xlu0 %926
      %928 = vrot.lane.b32.xlu0 %v440, 12
      %v929 = vpop.permute.xlu0 %928
      %930 = vrot.lane.b32.xlu0 %v441, 12
      %v931 = vpop.permute.xlu0 %930
      %932 = vrot.lane.b32.xlu0 %v442, 12
      %v933 = vpop.permute.xlu0 %932
      %934 = vrot.lane.b32.xlu0 %v443, 12
      %v935 = vpop.permute.xlu0 %934
      %936 = vrot.lane.b32.xlu0 %v444, 12
      %v937 = vpop.permute.xlu0 %936
      %938 = vrot.lane.b32.xlu0 %v445, 12
      %v939 = vpop.permute.xlu0 %938
      %940 = vrot.lane.b32.xlu0 %v446, 12
      %v941 = vpop.permute.xlu0 %940
      %942 = vrot.lane.b32.xlu0 %v447, 12
      %v943 = vpop.permute.xlu0 %942
      %944 = vrot.lane.b32.xlu0 %v448, 12
      %v945 = vpop.permute.xlu0 %944
      %946 = vrot.lane.b32.xlu0 %v449, 12
      %v947 = vpop.permute.xlu0 %946
      %948 = vrot.lane.b32.xlu0 %v450, 12
      %v949 = vpop.permute.xlu0 %948
      %950 = vrot.lane.b32.xlu0 %v451, 12
      %v951 = vpop.permute.xlu0 %950
      %952 = vrot.lane.b32.xlu0 %v452, 12
      %v953 = vpop.permute.xlu0 %952
      %954 = vrot.lane.b32.xlu0 %v453, 12
      %v955 = vpop.permute.xlu0 %954
      %956 = vrot.lane.b32.xlu0 %v454, 12
      %v957 = vpop.permute.xlu0 %956
      %958 = vrot.lane.b32.xlu0 %v455, 12
      %v959 = vpop.permute.xlu0 %958
      %960 = vrot.lane.b32.xlu0 %v456, 12
      %v961 = vpop.permute.xlu0 %960
      %962 = vrot.lane.b32.xlu0 %v457, 12
      %v963 = vpop.permute.xlu0 %962
      %964 = vrot.lane.b32.xlu0 %v458, 12
      %v965 = vpop.permute.xlu0 %964
      %966 = vrot.lane.b32.xlu0 %v459, 12
      %v967 = vpop.permute.xlu0 %966
      %968 = vrot.lane.b32.xlu0 %v460, 12
      %v969 = vpop.permute.xlu0 %968
      %970 = vrot.lane.b32.xlu0 %v461, 12
      %v971 = vpop.permute.xlu0 %970
      %972 = vrot.lane.b32.xlu0 %v462, 12
      %v973 = vpop.permute.xlu0 %972
      %974 = vrot.lane.b32.xlu0 %v463, 12
      %v975 = vpop.permute.xlu0 %974
      %976 = vrot.lane.b32.xlu0 %v464, 12
      %v977 = vpop.permute.xlu0 %976
      %1042 = vrot.lane.b32.xlu0 %v465, 16
      %v1043 = vpop.permute.xlu0 %1042
      %1044 = vrot.lane.b32.xlu0 %v466, 16
      %v1045 = vpop.permute.xlu0 %1044
      %1046 = vrot.lane.b32.xlu0 %v467, 16
      %v1047 = vpop.permute.xlu0 %1046
      %1048 = vrot.lane.b32.xlu0 %v468, 16
      %v1049 = vpop.permute.xlu0 %1048
      %1050 = vrot.lane.b32.xlu0 %v469, 16
      %v1051 = vpop.permute.xlu0 %1050
      %1052 = vrot.lane.b32.xlu0 %v470, 16
      %v1053 = vpop.permute.xlu0 %1052
      %1054 = vrot.lane.b32.xlu0 %v471, 16
      %v1055 = vpop.permute.xlu0 %1054
      %1056 = vrot.lane.b32.xlu0 %v472, 16
      %v1057 = vpop.permute.xlu0 %1056
      %1058 = vrot.lane.b32.xlu0 %v473, 16
      %v1059 = vpop.permute.xlu0 %1058
      %1060 = vrot.lane.b32.xlu0 %v474, 16
      %v1061 = vpop.permute.xlu0 %1060
      %1062 = vrot.lane.b32.xlu0 %v475, 16
      %v1063 = vpop.permute.xlu0 %1062
      %1064 = vrot.lane.b32.xlu0 %v476, 16
      %v1065 = vpop.permute.xlu0 %1064
      %1066 = vrot.lane.b32.xlu0 %v477, 16
      %v1067 = vpop.permute.xlu0 %1066
      %1068 = vrot.lane.b32.xlu0 %v478, 16
      %v1069 = vpop.permute.xlu0 %1068
      %1070 = vrot.lane.b32.xlu0 %v479, 16
      %v1071 = vpop.permute.xlu0 %1070
      %1072 = vrot.lane.b32.xlu0 %v480, 16
      %v1073 = vpop.permute.xlu0 %1072
      %1074 = vrot.lane.b32.xlu0 %v481, 16
      %v1075 = vpop.permute.xlu0 %1074
      %1076 = vrot.lane.b32.xlu0 %v482, 16
      %v1077 = vpop.permute.xlu0 %1076
      %1078 = vrot.lane.b32.xlu0 %v483, 16
      %v1079 = vpop.permute.xlu0 %1078
      %1080 = vrot.lane.b32.xlu0 %v484, 16
      %v1081 = vpop.permute.xlu0 %1080
      %1082 = vrot.lane.b32.xlu0 %v485, 16
      %v1083 = vpop.permute.xlu0 %1082
      %1084 = vrot.lane.b32.xlu0 %v486, 16
      %v1085 = vpop.permute.xlu0 %1084
      %1086 = vrot.lane.b32.xlu0 %v487, 16
      %v1087 = vpop.permute.xlu0 %1086
      %1088 = vrot.lane.b32.xlu0 %v488, 16
      %v1089 = vpop.permute.xlu0 %1088
      %1090 = vrot.lane.b32.xlu0 %v489, 16
      %v1091 = vpop.permute.xlu0 %1090
      %1092 = vrot.lane.b32.xlu0 %v490, 16
      %v1093 = vpop.permute.xlu0 %1092
      %1094 = vrot.lane.b32.xlu0 %v491, 16
      %v1095 = vpop.permute.xlu0 %1094
      %1096 = vrot.lane.b32.xlu0 %v492, 16
      %v1097 = vpop.permute.xlu0 %1096
      %1098 = vrot.lane.b32.xlu0 %v493, 16
      %v1099 = vpop.permute.xlu0 %1098
      %1100 = vrot.lane.b32.xlu0 %v494, 16
      %v1101 = vpop.permute.xlu0 %1100
      %1102 = vrot.lane.b32.xlu0 %v495, 16
      %v1103 = vpop.permute.xlu0 %1102
      %1104 = vrot.lane.b32.xlu0 %v496, 16
      %v1105 = vpop.permute.xlu0 %1104
      %1170 = vrot.lane.b32.xlu0 %v497, 20
      %v1171 = vpop.permute.xlu0 %1170
      %1172 = vrot.lane.b32.xlu0 %v498, 20
      %v1173 = vpop.permute.xlu0 %1172
      %1174 = vrot.lane.b32.xlu0 %v499, 20
      %v1175 = vpop.permute.xlu0 %1174
      %1176 = vrot.lane.b32.xlu0 %v500, 20
      %v1177 = vpop.permute.xlu0 %1176
      %1178 = vrot.lane.b32.xlu0 %v501, 20
      %v1179 = vpop.permute.xlu0 %1178
      %1180 = vrot.lane.b32.xlu0 %v502, 20
      %v1181 = vpop.permute.xlu0 %1180
      %1182 = vrot.lane.b32.xlu0 %v503, 20
      %v1183 = vpop.permute.xlu0 %1182
      %1184 = vrot.lane.b32.xlu0 %v504, 20
      %v1185 = vpop.permute.xlu0 %1184
      %1186 = vrot.lane.b32.xlu0 %v505, 20
      %v1187 = vpop.permute.xlu0 %1186
      %1188 = vrot.lane.b32.xlu0 %v506, 20
      %v1189 = vpop.permute.xlu0 %1188
      %1190 = vrot.lane.b32.xlu0 %v507, 20
      %v1191 = vpop.permute.xlu0 %1190
      %1192 = vrot.lane.b32.xlu0 %v508, 20
      %v1193 = vpop.permute.xlu0 %1192
      %1194 = vrot.lane.b32.xlu0 %v509, 20
      %v1195 = vpop.permute.xlu0 %1194
      %1196 = vrot.lane.b32.xlu0 %v510, 20
      %v1197 = vpop.permute.xlu0 %1196
      %1198 = vrot.lane.b32.xlu0 %v511, 20
      %v1199 = vpop.permute.xlu0 %1198
      %1200 = vrot.lane.b32.xlu0 %v512, 20
      %v1201 = vpop.permute.xlu0 %1200
      %1202 = vrot.lane.b32.xlu0 %v513, 20
      %v1203 = vpop.permute.xlu0 %1202
      %1204 = vrot.lane.b32.xlu0 %v514, 20
      %v1205 = vpop.permute.xlu0 %1204
      %1206 = vrot.lane.b32.xlu0 %v515, 20
      %v1207 = vpop.permute.xlu0 %1206
      %1208 = vrot.lane.b32.xlu0 %v516, 20
      %v1209 = vpop.permute.xlu0 %1208
      %1210 = vrot.lane.b32.xlu0 %v517, 20
      %v1211 = vpop.permute.xlu0 %1210
      %1212 = vrot.lane.b32.xlu0 %v518, 20
      %v1213 = vpop.permute.xlu0 %1212
      %1214 = vrot.lane.b32.xlu0 %v519, 20
      %v1215 = vpop.permute.xlu0 %1214
      %1216 = vrot.lane.b32.xlu0 %v520, 20
      %v1217 = vpop.permute.xlu0 %1216
      %1218 = vrot.lane.b32.xlu0 %v521, 20
      %v1219 = vpop.permute.xlu0 %1218
      %1220 = vrot.lane.b32.xlu0 %v522, 20
      %v1221 = vpop.permute.xlu0 %1220
      %1222 = vrot.lane.b32.xlu0 %v523, 20
      %v1223 = vpop.permute.xlu0 %1222
      %1224 = vrot.lane.b32.xlu0 %v524, 20
      %v1225 = vpop.permute.xlu0 %1224
      %1226 = vrot.lane.b32.xlu0 %v525, 20
      %v1227 = vpop.permute.xlu0 %1226
      %1228 = vrot.lane.b32.xlu0 %v526, 20
      %v1229 = vpop.permute.xlu0 %1228
      %1230 = vrot.lane.b32.xlu0 %v527, 20
      %v1231 = vpop.permute.xlu0 %1230
      %1232 = vrot.lane.b32.xlu0 %v528, 20
      %v1233 = vpop.permute.xlu0 %1232
      %1298 = vrot.lane.b32.xlu0 %v530, 24
      %v1299 = vpop.permute.xlu0 %1298
      %1300 = vrot.lane.b32.xlu0 %v531, 24
      %v1301 = vpop.permute.xlu0 %1300
      %1302 = vrot.lane.b32.xlu0 %v532, 24
      %v1303 = vpop.permute.xlu0 %1302
      %1304 = vrot.lane.b32.xlu0 %v533, 24
      %v1305 = vpop.permute.xlu0 %1304
      %1306 = vrot.lane.b32.xlu0 %v534, 24
      %v1307 = vpop.permute.xlu0 %1306
      %1308 = vrot.lane.b32.xlu0 %v535, 24
      %v1309 = vpop.permute.xlu0 %1308
      %1310 = vrot.lane.b32.xlu0 %v536, 24
      %v1311 = vpop.permute.xlu0 %1310
      %1312 = vrot.lane.b32.xlu0 %v537, 24
      %v1313 = vpop.permute.xlu0 %1312
      %1314 = vrot.lane.b32.xlu0 %v538, 24
      %v1315 = vpop.permute.xlu0 %1314
      %1316 = vrot.lane.b32.xlu0 %v539, 24
      %v1317 = vpop.permute.xlu0 %1316
      %1318 = vrot.lane.b32.xlu0 %v540, 24
      %v1319 = vpop.permute.xlu0 %1318
      %1320 = vrot.lane.b32.xlu0 %v541, 24
      %v1321 = vpop.permute.xlu0 %1320
      %1322 = vrot.lane.b32.xlu0 %v542, 24
      %v1323 = vpop.permute.xlu0 %1322
      %1324 = vrot.lane.b32.xlu0 %v543, 24
      %v1325 = vpop.permute.xlu0 %1324
      %1326 = vrot.lane.b32.xlu0 %v544, 24
      %v1327 = vpop.permute.xlu0 %1326
      %1328 = vrot.lane.b32.xlu0 %v545, 24
      %v1329 = vpop.permute.xlu0 %1328
      %1330 = vrot.lane.b32.xlu0 %v546, 24
      %v1331 = vpop.permute.xlu0 %1330
      %1332 = vrot.lane.b32.xlu0 %v547, 24
      %v1333 = vpop.permute.xlu0 %1332
      %1334 = vrot.lane.b32.xlu0 %v548, 24
      %v1335 = vpop.permute.xlu0 %1334
      %1336 = vrot.lane.b32.xlu0 %v549, 24
      %v1337 = vpop.permute.xlu0 %1336
      %1338 = vrot.lane.b32.xlu0 %v550, 24
      %v1339 = vpop.permute.xlu0 %1338
      %1340 = vrot.lane.b32.xlu0 %v551, 24
      %v1341 = vpop.permute.xlu0 %1340
      %1342 = vrot.lane.b32.xlu0 %v552, 24
      %v1343 = vpop.permute.xlu0 %1342
      %1344 = vrot.lane.b32.xlu0 %v553, 24
      %v1345 = vpop.permute.xlu0 %1344
      %1346 = vrot.lane.b32.xlu0 %v554, 24
      %v1347 = vpop.permute.xlu0 %1346
      %1348 = vrot.lane.b32.xlu0 %v555, 24
      %v1349 = vpop.permute.xlu0 %1348
      %1350 = vrot.lane.b32.xlu0 %v556, 24
      %v1351 = vpop.permute.xlu0 %1350
      %1352 = vrot.lane.b32.xlu0 %v557, 24
      %v1353 = vpop.permute.xlu0 %1352
      %1354 = vrot.lane.b32.xlu0 %v558, 24
      %v1355 = vpop.permute.xlu0 %1354
      %1356 = vrot.lane.b32.xlu0 %v559, 24
      %v1357 = vpop.permute.xlu0 %1356
      %1358 = vrot.lane.b32.xlu0 %v560, 24
      %v1359 = vpop.permute.xlu0 %1358
      %1360 = vrot.lane.b32.xlu0 %v561, 24
      %v1361 = vpop.permute.xlu0 %1360
      %1426 = vrot.lane.b32.xlu0 %v562, 28
      %v1427 = vpop.permute.xlu0 %1426
      %1428 = vrot.lane.b32.xlu0 %v563, 28
      %v1429 = vpop.permute.xlu0 %1428
      %1430 = vrot.lane.b32.xlu0 %v564, 28
      %v1431 = vpop.permute.xlu0 %1430
      %1432 = vrot.lane.b32.xlu0 %v565, 28
      %v1433 = vpop.permute.xlu0 %1432
      %1434 = vrot.lane.b32.xlu0 %v566, 28
      %v1435 = vpop.permute.xlu0 %1434
      %1436 = vrot.lane.b32.xlu0 %v567, 28
      %v1437 = vpop.permute.xlu0 %1436
      %1438 = vrot.lane.b32.xlu0 %v568, 28
      %v1439 = vpop.permute.xlu0 %1438
      %1440 = vrot.lane.b32.xlu0 %v569, 28
      %v1441 = vpop.permute.xlu0 %1440
      %1442 = vrot.lane.b32.xlu0 %v570, 28
      %v1443 = vpop.permute.xlu0 %1442
      %1444 = vrot.lane.b32.xlu0 %v571, 28
      %v1445 = vpop.permute.xlu0 %1444
      %1446 = vrot.lane.b32.xlu0 %v572, 28
      %v1447 = vpop.permute.xlu0 %1446
      %1448 = vrot.lane.b32.xlu0 %v573, 28
      %v1449 = vpop.permute.xlu0 %1448
      %1450 = vrot.lane.b32.xlu0 %v574, 28
      %v1451 = vpop.permute.xlu0 %1450
      %1452 = vrot.lane.b32.xlu0 %v575, 28
      %v1453 = vpop.permute.xlu0 %1452
      %1454 = vrot.lane.b32.xlu0 %v576, 28
      %v1455 = vpop.permute.xlu0 %1454
      %1456 = vrot.lane.b32.xlu0 %v577, 28
      %v1457 = vpop.permute.xlu0 %1456
      %1458 = vrot.lane.b32.xlu0 %v578, 28
      %v1459 = vpop.permute.xlu0 %1458
      %1460 = vrot.lane.b32.xlu0 %v579, 28
      %v1461 = vpop.permute.xlu0 %1460
      %1462 = vrot.lane.b32.xlu0 %v580, 28
      %v1463 = vpop.permute.xlu0 %1462
      %1464 = vrot.lane.b32.xlu0 %v581, 28
      %v1465 = vpop.permute.xlu0 %1464
      %1466 = vrot.lane.b32.xlu0 %v582, 28
      %v1467 = vpop.permute.xlu0 %1466
      %1468 = vrot.lane.b32.xlu0 %v583, 28
      %v1469 = vpop.permute.xlu0 %1468
      %1470 = vrot.lane.b32.xlu0 %v584, 28
      %v1471 = vpop.permute.xlu0 %1470
      %1472 = vrot.lane.b32.xlu0 %v585, 28
      %v1473 = vpop.permute.xlu0 %1472
      %1474 = vrot.lane.b32.xlu0 %v586, 28
      %v1475 = vpop.permute.xlu0 %1474
      %1476 = vrot.lane.b32.xlu0 %v587, 28
      %v1477 = vpop.permute.xlu0 %1476
      %1478 = vrot.lane.b32.xlu0 %v588, 28
      %v1479 = vpop.permute.xlu0 %1478
      %1480 = vrot.lane.b32.xlu0 %v589, 28
      %v1481 = vpop.permute.xlu0 %1480
      %1482 = vrot.lane.b32.xlu0 %v590, 28
      %v1483 = vpop.permute.xlu0 %1482
      %1484 = vrot.lane.b32.xlu0 %v591, 28
      %v1485 = vpop.permute.xlu0 %1484
      %1486 = vrot.lane.b32.xlu0 %v592, 28
      %v1487 = vpop.permute.xlu0 %1486
      %1488 = vrot.lane.b32.xlu0 %v593, 28
      %v1489 = vpop.permute.xlu0 %1488
      %1554 = vrot.lane.b32.xlu0 %v594, 32
      %v1555 = vpop.permute.xlu0 %1554
      %1556 = vrot.lane.b32.xlu0 %v595, 32
      %v1557 = vpop.permute.xlu0 %1556
      %1558 = vrot.lane.b32.xlu0 %v596, 32
      %v1559 = vpop.permute.xlu0 %1558
      %1560 = vrot.lane.b32.xlu0 %v597, 32
      %v1561 = vpop.permute.xlu0 %1560
      %1562 = vrot.lane.b32.xlu0 %v598, 32
      %v1563 = vpop.permute.xlu0 %1562
      %1564 = vrot.lane.b32.xlu0 %v599, 32
      %v1565 = vpop.permute.xlu0 %1564
      %1566 = vrot.lane.b32.xlu0 %v600, 32
      %v1567 = vpop.permute.xlu0 %1566
      %1568 = vrot.lane.b32.xlu0 %v601, 32
      %v1569 = vpop.permute.xlu0 %1568
      %1570 = vrot.lane.b32.xlu0 %v602, 32
      %v1571 = vpop.permute.xlu0 %1570
      %1572 = vrot.lane.b32.xlu0 %v603, 32
      %v1573 = vpop.permute.xlu0 %1572
      %1574 = vrot.lane.b32.xlu0 %v604, 32
      %v1575 = vpop.permute.xlu0 %1574
      %1576 = vrot.lane.b32.xlu0 %v605, 32
      %v1577 = vpop.permute.xlu0 %1576
      %1578 = vrot.lane.b32.xlu0 %v606, 32
      %v1579 = vpop.permute.xlu0 %1578
      %1580 = vrot.lane.b32.xlu0 %v607, 32
      %v1581 = vpop.permute.xlu0 %1580
      %1582 = vrot.lane.b32.xlu0 %v608, 32
      %v1583 = vpop.permute.xlu0 %1582
      %1584 = vrot.lane.b32.xlu0 %v609, 32
      %v1585 = vpop.permute.xlu0 %1584
      %1586 = vrot.lane.b32.xlu0 %v610, 32
      %v1587 = vpop.permute.xlu0 %1586
      %1588 = vrot.lane.b32.xlu0 %v611, 32
      %v1589 = vpop.permute.xlu0 %1588
      %1590 = vrot.lane.b32.xlu0 %v612, 32
      %v1591 = vpop.permute.xlu0 %1590
      %1592 = vrot.lane.b32.xlu0 %v613, 32
      %v1593 = vpop.permute.xlu0 %1592
      %1594 = vrot.lane.b32.xlu0 %v614, 32
      %v1595 = vpop.permute.xlu0 %1594
      %1596 = vrot.lane.b32.xlu0 %v615, 32
      %v1597 = vpop.permute.xlu0 %1596
      %1598 = vrot.lane.b32.xlu0 %v616, 32
      %v1599 = vpop.permute.xlu0 %1598
      %1600 = vrot.lane.b32.xlu0 %v617, 32
      %v1601 = vpop.permute.xlu0 %1600
      %1602 = vrot.lane.b32.xlu0 %v618, 32
      %v1603 = vpop.permute.xlu0 %1602
      %1604 = vrot.lane.b32.xlu0 %v619, 32
      %v1605 = vpop.permute.xlu0 %1604
      %1606 = vrot.lane.b32.xlu0 %v620, 32
      %v1607 = vpop.permute.xlu0 %1606
      %1608 = vrot.lane.b32.xlu0 %v621, 32
      %v1609 = vpop.permute.xlu0 %1608
      %1610 = vrot.lane.b32.xlu0 %v622, 32
      %v1611 = vpop.permute.xlu0 %1610
      %1612 = vrot.lane.b32.xlu0 %v623, 32
      %v1613 = vpop.permute.xlu0 %1612
      %1614 = vrot.lane.b32.xlu0 %v624, 32
      %v1615 = vpop.permute.xlu0 %1614
      %1616 = vrot.lane.b32.xlu0 %v625, 32
      %v1617 = vpop.permute.xlu0 %1616
      %v1650 = vsel %vm226, %v337, %v659
      %v1651 = vsel %vm226, %v338, %v661
      %v1652 = vsel %vm226, %v339, %v663
      %v1653 = vsel %vm226, %v340, %v665
      %v1654 = vsel %vm226, %v341, %v667
      %v1655 = vsel %vm226, %v342, %v669
      %v1656 = vsel %vm226, %v343, %v671
      %v1657 = vsel %vm226, %v344, %v673
      %v1658 = vsel %vm226, %v345, %v675
      %v1659 = vsel %vm226, %v346, %v677
      %v1660 = vsel %vm226, %v347, %v679
      %v1661 = vsel %vm226, %v348, %v681
      %v1662 = vsel %vm226, %v349, %v683
      %v1663 = vsel %vm226, %v350, %v685
      %v1664 = vsel %vm226, %v351, %v687
      %v1665 = vsel %vm226, %v352, %v689
      %v1666 = vsel %vm226, %v353, %v691
      %v1667 = vsel %vm226, %v354, %v693
      %v1668 = vsel %vm226, %v355, %v695
      %v1669 = vsel %vm226, %v356, %v697
      %v1670 = vsel %vm226, %v357, %v699
      %v1671 = vsel %vm226, %v358, %v701
      %v1672 = vsel %vm226, %v359, %v703
      %v1673 = vsel %vm226, %v360, %v705
      %v1674 = vsel %vm226, %v361, %v707
      %v1675 = vsel %vm226, %v362, %v709
      %v1676 = vsel %vm226, %v363, %v711
      %v1677 = vsel %vm226, %v364, %v713
      %v1678 = vsel %vm226, %v365, %v715
      %v1679 = vsel %vm226, %v366, %v717
      %v1680 = vsel %vm226, %v367, %v719
      %v1681 = vsel %vm226, %v368, %v721
      %vm1682 = vcmask 64512
      %v1683 = vsel %vm1682, %v1650, %v787
      %v1684 = vsel %vm1682, %v1651, %v789
      %v1685 = vsel %vm1682, %v1652, %v791
      %v1686 = vsel %vm1682, %v1653, %v793
      %v1687 = vsel %vm1682, %v1654, %v795
      %v1688 = vsel %vm1682, %v1655, %v797
      %v1689 = vsel %vm1682, %v1656, %v799
      %v1690 = vsel %vm1682, %v1657, %v801
      %v1691 = vsel %vm1682, %v1658, %v803
      %v1692 = vsel %vm1682, %v1659, %v805
      %v1693 = vsel %vm1682, %v1660, %v807
      %v1694 = vsel %vm1682, %v1661, %v809
      %v1695 = vsel %vm1682, %v1662, %v811
      %v1696 = vsel %vm1682, %v1663, %v813
      %v1697 = vsel %vm1682, %v1664, %v815
      %v1698 = vsel %vm1682, %v1665, %v817
      %v1699 = vsel %vm1682, %v1666, %v819
      %v1700 = vsel %vm1682, %v1667, %v821
      %v1701 = vsel %vm1682, %v1668, %v823
      %v1702 = vsel %vm1682, %v1669, %v825
      %v1703 = vsel %vm1682, %v1670, %v827
      %v1704 = vsel %vm1682, %v1671, %v829
      %v1705 = vsel %vm1682, %v1672, %v831
      %v1706 = vsel %vm1682, %v1673, %v833
      %v1707 = vsel %vm1682, %v1674, %v835
      %v1708 = vsel %vm1682, %v1675, %v837
      %v1709 = vsel %vm1682, %v1676, %v839
      %v1710 = vsel %vm1682, %v1677, %v841
      %v1711 = vsel %vm1682, %v1678, %v843
      %v1712 = vsel %vm1682, %v1679, %v845
      %v1713 = vsel %vm1682, %v1680, %v847
      %v1714 = vsel %vm1682, %v1681, %v849
      %vm1715 = vcmask 97280
      %v1716 = vsel %vm1715, %v1683, %v915
      %v1717 = vsel %vm1715, %v1684, %v917
      %v1718 = vsel %vm1715, %v1685, %v919
      %v1719 = vsel %vm1715, %v1686, %v921
      %v1720 = vsel %vm1715, %v1687, %v923
      %v1721 = vsel %vm1715, %v1688, %v925
      %v1722 = vsel %vm1715, %v1689, %v927
      %v1723 = vsel %vm1715, %v1690, %v929
      %v1724 = vsel %vm1715, %v1691, %v931
      %v1725 = vsel %vm1715, %v1692, %v933
      %v1726 = vsel %vm1715, %v1693, %v935
      %v1727 = vsel %vm1715, %v1694, %v937
      %v1728 = vsel %vm1715, %v1695, %v939
      %v1729 = vsel %vm1715, %v1696, %v941
      %v1730 = vsel %vm1715, %v1697, %v943
      %v1731 = vsel %vm1715, %v1698, %v945
      %v1732 = vsel %vm1715, %v1699, %v947
      %v1733 = vsel %vm1715, %v1700, %v949
      %v1734 = vsel %vm1715, %v1701, %v951
      %v1735 = vsel %vm1715, %v1702, %v953
      %v1736 = vsel %vm1715, %v1703, %v955
      %v1737 = vsel %vm1715, %v1704, %v957
      %v1738 = vsel %vm1715, %v1705, %v959
      %v1739 = vsel %vm1715, %v1706, %v961
      %v1740 = vsel %vm1715, %v1707, %v963
      %v1741 = vsel %vm1715, %v1708, %v965
      %v1742 = vsel %vm1715, %v1709, %v967
      %v1743 = vsel %vm1715, %v1710, %v969
      %v1744 = vsel %vm1715, %v1711, %v971
      %v1745 = vsel %vm1715, %v1712, %v973
      %v1746 = vsel %vm1715, %v1713, %v975
      %v1747 = vsel %vm1715, %v1714, %v977
      %vm1748 = vcmask 130048
      %v1749 = vsel %vm1748, %v1716, %v1043
      %v1750 = vsel %vm1748, %v1717, %v1045
      %v1751 = vsel %vm1748, %v1718, %v1047
      %v1752 = vsel %vm1748, %v1719, %v1049
      %v1753 = vsel %vm1748, %v1720, %v1051
      %v1754 = vsel %vm1748, %v1721, %v1053
      %v1755 = vsel %vm1748, %v1722, %v1055
      %v1756 = vsel %vm1748, %v1723, %v1057
      %v1757 = vsel %vm1748, %v1724, %v1059
      %v1758 = vsel %vm1748, %v1725, %v1061
      %v1759 = vsel %vm1748, %v1726, %v1063
      %v1760 = vsel %vm1748, %v1727, %v1065
      %v1761 = vsel %vm1748, %v1728, %v1067
      %v1762 = vsel %vm1748, %v1729, %v1069
      %v1763 = vsel %vm1748, %v1730, %v1071
      %v1764 = vsel %vm1748, %v1731, %v1073
      %v1765 = vsel %vm1748, %v1732, %v1075
      %v1766 = vsel %vm1748, %v1733, %v1077
      %v1767 = vsel %vm1748, %v1734, %v1079
      %v1768 = vsel %vm1748, %v1735, %v1081
      %v1769 = vsel %vm1748, %v1736, %v1083
      %v1770 = vsel %vm1748, %v1737, %v1085
      %v1771 = vsel %vm1748, %v1738, %v1087
      %v1772 = vsel %vm1748, %v1739, %v1089
      %v1773 = vsel %vm1748, %v1740, %v1091
      %v1774 = vsel %vm1748, %v1741, %v1093
      %v1775 = vsel %vm1748, %v1742, %v1095
      %v1776 = vsel %vm1748, %v1743, %v1097
      %v1777 = vsel %vm1748, %v1744, %v1099
      %v1778 = vsel %vm1748, %v1745, %v1101
      %v1779 = vsel %vm1748, %v1746, %v1103
      %v1780 = vsel %vm1748, %v1747, %v1105
      %vm1781 = vcmask 162816
      %v1782 = vsel %vm1781, %v1749, %v1171
      %v1783 = vsel %vm1781, %v1750, %v1173
      %v1784 = vsel %vm1781, %v1751, %v1175
      %v1785 = vsel %vm1781, %v1752, %v1177
      %v1786 = vsel %vm1781, %v1753, %v1179
      %v1787 = vsel %vm1781, %v1754, %v1181
      %v1788 = vsel %vm1781, %v1755, %v1183
      %v1789 = vsel %vm1781, %v1756, %v1185
      %v1790 = vsel %vm1781, %v1757, %v1187
      %v1791 = vsel %vm1781, %v1758, %v1189
      %v1792 = vsel %vm1781, %v1759, %v1191
      %v1793 = vsel %vm1781, %v1760, %v1193
      %v1794 = vsel %vm1781, %v1761, %v1195
      %v1795 = vsel %vm1781, %v1762, %v1197
      %v1796 = vsel %vm1781, %v1763, %v1199
      %v1797 = vsel %vm1781, %v1764, %v1201
      %v1798 = vsel %vm1781, %v1765, %v1203
      %v1799 = vsel %vm1781, %v1766, %v1205
      %v1800 = vsel %vm1781, %v1767, %v1207
      %v1801 = vsel %vm1781, %v1768, %v1209
      %v1802 = vsel %vm1781, %v1769, %v1211
      %v1803 = vsel %vm1781, %v1770, %v1213
      %v1804 = vsel %vm1781, %v1771, %v1215
      %v1805 = vsel %vm1781, %v1772, %v1217
      %v1806 = vsel %vm1781, %v1773, %v1219
      %v1807 = vsel %vm1781, %v1774, %v1221
      %v1808 = vsel %vm1781, %v1775, %v1223
      %v1809 = vsel %vm1781, %v1776, %v1225
      %v1810 = vsel %vm1781, %v1777, %v1227
      %v1811 = vsel %vm1781, %v1778, %v1229
      %v1812 = vsel %vm1781, %v1779, %v1231
      %v1813 = vsel %vm1781, %v1780, %v1233
      %vm1814 = vcmask 195584
      %v1815 = vsel %vm1814, %v1782, %v1299
      %v1816 = vsel %vm1814, %v1783, %v1301
      %v1817 = vsel %vm1814, %v1784, %v1303
      %v1818 = vsel %vm1814, %v1785, %v1305
      %v1819 = vsel %vm1814, %v1786, %v1307
      %v1820 = vsel %vm1814, %v1787, %v1309
      %v1821 = vsel %vm1814, %v1788, %v1311
      %v1822 = vsel %vm1814, %v1789, %v1313
      %v1823 = vsel %vm1814, %v1790, %v1315
      %v1824 = vsel %vm1814, %v1791, %v1317
      %v1825 = vsel %vm1814, %v1792, %v1319
      %v1826 = vsel %vm1814, %v1793, %v1321
      %v1827 = vsel %vm1814, %v1794, %v1323
      %v1828 = vsel %vm1814, %v1795, %v1325
      %v1829 = vsel %vm1814, %v1796, %v1327
      %v1830 = vsel %vm1814, %v1797, %v1329
      %v1831 = vsel %vm1814, %v1798, %v1331
      %v1832 = vsel %vm1814, %v1799, %v1333
      %v1833 = vsel %vm1814, %v1800, %v1335
      %v1834 = vsel %vm1814, %v1801, %v1337
      %v1835 = vsel %vm1814, %v1802, %v1339
      %v1836 = vsel %vm1814, %v1803, %v1341
      %v1837 = vsel %vm1814, %v1804, %v1343
      %v1838 = vsel %vm1814, %v1805, %v1345
      %v1839 = vsel %vm1814, %v1806, %v1347
      %v1840 = vsel %vm1814, %v1807, %v1349
      %v1841 = vsel %vm1814, %v1808, %v1351
      %v1842 = vsel %vm1814, %v1809, %v1353
      %v1843 = vsel %vm1814, %v1810, %v1355
      %v1844 = vsel %vm1814, %v1811, %v1357
      %v1845 = vsel %vm1814, %v1812, %v1359
      %v1846 = vsel %vm1814, %v1813, %v1361
      %vm1847 = vcmask 228352
      %v1848 = vsel %vm1847, %v1815, %v1427
      %v1849 = vsel %vm1847, %v1816, %v1429
      %v1850 = vsel %vm1847, %v1817, %v1431
      %v1851 = vsel %vm1847, %v1818, %v1433
      %v1852 = vsel %vm1847, %v1819, %v1435
      %v1853 = vsel %vm1847, %v1820, %v1437
      %v1854 = vsel %vm1847, %v1821, %v1439
      %v1855 = vsel %vm1847, %v1822, %v1441
      %v1856 = vsel %vm1847, %v1823, %v1443
      %v1857 = vsel %vm1847, %v1824, %v1445
      %v1858 = vsel %vm1847, %v1825, %v1447
      %v1859 = vsel %vm1847, %v1826, %v1449
      %v1860 = vsel %vm1847, %v1827, %v1451
      %v1861 = vsel %vm1847, %v1828, %v1453
      %v1862 = vsel %vm1847, %v1829, %v1455
      %v1863 = vsel %vm1847, %v1830, %v1457
      %v1864 = vsel %vm1847, %v1831, %v1459
      %v1865 = vsel %vm1847, %v1832, %v1461
      %v1866 = vsel %vm1847, %v1833, %v1463
      %v1867 = vsel %vm1847, %v1834, %v1465
      %v1868 = vsel %vm1847, %v1835, %v1467
      %v1869 = vsel %vm1847, %v1836, %v1469
      %v1870 = vsel %vm1847, %v1837, %v1471
      %v1871 = vsel %vm1847, %v1838, %v1473
      %v1872 = vsel %vm1847, %v1839, %v1475
      %v1873 = vsel %vm1847, %v1840, %v1477
      %v1874 = vsel %vm1847, %v1841, %v1479
      %v1875 = vsel %vm1847, %v1842, %v1481
      %v1876 = vsel %vm1847, %v1843, %v1483
      %v1877 = vsel %vm1847, %v1844, %v1485
      %v1878 = vsel %vm1847, %v1845, %v1487
      %v1879 = vsel %vm1847, %v1846, %v1489
      %vm1880 = vcmask 261120
      %v1881 = vsel %vm1880, %v1848, %v1555
      %v1882 = vsel %vm1880, %v1849, %v1557
      %v1883 = vsel %vm1880, %v1850, %v1559
      %v1884 = vsel %vm1880, %v1851, %v1561
      %v1885 = vsel %vm1880, %v1852, %v1563
      %v1886 = vsel %vm1880, %v1853, %v1565
      %v1887 = vsel %vm1880, %v1854, %v1567
      %v1888 = vsel %vm1880, %v1855, %v1569
      %v1889 = vsel %vm1880, %v1856, %v1571
      %v1890 = vsel %vm1880, %v1857, %v1573
      %v1891 = vsel %vm1880, %v1858, %v1575
      %v1892 = vsel %vm1880, %v1859, %v1577
      %v1893 = vsel %vm1880, %v1860, %v1579
      %v1894 = vsel %vm1880, %v1861, %v1581
      %v1895 = vsel %vm1880, %v1862, %v1583
      %v1896 = vsel %vm1880, %v1863, %v1585
      %v1897 = vsel %vm1880, %v1864, %v1587
      %v1898 = vsel %vm1880, %v1865, %v1589
      %v1899 = vsel %vm1880, %v1866, %v1591
      %v1900 = vsel %vm1880, %v1867, %v1593
      %v1901 = vsel %vm1880, %v1868, %v1595
      %v1902 = vsel %vm1880, %v1869, %v1597
      %v1903 = vsel %vm1880, %v1870, %v1599
      %v1904 = vsel %vm1880, %v1871, %v1601
      %v1905 = vsel %vm1880, %v1872, %v1603
      %v1906 = vsel %vm1880, %v1873, %v1605
      %v1907 = vsel %vm1880, %v1874, %v1607
      %v1908 = vsel %vm1880, %v1875, %v1609
      %v1909 = vsel %vm1880, %v1876, %v1611
      %v1910 = vsel %vm1880, %v1877, %v1613
      %v1911 = vsel %vm1880, %v1878, %v1615
      %v1912 = vsel %vm1880, %v1879, %v1617
      %v1913 = vpack.c.bf16 %v1882, %v1881
      %v1914 = vpack.c.bf16 %v1884, %v1883
      %v1915 = vpack.c.bf16 %v1886, %v1885
      %v1916 = vpack.c.bf16 %v1888, %v1887
      %v1917 = vpack.c.bf16 %v1890, %v1889
      %v1918 = vpack.c.bf16 %v1892, %v1891
      %v1919 = vpack.c.bf16 %v1894, %v1893
      %v1920 = vpack.c.bf16 %v1896, %v1895
      %v1921 = vpack.c.bf16 %v1898, %v1897
      %v1922 = vpack.c.bf16 %v1900, %v1899
      %v1923 = vpack.c.bf16 %v1902, %v1901
      %v1924 = vpack.c.bf16 %v1904, %v1903
      %v1925 = vpack.c.bf16 %v1906, %v1905
      %v1926 = vpack.c.bf16 %v1908, %v1907
      %v1927 = vpack.c.bf16 %v1910, %v1909
      %v1928 = vpack.c.bf16 %v1912, %v1911
      %v1929 = vld [vmem:[%s1] sm:$0xf]
      %v1930 = vld [vmem:[%s1 + $0x4] sm:$0xf]
      %v1931 = vld [vmem:[%s1 + $0x8] sm:$0xf]
      %v1932 = vld [vmem:[%s1 + $0xc] sm:$0xf]
      %v1933 = vld [vmem:[%s1 + $0x10] sm:$0x3]
      %v1934 = vld [vmem:[%s2] sm:$0x1]
      %v1936 = vlaneseq
      %v1937 = vshrl.u32 %v1936, 7
      %v1938 = vsub.s32 0, %v1937
      %v1939 = vrot.slane %v1934, %v1938
      %v1946 = vunpack.c.l.b16 %v1929
      %v1947 = vunpack.c.l.b16 %v1930
      %v1948 = vunpack.c.l.b16 %v1931
      %v1949 = vunpack.c.l.b16 %v1932
      %v1950 = vunpack.c.l.b16 %v1933
      %v1951 = vpack.c.b16 %v1947, %v1946
      %v1952 = vpack.c.b16 %v1949, %v1948
      %v1953 = vpack.c.b16 %v1950, %v1950
      %vm1956 = vcmask 293888
      %v1958 = vsel %vm1956, %v1913, 0
      %v1961 = vsel %vm1956, %v1914, 0
      %v1964 = vsel %vm1956, %v1915, 0
      %v1967 = vsel %vm1956, %v1916, 0
      %v1970 = vsel %vm1956, %v1917, 0
      %v1973 = vsel %vm1956, %v1918, 0
      %v1976 = vsel %vm1956, %v1919, 0
      %v1979 = vsel %vm1956, %v1920, 0
      %v1982 = vsel %vm1956, %v1921, 0
      %v1985 = vsel %vm1956, %v1922, 0
      %v1988 = vsel %vm1956, %v1923, 0
      %v1991 = vsel %vm1956, %v1924, 0
      %v1994 = vsel %vm1956, %v1925, 0
      %v1997 = vsel %vm1956, %v1926, 0
      %v2000 = vsel %vm1956, %v1927, 0
      %v2003 = vsel %vm1956, %v1928, 0
      %vm2005 = vcmask 1041408
      %v2007 = vsel %vm2005, %v1953, 0
      %2009 = vmatprep.subr.bf16.mxu0 0
      %2010 = vmatpush1.bf16.msra.mxu0 %v1951
      %2011 = vmatprep.subr.bf16.mxu0 0
      %2012 = vmatpush1.bf16.msra.mxu0 %v1952
      %2013 = vmatprep.subr.bf16.mxu0 0
      %2014 = vmatpush1.bf16.msra.mxu0 %v2007
      %2015 = vmatprep.subr.bf16.mxu0 0
      %2016 = vmatpush1.bf16.msra.mxu0 0
      %2017 = vmatprep.subr.bf16.mxu0 0
      %2018 = vmatpush1.bf16.msra.mxu0 0
      %2019 = vmatprep.subr.bf16.mxu0 0
      %2020 = vmatpush1.bf16.msra.mxu0 0
      %2021 = vmatprep.subr.bf16.mxu0 0
      %2022 = vmatpush1.bf16.msra.mxu0 0
      %2023 = vmatprep.subr.bf16.mxu0 0
      %2024 = vmatpush1.bf16.msra.mxu0 0
      %2025 = vmatprep.subr.bf16.mxu0 0
      %2026 = vmatpush1.bf16.msra.mxu0 0
      %2027 = vmatprep.subr.bf16.mxu0 0
      %2028 = vmatpush1.bf16.msra.mxu0 0
      %2029 = vmatprep.subr.bf16.mxu0 0
      %2030 = vmatpush1.bf16.msra.mxu0 0
      %2031 = vmatprep.subr.bf16.mxu0 0
      %2032 = vmatpush1.bf16.msra.mxu0 0
      %2033 = vmatprep.subr.bf16.mxu0 0
      %2034 = vmatpush1.bf16.msra.mxu0 0
      %2035 = vmatprep.subr.bf16.mxu0 0
      %2036 = vmatpush1.bf16.msra.mxu0 0
      %2037 = vmatprep.subr.bf16.mxu0 0
      %2038 = vmatpush1.bf16.msra.mxu0 0
      %2039 = vmatprep.subr.bf16.mxu0 0
      %2040 = vmatpush1.bf16.msra.mxu0 0
      %2041 = vmatprep.mubr.bf16.mxu0 0
      %2042 = vmatmul.mubr.bf16.gmra.mrb[0].mxu0 %v1958
      %v2043 = vpop.f32.mrb[0].mxu0
      %v2044 = vadd.f32 %v1939, %v2043
      %v2045 = vpop.f32.mrb[0].mxu0
      %v2046 = vpop.f32.mrb[0].mxu0
      %v2047 = vadd.f32 %v1939, %v2046
      %v2048 = vpop.f32.mrb[0].mxu0
      %2049 = vmatprep.mubr.bf16.mxu0 0
      %2050 = vmatmul.mubr.bf16.gmra.mrb[0].mxu0 %v1961
      %v2051 = vpop.f32.mrb[0].mxu0
      %v2052 = vadd.f32 %v1939, %v2051
      %v2053 = vpop.f32.mrb[0].mxu0
      %v2054 = vpop.f32.mrb[0].mxu0
      %v2055 = vadd.f32 %v1939, %v2054
      %v2056 = vpop.f32.mrb[0].mxu0
      %2057 = vmatprep.mubr.bf16.mxu0 0
      %2058 = vmatmul.mubr.bf16.gmra.mrb[0].mxu0 %v1964
      %v2059 = vpop.f32.mrb[0].mxu0
      %v2060 = vadd.f32 %v1939, %v2059
      %v2061 = vpop.f32.mrb[0].mxu0
      %v2062 = vpop.f32.mrb[0].mxu0
      %v2063 = vadd.f32 %v1939, %v2062
      %v2064 = vpop.f32.mrb[0].mxu0
      %2065 = vmatprep.mubr.bf16.mxu0 0
      %2066 = vmatmul.mubr.bf16.gmra.mrb[0].mxu0 %v1967
      %v2067 = vpop.f32.mrb[0].mxu0
      %v2068 = vadd.f32 %v1939, %v2067
      %v2069 = vpop.f32.mrb[0].mxu0
      %v2070 = vpop.f32.mrb[0].mxu0
      %v2071 = vadd.f32 %v1939, %v2070
      %v2072 = vpop.f32.mrb[0].mxu0
      %2073 = vmatprep.mubr.bf16.mxu0 0
      %2074 = vmatmul.mubr.bf16.gmra.mrb[0].mxu0 %v1970
      %v2075 = vpop.f32.mrb[0].mxu0
      %v2076 = vadd.f32 %v1939, %v2075
      %v2077 = vpop.f32.mrb[0].mxu0
      %v2078 = vpop.f32.mrb[0].mxu0
      %v2079 = vadd.f32 %v1939, %v2078
      %v2080 = vpop.f32.mrb[0].mxu0
      %2081 = vmatprep.mubr.bf16.mxu0 0
      %2082 = vmatmul.mubr.bf16.gmra.mrb[0].mxu0 %v1973
      %v2083 = vpop.f32.mrb[0].mxu0
      %v2084 = vadd.f32 %v1939, %v2083
      %v2085 = vpop.f32.mrb[0].mxu0
      %v2086 = vpop.f32.mrb[0].mxu0
      %v2087 = vadd.f32 %v1939, %v2086
      %v2088 = vpop.f32.mrb[0].mxu0
      %2089 = vmatprep.mubr.bf16.mxu0 0
      %2090 = vmatmul.mubr.bf16.gmra.mrb[0].mxu0 %v1976
      %v2091 = vpop.f32.mrb[0].mxu0
      %v2092 = vadd.f32 %v1939, %v2091
      %v2093 = vpop.f32.mrb[0].mxu0
      %v2094 = vpop.f32.mrb[0].mxu0
      %v2095 = vadd.f32 %v1939, %v2094
      %v2096 = vpop.f32.mrb[0].mxu0
      %2097 = vmatprep.mubr.bf16.mxu0 0
      %2098 = vmatmul.mubr.bf16.gmra.mrb[0].mxu0 %v1979
      %v2099 = vpop.f32.mrb[0].mxu0
      %v2100 = vadd.f32 %v1939, %v2099
      %v2101 = vpop.f32.mrb[0].mxu0
      %v2102 = vpop.f32.mrb[0].mxu0
      %v2103 = vadd.f32 %v1939, %v2102
      %v2104 = vpop.f32.mrb[0].mxu0
      %2105 = vmatprep.mubr.bf16.mxu0 0
      %2106 = vmatmul.mubr.bf16.gmra.mrb[0].mxu0 %v1982
      %v2107 = vpop.f32.mrb[0].mxu0
      %v2108 = vadd.f32 %v1939, %v2107
      %v2109 = vpop.f32.mrb[0].mxu0
      %v2110 = vpop.f32.mrb[0].mxu0
      %v2111 = vadd.f32 %v1939, %v2110
      %v2112 = vpop.f32.mrb[0].mxu0
      %2113 = vmatprep.mubr.bf16.mxu0 0
      %2114 = vmatmul.mubr.bf16.gmra.mrb[0].mxu0 %v1985
      %v2115 = vpop.f32.mrb[0].mxu0
      %v2116 = vadd.f32 %v1939, %v2115
      %v2117 = vpop.f32.mrb[0].mxu0
      %v2118 = vpop.f32.mrb[0].mxu0
      %v2119 = vadd.f32 %v1939, %v2118
      %v2120 = vpop.f32.mrb[0].mxu0
      %2121 = vmatprep.mubr.bf16.mxu0 0
      %2122 = vmatmul.mubr.bf16.gmra.mrb[0].mxu0 %v1988
      %v2123 = vpop.f32.mrb[0].mxu0
      %v2124 = vadd.f32 %v1939, %v2123
      %v2125 = vpop.f32.mrb[0].mxu0
      %v2126 = vpop.f32.mrb[0].mxu0
      %v2127 = vadd.f32 %v1939, %v2126
      %v2128 = vpop.f32.mrb[0].mxu0
      %2129 = vmatprep.mubr.bf16.mxu0 0
      %2130 = vmatmul.mubr.bf16.gmra.mrb[0].mxu0 %v1991
      %v2131 = vpop.f32.mrb[0].mxu0
      %v2132 = vadd.f32 %v1939, %v2131
      %v2133 = vpop.f32.mrb[0].mxu0
      %v2134 = vpop.f32.mrb[0].mxu0
      %v2135 = vadd.f32 %v1939, %v2134
      %v2136 = vpop.f32.mrb[0].mxu0
      %2137 = vmatprep.mubr.bf16.mxu0 0
      %2138 = vmatmul.mubr.bf16.gmra.mrb[0].mxu0 %v1994
      %v2139 = vpop.f32.mrb[0].mxu0
      %v2140 = vadd.f32 %v1939, %v2139
      %v2141 = vpop.f32.mrb[0].mxu0
      %v2142 = vpop.f32.mrb[0].mxu0
      %v2143 = vadd.f32 %v1939, %v2142
      %v2144 = vpop.f32.mrb[0].mxu0
      %2145 = vmatprep.mubr.bf16.mxu0 0
      %2146 = vmatmul.mubr.bf16.gmra.mrb[0].mxu0 %v1997
      %v2147 = vpop.f32.mrb[0].mxu0
      %v2148 = vadd.f32 %v1939, %v2147
      %v2149 = vpop.f32.mrb[0].mxu0
      %v2150 = vpop.f32.mrb[0].mxu0
      %v2151 = vadd.f32 %v1939, %v2150
      %v2152 = vpop.f32.mrb[0].mxu0
      %2153 = vmatprep.mubr.bf16.mxu0 0
      %2154 = vmatmul.mubr.bf16.gmra.mrb[0].mxu0 %v2000
      %v2155 = vpop.f32.mrb[0].mxu0
      %v2156 = vadd.f32 %v1939, %v2155
      %v2157 = vpop.f32.mrb[0].mxu0
      %v2158 = vpop.f32.mrb[0].mxu0
      %v2159 = vadd.f32 %v1939, %v2158
      %v2160 = vpop.f32.mrb[0].mxu0
      %2161 = vmatprep.mubr.bf16.mxu0 0
      %2162 = vmatmul.mubr.bf16.gmra.mrb[0].mxu0 %v2003
      %v2163 = vpop.f32.mrb[0].mxu0
      %v2164 = vadd.f32 %v1939, %v2163
      %v2165 = vpop.f32.mrb[0].mxu0
      %v2166 = vpop.f32.mrb[0].mxu0
      %v2167 = vadd.f32 %v1939, %v2166
      %v2168 = vpop.f32.mrb[0].mxu0
      %2169 = vdwg.mxu0
      %vm2170 = vcmp.ge.f32.partialorder %v2044, 0.0
      %vm2171 = vcmp.ge.f32.partialorder %v2047, 0.0
      %vm2172 = vcmp.ge.f32.partialorder %v2052, 0.0
      %vm2173 = vcmp.ge.f32.partialorder %v2055, 0.0
      %vm2174 = vcmp.ge.f32.partialorder %v2060, 0.0
      %vm2175 = vcmp.ge.f32.partialorder %v2063, 0.0
      %vm2176 = vcmp.ge.f32.partialorder %v2068, 0.0
      %vm2177 = vcmp.ge.f32.partialorder %v2071, 0.0
      %vm2178 = vcmp.ge.f32.partialorder %v2076, 0.0
      %vm2179 = vcmp.ge.f32.partialorder %v2079, 0.0
      %vm2180 = vcmp.ge.f32.partialorder %v2084, 0.0
      %vm2181 = vcmp.ge.f32.partialorder %v2087, 0.0
      %vm2182 = vcmp.ge.f32.partialorder %v2092, 0.0
      %vm2183 = vcmp.ge.f32.partialorder %v2095, 0.0
      %vm2184 = vcmp.ge.f32.partialorder %v2100, 0.0
      %vm2185 = vcmp.ge.f32.partialorder %v2103, 0.0
      %vm2186 = vcmp.ge.f32.partialorder %v2108, 0.0
      %vm2187 = vcmp.ge.f32.partialorder %v2111, 0.0
      %vm2188 = vcmp.ge.f32.partialorder %v2116, 0.0
      %vm2189 = vcmp.ge.f32.partialorder %v2119, 0.0
      %vm2190 = vcmp.ge.f32.partialorder %v2124, 0.0
      %vm2191 = vcmp.ge.f32.partialorder %v2127, 0.0
      %vm2192 = vcmp.ge.f32.partialorder %v2132, 0.0
      %vm2193 = vcmp.ge.f32.partialorder %v2135, 0.0
      %vm2194 = vcmp.ge.f32.partialorder %v2140, 0.0
      %vm2195 = vcmp.ge.f32.partialorder %v2143, 0.0
      %vm2196 = vcmp.ge.f32.partialorder %v2148, 0.0
      %vm2197 = vcmp.ge.f32.partialorder %v2151, 0.0
      %vm2198 = vcmp.ge.f32.partialorder %v2156, 0.0
      %vm2199 = vcmp.ge.f32.partialorder %v2159, 0.0
      %vm2200 = vcmp.ge.f32.partialorder %v2164, 0.0
      %vm2201 = vcmp.ge.f32.partialorder %v2167, 0.0
      %v2202 = vmul.f32 %v2044, 0.01
      %v2203 = vmul.f32 %v2047, 0.01
      %v2204 = vmul.f32 %v2052, 0.01
      %v2205 = vmul.f32 %v2055, 0.01
      %v2206 = vmul.f32 %v2060, 0.01
      %v2207 = vmul.f32 %v2063, 0.01
      %v2208 = vmul.f32 %v2068, 0.01
      %v2209 = vmul.f32 %v2071, 0.01
      %v2210 = vmul.f32 %v2076, 0.01
      %v2211 = vmul.f32 %v2079, 0.01
      %v2212 = vmul.f32 %v2084, 0.01
      %v2213 = vmul.f32 %v2087, 0.01
      %v2214 = vmul.f32 %v2092, 0.01
      %v2215 = vmul.f32 %v2095, 0.01
      %v2216 = vmul.f32 %v2100, 0.01
      %v2217 = vmul.f32 %v2103, 0.01
      %v2218 = vmul.f32 %v2108, 0.01
      %v2219 = vmul.f32 %v2111, 0.01
      %v2220 = vmul.f32 %v2116, 0.01
      %v2221 = vmul.f32 %v2119, 0.01
      %v2222 = vmul.f32 %v2124, 0.01
      %v2223 = vmul.f32 %v2127, 0.01
      %v2224 = vmul.f32 %v2132, 0.01
      %v2225 = vmul.f32 %v2135, 0.01
      %v2226 = vmul.f32 %v2140, 0.01
      %v2227 = vmul.f32 %v2143, 0.01
      %v2228 = vmul.f32 %v2148, 0.01
      %v2229 = vmul.f32 %v2151, 0.01
      %v2230 = vmul.f32 %v2156, 0.01
      %v2231 = vmul.f32 %v2159, 0.01
      %v2232 = vmul.f32 %v2164, 0.01
      %v2233 = vmul.f32 %v2167, 0.01
      %v2234 = vsel %vm2170, %v2044, %v2202
      %v2235 = vsel %vm2171, %v2047, %v2203
      %v2236 = vsel %vm2172, %v2052, %v2204
      %v2237 = vsel %vm2173, %v2055, %v2205
      %v2238 = vsel %vm2174, %v2060, %v2206
      %v2239 = vsel %vm2175, %v2063, %v2207
      %v2240 = vsel %vm2176, %v2068, %v2208
      %v2241 = vsel %vm2177, %v2071, %v2209
      %v2242 = vsel %vm2178, %v2076, %v2210
      %v2243 = vsel %vm2179, %v2079, %v2211
      %v2244 = vsel %vm2180, %v2084, %v2212
      %v2245 = vsel %vm2181, %v2087, %v2213
      %v2246 = vsel %vm2182, %v2092, %v2214
      %v2247 = vsel %vm2183, %v2095, %v2215
      %v2248 = vsel %vm2184, %v2100, %v2216
      %v2249 = vsel %vm2185, %v2103, %v2217
      %v2250 = vsel %vm2186, %v2108, %v2218
      %v2251 = vsel %vm2187, %v2111, %v2219
      %v2252 = vsel %vm2188, %v2116, %v2220
      %v2253 = vsel %vm2189, %v2119, %v2221
      %v2254 = vsel %vm2190, %v2124, %v2222
      %v2255 = vsel %vm2191, %v2127, %v2223
      %v2256 = vsel %vm2192, %v2132, %v2224
      %v2257 = vsel %vm2193, %v2135, %v2225
      %v2258 = vsel %vm2194, %v2140, %v2226
      %v2259 = vsel %vm2195, %v2143, %v2227
      %v2260 = vsel %vm2196, %v2148, %v2228
      %v2261 = vsel %vm2197, %v2151, %v2229
      %v2262 = vsel %vm2198, %v2156, %v2230
      %v2263 = vsel %vm2199, %v2159, %v2231
      %v2264 = vsel %vm2200, %v2164, %v2232
      %v2265 = vsel %vm2201, %v2167, %v2233
      %2266 = vst.msk [vmem:[%s304 + $0x1] sm:$0xff] %vm226, %v2234
      %2267 = vst.msk [vmem:[%s304 + $0x9] sm:$0xff] %vm226, %v2235
      %2268 = vst.msk [vmem:[%s304 + $0x19] sm:$0xff] %vm226, %v2236
      %2269 = vst.msk [vmem:[%s304 + $0x21] sm:$0xff] %vm226, %v2237
      %2270 = vst.msk [vmem:[%s304 + $0x31] sm:$0xff] %vm226, %v2238
      %2271 = vst.msk [vmem:[%s304 + $0x39] sm:$0xff] %vm226, %v2239
      %2272 = vst.msk [vmem:[%s304 + $0x49] sm:$0xff] %vm226, %v2240
      %2273 = vst.msk [vmem:[%s304 + $0x51] sm:$0xff] %vm226, %v2241
      %2274 = vst.msk [vmem:[%s304 + $0x61] sm:$0xff] %vm226, %v2242
      %2275 = vst.msk [vmem:[%s304 + $0x69] sm:$0xff] %vm226, %v2243
      %2276 = vst.msk [vmem:[%s304 + $0x79] sm:$0xff] %vm226, %v2244
      %2277 = vst.msk [vmem:[%s304 + $0x81] sm:$0xff] %vm226, %v2245
      %2278 = vst.msk [vmem:[%s304 + $0x91] sm:$0xff] %vm226, %v2246
      %2279 = vst.msk [vmem:[%s304 + $0x99] sm:$0xff] %vm226, %v2247
      %2280 = vst.msk [vmem:[%s304 + $0xa9] sm:$0xff] %vm226, %v2248
      %2281 = vst.msk [vmem:[%s304 + $0xb1] sm:$0xff] %vm226, %v2249
      %2282 = vst.msk [vmem:[%s304 + $0xc1] sm:$0xff] %vm226, %v2250
      %2283 = vst.msk [vmem:[%s304 + $0xc9] sm:$0xff] %vm226, %v2251
      %2284 = vst.msk [vmem:[%s304 + $0xd9] sm:$0xff] %vm226, %v2252
      %2285 = vst.msk [vmem:[%s304 + $0xe1] sm:$0xff] %vm226, %v2253
      %2286 = vst.msk [vmem:[%s304 + $0xf1] sm:$0xff] %vm226, %v2254
      %2287 = vst.msk [vmem:[%s304 + $0xf9] sm:$0xff] %vm226, %v2255
      %2288 = vst.msk [vmem:[%s304 + $0x109] sm:$0xff] %vm226, %v2256
      %2289 = vst.msk [vmem:[%s304 + $0x111] sm:$0xff] %vm226, %v2257
      %2290 = vst.msk [vmem:[%s304 + $0x121] sm:$0xff] %vm226, %v2258
      %2291 = vst.msk [vmem:[%s304 + $0x129] sm:$0xff] %vm226, %v2259
      %2292 = vst.msk [vmem:[%s304 + $0x139] sm:$0xff] %vm226, %v2260
      %2293 = vst.msk [vmem:[%s304 + $0x141] sm:$0xff] %vm226, %v2261
      %2294 = vst.msk [vmem:[%s304 + $0x151] sm:$0xff] %vm226, %v2262
      %2295 = vst.msk [vmem:[%s304 + $0x159] sm:$0xff] %vm226, %v2263
      %2296 = vst.msk [vmem:[%s304 + $0x169] sm:$0xff] %vm226, %v2264
      %2297 = vst.msk [vmem:[%s304 + $0x171] sm:$0xff] %vm226, %v2265
      %v2298 = vld [vmem:[#allocation2] sm:$0xff]
      %v2299 = vld [vmem:[#allocation2 + $0x8] sm:$0xff]
      %v2300 = vld [vmem:[#allocation2 + $0x18] sm:$0xff]
      %v2301 = vld [vmem:[#allocation2 + $0x20] sm:$0xff]
      %v2302 = vld [vmem:[#allocation2 + $0x30] sm:$0xff]
      %v2303 = vld [vmem:[#allocation2 + $0x38] sm:$0xff]
      %v2304 = vld [vmem:[#allocation2 + $0x48] sm:$0xff]
      %v2305 = vld [vmem:[#allocation2 + $0x50] sm:$0xff]
      %v2306 = vld [vmem:[#allocation2 + $0x60] sm:$0xff]
      %v2307 = vld [vmem:[#allocation2 + $0x68] sm:$0xff]
      %v2308 = vld [vmem:[#allocation2 + $0x78] sm:$0xff]
      %v2309 = vld [vmem:[#allocation2 + $0x80] sm:$0xff]
      %v2310 = vld [vmem:[#allocation2 + $0x90] sm:$0xff]
      %v2311 = vld [vmem:[#allocation2 + $0x98] sm:$0xff]
      %v2312 = vld [vmem:[#allocation2 + $0xa8] sm:$0xff]
      %v2313 = vld [vmem:[#allocation2 + $0xb0] sm:$0xff]
      %v2314 = vld [vmem:[#allocation2 + $0xc0] sm:$0xff]
      %v2315 = vld [vmem:[#allocation2 + $0xc8] sm:$0xff]
      %v2316 = vld [vmem:[#allocation2 + $0xd8] sm:$0xff]
      %v2317 = vld [vmem:[#allocation2 + $0xe0] sm:$0xff]
      %v2318 = vld [vmem:[#allocation2 + $0xf0] sm:$0xff]
      %v2319 = vld [vmem:[#allocation2 + $0xf8] sm:$0xff]
      %v2320 = vld [vmem:[#allocation2 + $0x108] sm:$0xff]
      %v2321 = vld [vmem:[#allocation2 + $0x110] sm:$0xff]
      %v2322 = vld [vmem:[#allocation2 + $0x120] sm:$0xff]
      %v2323 = vld [vmem:[#allocation2 + $0x128] sm:$0xff]
      %v2324 = vld [vmem:[#allocation2 + $0x138] sm:$0xff]
      %v2325 = vld [vmem:[#allocation2 + $0x140] sm:$0xff]
      %v2326 = vld [vmem:[#allocation2 + $0x150] sm:$0xff]
      %v2327 = vld [vmem:[#allocation2 + $0x158] sm:$0xff]
      %v2328 = vld [vmem:[#allocation2 + $0x168] sm:$0xff]
      %v2329 = vld [vmem:[#allocation2 + $0x170] sm:$0xff]
      %v2330 = vld [vmem:[#allocation2 + $0x1] sm:$0xff]
      %v2331 = vld [vmem:[#allocation2 + $0x9] sm:$0xff]
      %v2332 = vld [vmem:[#allocation2 + $0x19] sm:$0xff]
      %v2333 = vld [vmem:[#allocation2 + $0x21] sm:$0xff]
      %v2334 = vld [vmem:[#allocation2 + $0x31] sm:$0xff]
      %v2335 = vld [vmem:[#allocation2 + $0x39] sm:$0xff]
      %v2336 = vld [vmem:[#allocation2 + $0x49] sm:$0xff]
      %v2337 = vld [vmem:[#allocation2 + $0x51] sm:$0xff]
      %v2338 = vld [vmem:[#allocation2 + $0x61] sm:$0xff]
      %v2339 = vld [vmem:[#allocation2 + $0x69] sm:$0xff]
      %v2340 = vld [vmem:[#allocation2 + $0x79] sm:$0xff]
      %v2341 = vld [vmem:[#allocation2 + $0x81] sm:$0xff]
      %v2342 = vld [vmem:[#allocation2 + $0x91] sm:$0xff]
      %v2343 = vld [vmem:[#allocation2 + $0x99] sm:$0xff]
      %v2344 = vld [vmem:[#allocation2 + $0xa9] sm:$0xff]
      %v2345 = vld [vmem:[#allocation2 + $0xb1] sm:$0xff]
      %v2346 = vld [vmem:[#allocation2 + $0xc1] sm:$0xff]
      %v2347 = vld [vmem:[#allocation2 + $0xc9] sm:$0xff]
      %v2348 = vld [vmem:[#allocation2 + $0xd9] sm:$0xff]
      %v2349 = vld [vmem:[#allocation2 + $0xe1] sm:$0xff]
      %v2350 = vld [vmem:[#allocation2 + $0xf1] sm:$0xff]
      %v2351 = vld [vmem:[#allocation2 + $0xf9] sm:$0xff]
      %v2352 = vld [vmem:[#allocation2 + $0x109] sm:$0xff]
      %v2353 = vld [vmem:[#allocation2 + $0x111] sm:$0xff]
      %v2354 = vld [vmem:[#allocation2 + $0x121] sm:$0xff]
      %v2355 = vld [vmem:[#allocation2 + $0x129] sm:$0xff]
      %v2356 = vld [vmem:[#allocation2 + $0x139] sm:$0xff]
      %v2357 = vld [vmem:[#allocation2 + $0x141] sm:$0xff]
      %v2358 = vld [vmem:[#allocation2 + $0x151] sm:$0xff]
      %v2359 = vld [vmem:[#allocation2 + $0x159] sm:$0xff]
      %v2360 = vld [vmem:[#allocation2 + $0x169] sm:$0xff]
      %v2361 = vld [vmem:[#allocation2 + $0x171] sm:$0xff]
      %v2362 = vld [vmem:[#allocation2 + $0x2] sm:$0xff]
      %v2363 = vld [vmem:[#allocation2 + $0xa] sm:$0xff]
      %v2364 = vld [vmem:[#allocation2 + $0x1a] sm:$0xff]
      %v2365 = vld [vmem:[#allocation2 + $0x22] sm:$0xff]
      %v2366 = vld [vmem:[#allocation2 + $0x32] sm:$0xff]
      %v2367 = vld [vmem:[#allocation2 + $0x3a] sm:$0xff]
      %v2368 = vld [vmem:[#allocation2 + $0x4a] sm:$0xff]
      %v2369 = vld [vmem:[#allocation2 + $0x52] sm:$0xff]
      %v2370 = vld [vmem:[#allocation2 + $0x62] sm:$0xff]
      %v2371 = vld [vmem:[#allocation2 + $0x6a] sm:$0xff]
      %v2372 = vld [vmem:[#allocation2 + $0x7a] sm:$0xff]
      %v2373 = vld [vmem:[#allocation2 + $0x82] sm:$0xff]
      %v2374 = vld [vmem:[#allocation2 + $0x92] sm:$0xff]
      %v2375 = vld [vmem:[#allocation2 + $0x9a] sm:$0xff]
      %v2376 = vld [vmem:[#allocation2 + $0xaa] sm:$0xff]
      %v2377 = vld [vmem:[#allocation2 + $0xb2] sm:$0xff]
      %v2378 = vld [vmem:[#allocation2 + $0xc2] sm:$0xff]
      %v2379 = vld [vmem:[#allocation2 + $0xca] sm:$0xff]
      %v2380 = vld [vmem:[#allocation2 + $0xda] sm:$0xff]
      %v2381 = vld [vmem:[#allocation2 + $0xe2] sm:$0xff]
      %v2382 = vld [vmem:[#allocation2 + $0xf2] sm:$0xff]
      %v2383 = vld [vmem:[#allocation2 + $0xfa] sm:$0xff]
      %v2384 = vld [vmem:[#allocation2 + $0x10a] sm:$0xff]
      %v2385 = vld [vmem:[#allocation2 + $0x112] sm:$0xff]
      %v2386 = vld [vmem:[#allocation2 + $0x122] sm:$0xff]
      %v2387 = vld [vmem:[#allocation2 + $0x12a] sm:$0xff]
      %v2388 = vld [vmem:[#allocation2 + $0x13a] sm:$0xff]
      %v2389 = vld [vmem:[#allocation2 + $0x142] sm:$0xff]
      %v2390 = vld [vmem:[#allocation2 + $0x152] sm:$0xff]
      %v2391 = vld [vmem:[#allocation2 + $0x15a] sm:$0xff]
      %v2392 = vld [vmem:[#allocation2 + $0x16a] sm:$0xff]
      %v2393 = vld [vmem:[#allocation2 + $0x172] sm:$0xff]
      %v2394 = vld [vmem:[%s304] sm:$0xff]
      %v2395 = vld [vmem:[%s304 + $0x8] sm:$0xff]
      %v2396 = vld [vmem:[%s304 + $0x18] sm:$0xff]
      %v2397 = vld [vmem:[%s304 + $0x20] sm:$0xff]
      %v2398 = vld [vmem:[%s304 + $0x30] sm:$0xff]
      %v2399 = vld [vmem:[%s304 + $0x38] sm:$0xff]
      %v2400 = vld [vmem:[%s304 + $0x48] sm:$0xff]
      %v2401 = vld [vmem:[%s304 + $0x50] sm:$0xff]
      %v2402 = vld [vmem:[%s304 + $0x60] sm:$0xff]
      %v2403 = vld [vmem:[%s304 + $0x68] sm:$0xff]
      %v2404 = vld [vmem:[%s304 + $0x78] sm:$0xff]
      %v2405 = vld [vmem:[%s304 + $0x80] sm:$0xff]
      %v2406 = vld [vmem:[%s304 + $0x90] sm:$0xff]
      %v2407 = vld [vmem:[%s304 + $0x98] sm:$0xff]
      %v2408 = vld [vmem:[%s304 + $0xa8] sm:$0xff]
      %v2409 = vld [vmem:[%s304 + $0xb0] sm:$0xff]
      %v2410 = vld [vmem:[%s304 + $0xc0] sm:$0xff]
      %v2411 = vld [vmem:[%s304 + $0xc8] sm:$0xff]
      %v2412 = vld [vmem:[%s304 + $0xd8] sm:$0xff]
      %v2413 = vld [vmem:[%s304 + $0xe0] sm:$0xff]
      %v2414 = vld [vmem:[%s304 + $0xf0] sm:$0xff]
      %v2415 = vld [vmem:[%s304 + $0xf8] sm:$0xff]
      %v2416 = vld [vmem:[%s304 + $0x108] sm:$0xff]
      %v2417 = vld [vmem:[%s304 + $0x110] sm:$0xff]
      %v2418 = vld [vmem:[%s304 + $0x120] sm:$0xff]
      %v2419 = vld [vmem:[%s304 + $0x128] sm:$0xff]
      %v2420 = vld [vmem:[%s304 + $0x138] sm:$0xff]
      %v2421 = vld [vmem:[%s304 + $0x140] sm:$0xff]
      %v2422 = vld [vmem:[%s304 + $0x150] sm:$0xff]
      %v2423 = vld [vmem:[%s304 + $0x158] sm:$0xff]
      %v2424 = vld [vmem:[%s304 + $0x168] sm:$0xff]
      %v2425 = vld [vmem:[%s304 + $0x170] sm:$0xff]
      %v2426 = vld [vmem:[%s304 + $0x1] sm:$0xff]
      %v2427 = vld [vmem:[%s304 + $0x9] sm:$0xff]
      %v2428 = vld [vmem:[%s304 + $0x19] sm:$0xff]
      %v2429 = vld [vmem:[%s304 + $0x21] sm:$0xff]
      %v2430 = vld [vmem:[%s304 + $0x31] sm:$0xff]
      %v2431 = vld [vmem:[%s304 + $0x39] sm:$0xff]
      %v2432 = vld [vmem:[%s304 + $0x49] sm:$0xff]
      %v2433 = vld [vmem:[%s304 + $0x51] sm:$0xff]
      %v2434 = vld [vmem:[%s304 + $0x61] sm:$0xff]
      %v2435 = vld [vmem:[%s304 + $0x69] sm:$0xff]
      %v2436 = vld [vmem:[%s304 + $0x79] sm:$0xff]
      %v2437 = vld [vmem:[%s304 + $0x81] sm:$0xff]
      %v2438 = vld [vmem:[%s304 + $0x91] sm:$0xff]
      %v2439 = vld [vmem:[%s304 + $0x99] sm:$0xff]
      %v2440 = vld [vmem:[%s304 + $0xa9] sm:$0xff]
      %v2441 = vld [vmem:[%s304 + $0xb1] sm:$0xff]
      %v2442 = vld [vmem:[%s304 + $0xc1] sm:$0xff]
      %v2443 = vld [vmem:[%s304 + $0xc9] sm:$0xff]
      %v2444 = vld [vmem:[%s304 + $0xd9] sm:$0xff]
      %v2445 = vld [vmem:[%s304 + $0xe1] sm:$0xff]
      %v2446 = vld [vmem:[%s304 + $0xf1] sm:$0xff]
      %v2447 = vld [vmem:[%s304 + $0xf9] sm:$0xff]
      %v2448 = vld [vmem:[%s304 + $0x109] sm:$0xff]
      %v2449 = vld [vmem:[%s304 + $0x111] sm:$0xff]
      %v2450 = vld [vmem:[%s304 + $0x121] sm:$0xff]
      %v2451 = vld [vmem:[%s304 + $0x129] sm:$0xff]
      %v2452 = vld [vmem:[%s304 + $0x139] sm:$0xff]
      %v2453 = vld [vmem:[%s304 + $0x141] sm:$0xff]
      %v2454 = vld [vmem:[%s304 + $0x151] sm:$0xff]
      %v2455 = vld [vmem:[%s304 + $0x159] sm:$0xff]
      %v2456 = vld [vmem:[%s304 + $0x169] sm:$0xff]
      %v2457 = vld [vmem:[%s304 + $0x171] sm:$0xff]
      %v2458 = vld [vmem:[%s304 + $0x2] sm:$0xff]
      %v2459 = vld [vmem:[%s304 + $0xa] sm:$0xff]
      %v2460 = vld [vmem:[%s304 + $0x1a] sm:$0xff]
      %v2461 = vld [vmem:[%s304 + $0x22] sm:$0xff]
      %v2462 = vld [vmem:[%s304 + $0x32] sm:$0xff]
      %v2463 = vld [vmem:[%s304 + $0x3a] sm:$0xff]
      %v2464 = vld [vmem:[%s304 + $0x4a] sm:$0xff]
      %v2465 = vld [vmem:[%s304 + $0x52] sm:$0xff]
      %v2466 = vld [vmem:[%s304 + $0x62] sm:$0xff]
      %v2467 = vld [vmem:[%s304 + $0x6a] sm:$0xff]
      %v2468 = vld [vmem:[%s304 + $0x7a] sm:$0xff]
      %v2469 = vld [vmem:[%s304 + $0x82] sm:$0xff]
      %v2470 = vld [vmem:[%s304 + $0x92] sm:$0xff]
      %v2471 = vld [vmem:[%s304 + $0x9a] sm:$0xff]
      %v2472 = vld [vmem:[%s304 + $0xaa] sm:$0xff]
      %v2473 = vld [vmem:[%s304 + $0xb2] sm:$0xff]
      %v2474 = vld [vmem:[%s304 + $0xc2] sm:$0xff]
      %v2475 = vld [vmem:[%s304 + $0xca] sm:$0xff]
      %v2476 = vld [vmem:[%s304 + $0xda] sm:$0xff]
      %v2477 = vld [vmem:[%s304 + $0xe2] sm:$0xff]
      %v2478 = vld [vmem:[%s304 + $0xf2] sm:$0xff]
      %v2479 = vld [vmem:[%s304 + $0xfa] sm:$0xff]
      %v2480 = vld [vmem:[%s304 + $0x10a] sm:$0xff]
      %v2481 = vld [vmem:[%s304 + $0x112] sm:$0xff]
      %v2482 = vld [vmem:[%s304 + $0x122] sm:$0xff]
      %v2483 = vld [vmem:[%s304 + $0x12a] sm:$0xff]
      %v2484 = vld [vmem:[%s304 + $0x13a] sm:$0xff]
      %v2485 = vld [vmem:[%s304 + $0x142] sm:$0xff]
      %v2486 = vld [vmem:[%s304 + $0x152] sm:$0xff]
      %v2487 = vld [vmem:[%s304 + $0x15a] sm:$0xff]
      %v2488 = vld [vmem:[%s304 + $0x16a] sm:$0xff]
      %v2489 = vld [vmem:[%s304 + $0x172] sm:$0xff]
      %v2490 = vld [vmem:[%s529] sm:$0xff]
      %v2491 = vld [vmem:[%s529 + $0x8] sm:$0xff]
      %v2492 = vld [vmem:[%s529 + $0x18] sm:$0xff]
      %v2493 = vld [vmem:[%s529 + $0x20] sm:$0xff]
      %v2494 = vld [vmem:[%s529 + $0x30] sm:$0xff]
      %v2495 = vld [vmem:[%s529 + $0x38] sm:$0xff]
      %v2496 = vld [vmem:[%s529 + $0x48] sm:$0xff]
      %v2497 = vld [vmem:[%s529 + $0x50] sm:$0xff]
      %v2498 = vld [vmem:[%s529 + $0x60] sm:$0xff]
      %v2499 = vld [vmem:[%s529 + $0x68] sm:$0xff]
      %v2500 = vld [vmem:[%s529 + $0x78] sm:$0xff]
      %v2501 = vld [vmem:[%s529 + $0x80] sm:$0xff]
      %v2502 = vld [vmem:[%s529 + $0x90] sm:$0xff]
      %v2503 = vld [vmem:[%s529 + $0x98] sm:$0xff]
      %v2504 = vld [vmem:[%s529 + $0xa8] sm:$0xff]
      %v2505 = vld [vmem:[%s529 + $0xb0] sm:$0xff]
      %v2506 = vld [vmem:[%s529 + $0xc0] sm:$0xff]
      %v2507 = vld [vmem:[%s529 + $0xc8] sm:$0xff]
      %v2508 = vld [vmem:[%s529 + $0xd8] sm:$0xff]
      %v2509 = vld [vmem:[%s529 + $0xe0] sm:$0xff]
      %v2510 = vld [vmem:[%s529 + $0xf0] sm:$0xff]
      %v2511 = vld [vmem:[%s529 + $0xf8] sm:$0xff]
      %v2512 = vld [vmem:[%s529 + $0x108] sm:$0xff]
      %v2513 = vld [vmem:[%s529 + $0x110] sm:$0xff]
      %v2514 = vld [vmem:[%s529 + $0x120] sm:$0xff]
      %v2515 = vld [vmem:[%s529 + $0x128] sm:$0xff]
      %v2516 = vld [vmem:[%s529 + $0x138] sm:$0xff]
      %v2517 = vld [vmem:[%s529 + $0x140] sm:$0xff]
      %v2518 = vld [vmem:[%s529 + $0x150] sm:$0xff]
      %v2519 = vld [vmem:[%s529 + $0x158] sm:$0xff]
      %v2520 = vld [vmem:[%s529 + $0x168] sm:$0xff]
      %v2521 = vld [vmem:[%s529 + $0x170] sm:$0xff]
      %v2522 = vld [vmem:[%s529 + $0x1] sm:$0xff]
      %v2523 = vld [vmem:[%s529 + $0x9] sm:$0xff]
      %v2524 = vld [vmem:[%s529 + $0x19] sm:$0xff]
      %v2525 = vld [vmem:[%s529 + $0x21] sm:$0xff]
      %v2526 = vld [vmem:[%s529 + $0x31] sm:$0xff]
      %v2527 = vld [vmem:[%s529 + $0x39] sm:$0xff]
      %v2528 = vld [vmem:[%s529 + $0x49] sm:$0xff]
      %v2529 = vld [vmem:[%s529 + $0x51] sm:$0xff]
      %v2530 = vld [vmem:[%s529 + $0x61] sm:$0xff]
      %v2531 = vld [vmem:[%s529 + $0x69] sm:$0xff]
      %v2532 = vld [vmem:[%s529 + $0x79] sm:$0xff]
      %v2533 = vld [vmem:[%s529 + $0x81] sm:$0xff]
      %v2534 = vld [vmem:[%s529 + $0x91] sm:$0xff]
      %v2535 = vld [vmem:[%s529 + $0x99] sm:$0xff]
      %v2536 = vld [vmem:[%s529 + $0xa9] sm:$0xff]
      %v2537 = vld [vmem:[%s529 + $0xb1] sm:$0xff]
      %v2538 = vld [vmem:[%s529 + $0xc1] sm:$0xff]
      %v2539 = vld [vmem:[%s529 + $0xc9] sm:$0xff]
      %v2540 = vld [vmem:[%s529 + $0xd9] sm:$0xff]
      %v2541 = vld [vmem:[%s529 + $0xe1] sm:$0xff]
      %v2542 = vld [vmem:[%s529 + $0xf1] sm:$0xff]
      %v2543 = vld [vmem:[%s529 + $0xf9] sm:$0xff]
      %v2544 = vld [vmem:[%s529 + $0x109] sm:$0xff]
      %v2545 = vld [vmem:[%s529 + $0x111] sm:$0xff]
      %v2546 = vld [vmem:[%s529 + $0x121] sm:$0xff]
      %v2547 = vld [vmem:[%s529 + $0x129] sm:$0xff]
      %v2548 = vld [vmem:[%s529 + $0x139] sm:$0xff]
      %v2549 = vld [vmem:[%s529 + $0x141] sm:$0xff]
      %v2550 = vld [vmem:[%s529 + $0x151] sm:$0xff]
      %v2551 = vld [vmem:[%s529 + $0x159] sm:$0xff]
      %v2552 = vld [vmem:[%s529 + $0x169] sm:$0xff]
      %v2553 = vld [vmem:[%s529 + $0x171] sm:$0xff]
      %v2554 = vld [vmem:[%s529 + $0x2] sm:$0xff]
      %v2555 = vld [vmem:[%s529 + $0xa] sm:$0xff]
      %v2556 = vld [vmem:[%s529 + $0x1a] sm:$0xff]
      %v2557 = vld [vmem:[%s529 + $0x22] sm:$0xff]
      %v2558 = vld [vmem:[%s529 + $0x32] sm:$0xff]
      %v2559 = vld [vmem:[%s529 + $0x3a] sm:$0xff]
      %v2560 = vld [vmem:[%s529 + $0x4a] sm:$0xff]
      %v2561 = vld [vmem:[%s529 + $0x52] sm:$0xff]
      %v2562 = vld [vmem:[%s529 + $0x62] sm:$0xff]
      %v2563 = vld [vmem:[%s529 + $0x6a] sm:$0xff]
      %v2564 = vld [vmem:[%s529 + $0x7a] sm:$0xff]
      %v2565 = vld [vmem:[%s529 + $0x82] sm:$0xff]
      %v2566 = vld [vmem:[%s529 + $0x92] sm:$0xff]
      %v2567 = vld [vmem:[%s529 + $0x9a] sm:$0xff]
      %v2568 = vld [vmem:[%s529 + $0xaa] sm:$0xff]
      %v2569 = vld [vmem:[%s529 + $0xb2] sm:$0xff]
      %v2570 = vld [vmem:[%s529 + $0xc2] sm:$0xff]
      %v2571 = vld [vmem:[%s529 + $0xca] sm:$0xff]
      %v2572 = vld [vmem:[%s529 + $0xda] sm:$0xff]
      %v2573 = vld [vmem:[%s529 + $0xe2] sm:$0xff]
      %v2574 = vld [vmem:[%s529 + $0xf2] sm:$0xff]
      %v2575 = vld [vmem:[%s529 + $0xfa] sm:$0xff]
      %v2576 = vld [vmem:[%s529 + $0x10a] sm:$0xff]
      %v2577 = vld [vmem:[%s529 + $0x112] sm:$0xff]
      %v2578 = vld [vmem:[%s529 + $0x122] sm:$0xff]
      %v2579 = vld [vmem:[%s529 + $0x12a] sm:$0xff]
      %v2580 = vld [vmem:[%s529 + $0x13a] sm:$0xff]
      %v2581 = vld [vmem:[%s529 + $0x142] sm:$0xff]
      %v2582 = vld [vmem:[%s529 + $0x152] sm:$0xff]
      %v2583 = vld [vmem:[%s529 + $0x15a] sm:$0xff]
      %v2584 = vld [vmem:[%s529 + $0x16a] sm:$0xff]
      %v2585 = vld [vmem:[%s529 + $0x172] sm:$0xff]
      %2618 = vrot.lane.b32.xlu0 %v2330, 4
      %v2619 = vpop.permute.xlu0 %2618
      %2620 = vrot.lane.b32.xlu0 %v2331, 4
      %v2621 = vpop.permute.xlu0 %2620
      %2622 = vrot.lane.b32.xlu0 %v2332, 4
      %v2623 = vpop.permute.xlu0 %2622
      %2624 = vrot.lane.b32.xlu0 %v2333, 4
      %v2625 = vpop.permute.xlu0 %2624
      %2626 = vrot.lane.b32.xlu0 %v2334, 4
      %v2627 = vpop.permute.xlu0 %2626
      %2628 = vrot.lane.b32.xlu0 %v2335, 4
      %v2629 = vpop.permute.xlu0 %2628
      %2630 = vrot.lane.b32.xlu0 %v2336, 4
      %v2631 = vpop.permute.xlu0 %2630
      %2632 = vrot.lane.b32.xlu0 %v2337, 4
      %v2633 = vpop.permute.xlu0 %2632
      %2634 = vrot.lane.b32.xlu0 %v2338, 4
      %v2635 = vpop.permute.xlu0 %2634
      %2636 = vrot.lane.b32.xlu0 %v2339, 4
      %v2637 = vpop.permute.xlu0 %2636
      %2638 = vrot.lane.b32.xlu0 %v2340, 4
      %v2639 = vpop.permute.xlu0 %2638
      %2640 = vrot.lane.b32.xlu0 %v2341, 4
      %v2641 = vpop.permute.xlu0 %2640
      %2642 = vrot.lane.b32.xlu0 %v2342, 4
      %v2643 = vpop.permute.xlu0 %2642
      %2644 = vrot.lane.b32.xlu0 %v2343, 4
      %v2645 = vpop.permute.xlu0 %2644
      %2646 = vrot.lane.b32.xlu0 %v2344, 4
      %v2647 = vpop.permute.xlu0 %2646
      %2648 = vrot.lane.b32.xlu0 %v2345, 4
      %v2649 = vpop.permute.xlu0 %2648
      %2650 = vrot.lane.b32.xlu0 %v2346, 4
      %v2651 = vpop.permute.xlu0 %2650
      %2652 = vrot.lane.b32.xlu0 %v2347, 4
      %v2653 = vpop.permute.xlu0 %2652
      %2654 = vrot.lane.b32.xlu0 %v2348, 4
      %v2655 = vpop.permute.xlu0 %2654
      %2656 = vrot.lane.b32.xlu0 %v2349, 4
      %v2657 = vpop.permute.xlu0 %2656
      %2658 = vrot.lane.b32.xlu0 %v2350, 4
      %v2659 = vpop.permute.xlu0 %2658
      %2660 = vrot.lane.b32.xlu0 %v2351, 4
      %v2661 = vpop.permute.xlu0 %2660
      %2662 = vrot.lane.b32.xlu0 %v2352, 4
      %v2663 = vpop.permute.xlu0 %2662
      %2664 = vrot.lane.b32.xlu0 %v2353, 4
      %v2665 = vpop.permute.xlu0 %2664
      %2666 = vrot.lane.b32.xlu0 %v2354, 4
      %v2667 = vpop.permute.xlu0 %2666
      %2668 = vrot.lane.b32.xlu0 %v2355, 4
      %v2669 = vpop.permute.xlu0 %2668
      %2670 = vrot.lane.b32.xlu0 %v2356, 4
      %v2671 = vpop.permute.xlu0 %2670
      %2672 = vrot.lane.b32.xlu0 %v2357, 4
      %v2673 = vpop.permute.xlu0 %2672
      %2674 = vrot.lane.b32.xlu0 %v2358, 4
      %v2675 = vpop.permute.xlu0 %2674
      %2676 = vrot.lane.b32.xlu0 %v2359, 4
      %v2677 = vpop.permute.xlu0 %2676
      %2678 = vrot.lane.b32.xlu0 %v2360, 4
      %v2679 = vpop.permute.xlu0 %2678
      %2680 = vrot.lane.b32.xlu0 %v2361, 4
      %v2681 = vpop.permute.xlu0 %2680
      %2746 = vrot.lane.b32.xlu0 %v2362, 8
      %v2747 = vpop.permute.xlu0 %2746
      %2748 = vrot.lane.b32.xlu0 %v2363, 8
      %v2749 = vpop.permute.xlu0 %2748
      %2750 = vrot.lane.b32.xlu0 %v2364, 8
      %v2751 = vpop.permute.xlu0 %2750
      %2752 = vrot.lane.b32.xlu0 %v2365, 8
      %v2753 = vpop.permute.xlu0 %2752
      %2754 = vrot.lane.b32.xlu0 %v2366, 8
      %v2755 = vpop.permute.xlu0 %2754
      %2756 = vrot.lane.b32.xlu0 %v2367, 8
      %v2757 = vpop.permute.xlu0 %2756
      %2758 = vrot.lane.b32.xlu0 %v2368, 8
      %v2759 = vpop.permute.xlu0 %2758
      %2760 = vrot.lane.b32.xlu0 %v2369, 8
      %v2761 = vpop.permute.xlu0 %2760
      %2762 = vrot.lane.b32.xlu0 %v2370, 8
      %v2763 = vpop.permute.xlu0 %2762
      %2764 = vrot.lane.b32.xlu0 %v2371, 8
      %v2765 = vpop.permute.xlu0 %2764
      %2766 = vrot.lane.b32.xlu0 %v2372, 8
      %v2767 = vpop.permute.xlu0 %2766
      %2768 = vrot.lane.b32.xlu0 %v2373, 8
      %v2769 = vpop.permute.xlu0 %2768
      %2770 = vrot.lane.b32.xlu0 %v2374, 8
      %v2771 = vpop.permute.xlu0 %2770
      %2772 = vrot.lane.b32.xlu0 %v2375, 8
      %v2773 = vpop.permute.xlu0 %2772
      %2774 = vrot.lane.b32.xlu0 %v2376, 8
      %v2775 = vpop.permute.xlu0 %2774
      %2776 = vrot.lane.b32.xlu0 %v2377, 8
      %v2777 = vpop.permute.xlu0 %2776
      %2778 = vrot.lane.b32.xlu0 %v2378, 8
      %v2779 = vpop.permute.xlu0 %2778
      %2780 = vrot.lane.b32.xlu0 %v2379, 8
      %v2781 = vpop.permute.xlu0 %2780
      %2782 = vrot.lane.b32.xlu0 %v2380, 8
      %v2783 = vpop.permute.xlu0 %2782
      %2784 = vrot.lane.b32.xlu0 %v2381, 8
      %v2785 = vpop.permute.xlu0 %2784
      %2786 = vrot.lane.b32.xlu0 %v2382, 8
      %v2787 = vpop.permute.xlu0 %2786
      %2788 = vrot.lane.b32.xlu0 %v2383, 8
      %v2789 = vpop.permute.xlu0 %2788
      %2790 = vrot.lane.b32.xlu0 %v2384, 8
      %v2791 = vpop.permute.xlu0 %2790
      %2792 = vrot.lane.b32.xlu0 %v2385, 8
      %v2793 = vpop.permute.xlu0 %2792
      %2794 = vrot.lane.b32.xlu0 %v2386, 8
      %v2795 = vpop.permute.xlu0 %2794
      %2796 = vrot.lane.b32.xlu0 %v2387, 8
      %v2797 = vpop.permute.xlu0 %2796
      %2798 = vrot.lane.b32.xlu0 %v2388, 8
      %v2799 = vpop.permute.xlu0 %2798
      %2800 = vrot.lane.b32.xlu0 %v2389, 8
      %v2801 = vpop.permute.xlu0 %2800
      %2802 = vrot.lane.b32.xlu0 %v2390, 8
      %v2803 = vpop.permute.xlu0 %2802
      %2804 = vrot.lane.b32.xlu0 %v2391, 8
      %v2805 = vpop.permute.xlu0 %2804
      %2806 = vrot.lane.b32.xlu0 %v2392, 8
      %v2807 = vpop.permute.xlu0 %2806
      %2808 = vrot.lane.b32.xlu0 %v2393, 8
      %v2809 = vpop.permute.xlu0 %2808
      %2874 = vrot.lane.b32.xlu0 %v2394, 12
      %v2875 = vpop.permute.xlu0 %2874
      %2876 = vrot.lane.b32.xlu0 %v2395, 12
      %v2877 = vpop.permute.xlu0 %2876
      %2878 = vrot.lane.b32.xlu0 %v2396, 12
      %v2879 = vpop.permute.xlu0 %2878
      %2880 = vrot.lane.b32.xlu0 %v2397, 12
      %v2881 = vpop.permute.xlu0 %2880
      %2882 = vrot.lane.b32.xlu0 %v2398, 12
      %v2883 = vpop.permute.xlu0 %2882
      %2884 = vrot.lane.b32.xlu0 %v2399, 12
      %v2885 = vpop.permute.xlu0 %2884
      %2886 = vrot.lane.b32.xlu0 %v2400, 12
      %v2887 = vpop.permute.xlu0 %2886
      %2888 = vrot.lane.b32.xlu0 %v2401, 12
      %v2889 = vpop.permute.xlu0 %2888
      %2890 = vrot.lane.b32.xlu0 %v2402, 12
      %v2891 = vpop.permute.xlu0 %2890
      %2892 = vrot.lane.b32.xlu0 %v2403, 12
      %v2893 = vpop.permute.xlu0 %2892
      %2894 = vrot.lane.b32.xlu0 %v2404, 12
      %v2895 = vpop.permute.xlu0 %2894
      %2896 = vrot.lane.b32.xlu0 %v2405, 12
      %v2897 = vpop.permute.xlu0 %2896
      %2898 = vrot.lane.b32.xlu0 %v2406, 12
      %v2899 = vpop.permute.xlu0 %2898
      %2900 = vrot.lane.b32.xlu0 %v2407, 12
      %v2901 = vpop.permute.xlu0 %2900
      %2902 = vrot.lane.b32.xlu0 %v2408, 12
      %v2903 = vpop.permute.xlu0 %2902
      %2904 = vrot.lane.b32.xlu0 %v2409, 12
      %v2905 = vpop.permute.xlu0 %2904
      %2906 = vrot.lane.b32.xlu0 %v2410, 12
      %v2907 = vpop.permute.xlu0 %2906
      %2908 = vrot.lane.b32.xlu0 %v2411, 12
      %v2909 = vpop.permute.xlu0 %2908
      %2910 = vrot.lane.b32.xlu0 %v2412, 12
      %v2911 = vpop.permute.xlu0 %2910
      %2912 = vrot.lane.b32.xlu0 %v2413, 12
      %v2913 = vpop.permute.xlu0 %2912
      %2914 = vrot.lane.b32.xlu0 %v2414, 12
      %v2915 = vpop.permute.xlu0 %2914
      %2916 = vrot.lane.b32.xlu0 %v2415, 12
      %v2917 = vpop.permute.xlu0 %2916
      %2918 = vrot.lane.b32.xlu0 %v2416, 12
      %v2919 = vpop.permute.xlu0 %2918
      %2920 = vrot.lane.b32.xlu0 %v2417, 12
      %v2921 = vpop.permute.xlu0 %2920
      %2922 = vrot.lane.b32.xlu0 %v2418, 12
      %v2923 = vpop.permute.xlu0 %2922
      %2924 = vrot.lane.b32.xlu0 %v2419, 12
      %v2925 = vpop.permute.xlu0 %2924
      %2926 = vrot.lane.b32.xlu0 %v2420, 12
      %v2927 = vpop.permute.xlu0 %2926
      %2928 = vrot.lane.b32.xlu0 %v2421, 12
      %v2929 = vpop.permute.xlu0 %2928
      %2930 = vrot.lane.b32.xlu0 %v2422, 12
      %v2931 = vpop.permute.xlu0 %2930
      %2932 = vrot.lane.b32.xlu0 %v2423, 12
      %v2933 = vpop.permute.xlu0 %2932
      %2934 = vrot.lane.b32.xlu0 %v2424, 12
      %v2935 = vpop.permute.xlu0 %2934
      %2936 = vrot.lane.b32.xlu0 %v2425, 12
      %v2937 = vpop.permute.xlu0 %2936
      %3002 = vrot.lane.b32.xlu0 %v2426, 16
      %v3003 = vpop.permute.xlu0 %3002
      %3004 = vrot.lane.b32.xlu0 %v2427, 16
      %v3005 = vpop.permute.xlu0 %3004
      %3006 = vrot.lane.b32.xlu0 %v2428, 16
      %v3007 = vpop.permute.xlu0 %3006
      %3008 = vrot.lane.b32.xlu0 %v2429, 16
      %v3009 = vpop.permute.xlu0 %3008
      %3010 = vrot.lane.b32.xlu0 %v2430, 16
      %v3011 = vpop.permute.xlu0 %3010
      %3012 = vrot.lane.b32.xlu0 %v2431, 16
      %v3013 = vpop.permute.xlu0 %3012
      %3014 = vrot.lane.b32.xlu0 %v2432, 16
      %v3015 = vpop.permute.xlu0 %3014
      %3016 = vrot.lane.b32.xlu0 %v2433, 16
      %v3017 = vpop.permute.xlu0 %3016
      %3018 = vrot.lane.b32.xlu0 %v2434, 16
      %v3019 = vpop.permute.xlu0 %3018
      %3020 = vrot.lane.b32.xlu0 %v2435, 16
      %v3021 = vpop.permute.xlu0 %3020
      %3022 = vrot.lane.b32.xlu0 %v2436, 16
      %v3023 = vpop.permute.xlu0 %3022
      %3024 = vrot.lane.b32.xlu0 %v2437, 16
      %v3025 = vpop.permute.xlu0 %3024
      %3026 = vrot.lane.b32.xlu0 %v2438, 16
      %v3027 = vpop.permute.xlu0 %3026
      %3028 = vrot.lane.b32.xlu0 %v2439, 16
      %v3029 = vpop.permute.xlu0 %3028
      %3030 = vrot.lane.b32.xlu0 %v2440, 16
      %v3031 = vpop.permute.xlu0 %3030
      %3032 = vrot.lane.b32.xlu0 %v2441, 16
      %v3033 = vpop.permute.xlu0 %3032
      %3034 = vrot.lane.b32.xlu0 %v2442, 16
      %v3035 = vpop.permute.xlu0 %3034
      %3036 = vrot.lane.b32.xlu0 %v2443, 16
      %v3037 = vpop.permute.xlu0 %3036
      %3038 = vrot.lane.b32.xlu0 %v2444, 16
      %v3039 = vpop.permute.xlu0 %3038
      %3040 = vrot.lane.b32.xlu0 %v2445, 16
      %v3041 = vpop.permute.xlu0 %3040
      %3042 = vrot.lane.b32.xlu0 %v2446, 16
      %v3043 = vpop.permute.xlu0 %3042
      %3044 = vrot.lane.b32.xlu0 %v2447, 16
      %v3045 = vpop.permute.xlu0 %3044
      %3046 = vrot.lane.b32.xlu0 %v2448, 16
      %v3047 = vpop.permute.xlu0 %3046
      %3048 = vrot.lane.b32.xlu0 %v2449, 16
      %v3049 = vpop.permute.xlu0 %3048
      %3050 = vrot.lane.b32.xlu0 %v2450, 16
      %v3051 = vpop.permute.xlu0 %3050
      %3052 = vrot.lane.b32.xlu0 %v2451, 16
      %v3053 = vpop.permute.xlu0 %3052
      %3054 = vrot.lane.b32.xlu0 %v2452, 16
      %v3055 = vpop.permute.xlu0 %3054
      %3056 = vrot.lane.b32.xlu0 %v2453, 16
      %v3057 = vpop.permute.xlu0 %3056
      %3058 = vrot.lane.b32.xlu0 %v2454, 16
      %v3059 = vpop.permute.xlu0 %3058
      %3060 = vrot.lane.b32.xlu0 %v2455, 16
      %v3061 = vpop.permute.xlu0 %3060
      %3062 = vrot.lane.b32.xlu0 %v2456, 16
      %v3063 = vpop.permute.xlu0 %3062
      %3064 = vrot.lane.b32.xlu0 %v2457, 16
      %v3065 = vpop.permute.xlu0 %3064
      %3130 = vrot.lane.b32.xlu0 %v2458, 20
      %v3131 = vpop.permute.xlu0 %3130
      %3132 = vrot.lane.b32.xlu0 %v2459, 20
      %v3133 = vpop.permute.xlu0 %3132
      %3134 = vrot.lane.b32.xlu0 %v2460, 20
      %v3135 = vpop.permute.xlu0 %3134
      %3136 = vrot.lane.b32.xlu0 %v2461, 20
      %v3137 = vpop.permute.xlu0 %3136
      %3138 = vrot.lane.b32.xlu0 %v2462, 20
      %v3139 = vpop.permute.xlu0 %3138
      %3140 = vrot.lane.b32.xlu0 %v2463, 20
      %v3141 = vpop.permute.xlu0 %3140
      %3142 = vrot.lane.b32.xlu0 %v2464, 20
      %v3143 = vpop.permute.xlu0 %3142
      %3144 = vrot.lane.b32.xlu0 %v2465, 20
      %v3145 = vpop.permute.xlu0 %3144
      %3146 = vrot.lane.b32.xlu0 %v2466, 20
      %v3147 = vpop.permute.xlu0 %3146
      %3148 = vrot.lane.b32.xlu0 %v2467, 20
      %v3149 = vpop.permute.xlu0 %3148
      %3150 = vrot.lane.b32.xlu0 %v2468, 20
      %v3151 = vpop.permute.xlu0 %3150
      %3152 = vrot.lane.b32.xlu0 %v2469, 20
      %v3153 = vpop.permute.xlu0 %3152
      %3154 = vrot.lane.b32.xlu0 %v2470, 20
      %v3155 = vpop.permute.xlu0 %3154
      %3156 = vrot.lane.b32.xlu0 %v2471, 20
      %v3157 = vpop.permute.xlu0 %3156
      %3158 = vrot.lane.b32.xlu0 %v2472, 20
      %v3159 = vpop.permute.xlu0 %3158
      %3160 = vrot.lane.b32.xlu0 %v2473, 20
      %v3161 = vpop.permute.xlu0 %3160
      %3162 = vrot.lane.b32.xlu0 %v2474, 20
      %v3163 = vpop.permute.xlu0 %3162
      %3164 = vrot.lane.b32.xlu0 %v2475, 20
      %v3165 = vpop.permute.xlu0 %3164
      %3166 = vrot.lane.b32.xlu0 %v2476, 20
      %v3167 = vpop.permute.xlu0 %3166
      %3168 = vrot.lane.b32.xlu0 %v2477, 20
      %v3169 = vpop.permute.xlu0 %3168
      %3170 = vrot.lane.b32.xlu0 %v2478, 20
      %v3171 = vpop.permute.xlu0 %3170
      %3172 = vrot.lane.b32.xlu0 %v2479, 20
      %v3173 = vpop.permute.xlu0 %3172
      %3174 = vrot.lane.b32.xlu0 %v2480, 20
      %v3175 = vpop.permute.xlu0 %3174
      %3176 = vrot.lane.b32.xlu0 %v2481, 20
      %v3177 = vpop.permute.xlu0 %3176
      %3178 = vrot.lane.b32.xlu0 %v2482, 20
      %v3179 = vpop.permute.xlu0 %3178
      %3180 = vrot.lane.b32.xlu0 %v2483, 20
      %v3181 = vpop.permute.xlu0 %3180
      %3182 = vrot.lane.b32.xlu0 %v2484, 20
      %v3183 = vpop.permute.xlu0 %3182
      %3184 = vrot.lane.b32.xlu0 %v2485, 20
      %v3185 = vpop.permute.xlu0 %3184
      %3186 = vrot.lane.b32.xlu0 %v2486, 20
      %v3187 = vpop.permute.xlu0 %3186
      %3188 = vrot.lane.b32.xlu0 %v2487, 20
      %v3189 = vpop.permute.xlu0 %3188
      %3190 = vrot.lane.b32.xlu0 %v2488, 20
      %v3191 = vpop.permute.xlu0 %3190
      %3192 = vrot.lane.b32.xlu0 %v2489, 20
      %v3193 = vpop.permute.xlu0 %3192
      %3258 = vrot.lane.b32.xlu0 %v2490, 24
      %v3259 = vpop.permute.xlu0 %3258
      %3260 = vrot.lane.b32.xlu0 %v2491, 24
      %v3261 = vpop.permute.xlu0 %3260
      %3262 = vrot.lane.b32.xlu0 %v2492, 24
      %v3263 = vpop.permute.xlu0 %3262
      %3264 = vrot.lane.b32.xlu0 %v2493, 24
      %v3265 = vpop.permute.xlu0 %3264
      %3266 = vrot.lane.b32.xlu0 %v2494, 24
      %v3267 = vpop.permute.xlu0 %3266
      %3268 = vrot.lane.b32.xlu0 %v2495, 24
      %v3269 = vpop.permute.xlu0 %3268
      %3270 = vrot.lane.b32.xlu0 %v2496, 24
      %v3271 = vpop.permute.xlu0 %3270
      %3272 = vrot.lane.b32.xlu0 %v2497, 24
      %v3273 = vpop.permute.xlu0 %3272
      %3274 = vrot.lane.b32.xlu0 %v2498, 24
      %v3275 = vpop.permute.xlu0 %3274
      %3276 = vrot.lane.b32.xlu0 %v2499, 24
      %v3277 = vpop.permute.xlu0 %3276
      %3278 = vrot.lane.b32.xlu0 %v2500, 24
      %v3279 = vpop.permute.xlu0 %3278
      %3280 = vrot.lane.b32.xlu0 %v2501, 24
      %v3281 = vpop.permute.xlu0 %3280
      %3282 = vrot.lane.b32.xlu0 %v2502, 24
      %v3283 = vpop.permute.xlu0 %3282
      %3284 = vrot.lane.b32.xlu0 %v2503, 24
      %v3285 = vpop.permute.xlu0 %3284
      %3286 = vrot.lane.b32.xlu0 %v2504, 24
      %v3287 = vpop.permute.xlu0 %3286
      %3288 = vrot.lane.b32.xlu0 %v2505, 24
      %v3289 = vpop.permute.xlu0 %3288
      %3290 = vrot.lane.b32.xlu0 %v2506, 24
      %v3291 = vpop.permute.xlu0 %3290
      %3292 = vrot.lane.b32.xlu0 %v2507, 24
      %v3293 = vpop.permute.xlu0 %3292
      %3294 = vrot.lane.b32.xlu0 %v2508, 24
      %v3295 = vpop.permute.xlu0 %3294
      %3296 = vrot.lane.b32.xlu0 %v2509, 24
      %v3297 = vpop.permute.xlu0 %3296
      %3298 = vrot.lane.b32.xlu0 %v2510, 24
      %v3299 = vpop.permute.xlu0 %3298
      %3300 = vrot.lane.b32.xlu0 %v2511, 24
      %v3301 = vpop.permute.xlu0 %3300
      %3302 = vrot.lane.b32.xlu0 %v2512, 24
      %v3303 = vpop.permute.xlu0 %3302
      %3304 = vrot.lane.b32.xlu0 %v2513, 24
      %v3305 = vpop.permute.xlu0 %3304
      %3306 = vrot.lane.b32.xlu0 %v2514, 24
      %v3307 = vpop.permute.xlu0 %3306
      %3308 = vrot.lane.b32.xlu0 %v2515, 24
      %v3309 = vpop.permute.xlu0 %3308
      %3310 = vrot.lane.b32.xlu0 %v2516, 24
      %v3311 = vpop.permute.xlu0 %3310
      %3312 = vrot.lane.b32.xlu0 %v2517, 24
      %v3313 = vpop.permute.xlu0 %3312
      %3314 = vrot.lane.b32.xlu0 %v2518, 24
      %v3315 = vpop.permute.xlu0 %3314
      %3316 = vrot.lane.b32.xlu0 %v2519, 24
      %v3317 = vpop.permute.xlu0 %3316
      %3318 = vrot.lane.b32.xlu0 %v2520, 24
      %v3319 = vpop.permute.xlu0 %3318
      %3320 = vrot.lane.b32.xlu0 %v2521, 24
      %v3321 = vpop.permute.xlu0 %3320
      %3386 = vrot.lane.b32.xlu0 %v2522, 28
      %v3387 = vpop.permute.xlu0 %3386
      %3388 = vrot.lane.b32.xlu0 %v2523, 28
      %v3389 = vpop.permute.xlu0 %3388
      %3390 = vrot.lane.b32.xlu0 %v2524, 28
      %v3391 = vpop.permute.xlu0 %3390
      %3392 = vrot.lane.b32.xlu0 %v2525, 28
      %v3393 = vpop.permute.xlu0 %3392
      %3394 = vrot.lane.b32.xlu0 %v2526, 28
      %v3395 = vpop.permute.xlu0 %3394
      %3396 = vrot.lane.b32.xlu0 %v2527, 28
      %v3397 = vpop.permute.xlu0 %3396
      %3398 = vrot.lane.b32.xlu0 %v2528, 28
      %v3399 = vpop.permute.xlu0 %3398
      %3400 = vrot.lane.b32.xlu0 %v2529, 28
      %v3401 = vpop.permute.xlu0 %3400
      %3402 = vrot.lane.b32.xlu0 %v2530, 28
      %v3403 = vpop.permute.xlu0 %3402
      %3404 = vrot.lane.b32.xlu0 %v2531, 28
      %v3405 = vpop.permute.xlu0 %3404
      %3406 = vrot.lane.b32.xlu0 %v2532, 28
      %v3407 = vpop.permute.xlu0 %3406
      %3408 = vrot.lane.b32.xlu0 %v2533, 28
      %v3409 = vpop.permute.xlu0 %3408
      %3410 = vrot.lane.b32.xlu0 %v2534, 28
      %v3411 = vpop.permute.xlu0 %3410
      %3412 = vrot.lane.b32.xlu0 %v2535, 28
      %v3413 = vpop.permute.xlu0 %3412
      %3414 = vrot.lane.b32.xlu0 %v2536, 28
      %v3415 = vpop.permute.xlu0 %3414
      %3416 = vrot.lane.b32.xlu0 %v2537, 28
      %v3417 = vpop.permute.xlu0 %3416
      %3418 = vrot.lane.b32.xlu0 %v2538, 28
      %v3419 = vpop.permute.xlu0 %3418
      %3420 = vrot.lane.b32.xlu0 %v2539, 28
      %v3421 = vpop.permute.xlu0 %3420
      %3422 = vrot.lane.b32.xlu0 %v2540, 28
      %v3423 = vpop.permute.xlu0 %3422
      %3424 = vrot.lane.b32.xlu0 %v2541, 28
      %v3425 = vpop.permute.xlu0 %3424
      %3426 = vrot.lane.b32.xlu0 %v2542, 28
      %v3427 = vpop.permute.xlu0 %3426
      %3428 = vrot.lane.b32.xlu0 %v2543, 28
      %v3429 = vpop.permute.xlu0 %3428
      %3430 = vrot.lane.b32.xlu0 %v2544, 28
      %v3431 = vpop.permute.xlu0 %3430
      %3432 = vrot.lane.b32.xlu0 %v2545, 28
      %v3433 = vpop.permute.xlu0 %3432
      %3434 = vrot.lane.b32.xlu0 %v2546, 28
      %v3435 = vpop.permute.xlu0 %3434
      %3436 = vrot.lane.b32.xlu0 %v2547, 28
      %v3437 = vpop.permute.xlu0 %3436
      %3438 = vrot.lane.b32.xlu0 %v2548, 28
      %v3439 = vpop.permute.xlu0 %3438
      %3440 = vrot.lane.b32.xlu0 %v2549, 28
      %v3441 = vpop.permute.xlu0 %3440
      %3442 = vrot.lane.b32.xlu0 %v2550, 28
      %v3443 = vpop.permute.xlu0 %3442
      %3444 = vrot.lane.b32.xlu0 %v2551, 28
      %v3445 = vpop.permute.xlu0 %3444
      %3446 = vrot.lane.b32.xlu0 %v2552, 28
      %v3447 = vpop.permute.xlu0 %3446
      %3448 = vrot.lane.b32.xlu0 %v2553, 28
      %v3449 = vpop.permute.xlu0 %3448
      %3514 = vrot.lane.b32.xlu0 %v2554, 32
      %v3515 = vpop.permute.xlu0 %3514
      %3516 = vrot.lane.b32.xlu0 %v2555, 32
      %v3517 = vpop.permute.xlu0 %3516
      %3518 = vrot.lane.b32.xlu0 %v2556, 32
      %v3519 = vpop.permute.xlu0 %3518
      %3520 = vrot.lane.b32.xlu0 %v2557, 32
      %v3521 = vpop.permute.xlu0 %3520
      %3522 = vrot.lane.b32.xlu0 %v2558, 32
      %v3523 = vpop.permute.xlu0 %3522
      %3524 = vrot.lane.b32.xlu0 %v2559, 32
      %v3525 = vpop.permute.xlu0 %3524
      %3526 = vrot.lane.b32.xlu0 %v2560, 32
      %v3527 = vpop.permute.xlu0 %3526
      %3528 = vrot.lane.b32.xlu0 %v2561, 32
      %v3529 = vpop.permute.xlu0 %3528
      %3530 = vrot.lane.b32.xlu0 %v2562, 32
      %v3531 = vpop.permute.xlu0 %3530
      %3532 = vrot.lane.b32.xlu0 %v2563, 32
      %v3533 = vpop.permute.xlu0 %3532
      %3534 = vrot.lane.b32.xlu0 %v2564, 32
      %v3535 = vpop.permute.xlu0 %3534
      %3536 = vrot.lane.b32.xlu0 %v2565, 32
      %v3537 = vpop.permute.xlu0 %3536
      %3538 = vrot.lane.b32.xlu0 %v2566, 32
      %v3539 = vpop.permute.xlu0 %3538
      %3540 = vrot.lane.b32.xlu0 %v2567, 32
      %v3541 = vpop.permute.xlu0 %3540
      %3542 = vrot.lane.b32.xlu0 %v2568, 32
      %v3543 = vpop.permute.xlu0 %3542
      %3544 = vrot.lane.b32.xlu0 %v2569, 32
      %v3545 = vpop.permute.xlu0 %3544
      %3546 = vrot.lane.b32.xlu0 %v2570, 32
      %v3547 = vpop.permute.xlu0 %3546
      %3548 = vrot.lane.b32.xlu0 %v2571, 32
      %v3549 = vpop.permute.xlu0 %3548
      %3550 = vrot.lane.b32.xlu0 %v2572, 32
      %v3551 = vpop.permute.xlu0 %3550
      %3552 = vrot.lane.b32.xlu0 %v2573, 32
      %v3553 = vpop.permute.xlu0 %3552
      %3554 = vrot.lane.b32.xlu0 %v2574, 32
      %v3555 = vpop.permute.xlu0 %3554
      %3556 = vrot.lane.b32.xlu0 %v2575, 32
      %v3557 = vpop.permute.xlu0 %3556
      %3558 = vrot.lane.b32.xlu0 %v2576, 32
      %v3559 = vpop.permute.xlu0 %3558
      %3560 = vrot.lane.b32.xlu0 %v2577, 32
      %v3561 = vpop.permute.xlu0 %3560
      %3562 = vrot.lane.b32.xlu0 %v2578, 32
      %v3563 = vpop.permute.xlu0 %3562
      %3564 = vrot.lane.b32.xlu0 %v2579, 32
      %v3565 = vpop.permute.xlu0 %3564
      %3566 = vrot.lane.b32.xlu0 %v2580, 32
      %v3567 = vpop.permute.xlu0 %3566
      %3568 = vrot.lane.b32.xlu0 %v2581, 32
      %v3569 = vpop.permute.xlu0 %3568
      %3570 = vrot.lane.b32.xlu0 %v2582, 32
      %v3571 = vpop.permute.xlu0 %3570
      %3572 = vrot.lane.b32.xlu0 %v2583, 32
      %v3573 = vpop.permute.xlu0 %3572
      %3574 = vrot.lane.b32.xlu0 %v2584, 32
      %v3575 = vpop.permute.xlu0 %3574
      %3576 = vrot.lane.b32.xlu0 %v2585, 32
      %v3577 = vpop.permute.xlu0 %3576
      %v3610 = vsel %vm226, %v2298, %v2619
      %v3611 = vsel %vm226, %v2299, %v2621
      %v3612 = vsel %vm226, %v2300, %v2623
      %v3613 = vsel %vm226, %v2301, %v2625
      %v3614 = vsel %vm226, %v2302, %v2627
      %v3615 = vsel %vm226, %v2303, %v2629
      %v3616 = vsel %vm226, %v2304, %v2631
      %v3617 = vsel %vm226, %v2305, %v2633
      %v3618 = vsel %vm226, %v2306, %v2635
      %v3619 = vsel %vm226, %v2307, %v2637
      %v3620 = vsel %vm226, %v2308, %v2639
      %v3621 = vsel %vm226, %v2309, %v2641
      %v3622 = vsel %vm226, %v2310, %v2643
      %v3623 = vsel %vm226, %v2311, %v2645
      %v3624 = vsel %vm226, %v2312, %v2647
      %v3625 = vsel %vm226, %v2313, %v2649
      %v3626 = vsel %vm226, %v2314, %v2651
      %v3627 = vsel %vm226, %v2315, %v2653
      %v3628 = vsel %vm226, %v2316, %v2655
      %v3629 = vsel %vm226, %v2317, %v2657
      %v3630 = vsel %vm226, %v2318, %v2659
      %v3631 = vsel %vm226, %v2319, %v2661
      %v3632 = vsel %vm226, %v2320, %v2663
      %v3633 = vsel %vm226, %v2321, %v2665
      %v3634 = vsel %vm226, %v2322, %v2667
      %v3635 = vsel %vm226, %v2323, %v2669
      %v3636 = vsel %vm226, %v2324, %v2671
      %v3637 = vsel %vm226, %v2325, %v2673
      %v3638 = vsel %vm226, %v2326, %v2675
      %v3639 = vsel %vm226, %v2327, %v2677
      %v3640 = vsel %vm226, %v2328, %v2679
      %v3641 = vsel %vm226, %v2329, %v2681
      %v3642 = vsel %vm1682, %v3610, %v2747
      %v3643 = vsel %vm1682, %v3611, %v2749
      %v3644 = vsel %vm1682, %v3612, %v2751
      %v3645 = vsel %vm1682, %v3613, %v2753
      %v3646 = vsel %vm1682, %v3614, %v2755
      %v3647 = vsel %vm1682, %v3615, %v2757
      %v3648 = vsel %vm1682, %v3616, %v2759
      %v3649 = vsel %vm1682, %v3617, %v2761
      %v3650 = vsel %vm1682, %v3618, %v2763
      %v3651 = vsel %vm1682, %v3619, %v2765
      %v3652 = vsel %vm1682, %v3620, %v2767
      %v3653 = vsel %vm1682, %v3621, %v2769
      %v3654 = vsel %vm1682, %v3622, %v2771
      %v3655 = vsel %vm1682, %v3623, %v2773
      %v3656 = vsel %vm1682, %v3624, %v2775
      %v3657 = vsel %vm1682, %v3625, %v2777
      %v3658 = vsel %vm1682, %v3626, %v2779
      %v3659 = vsel %vm1682, %v3627, %v2781
      %v3660 = vsel %vm1682, %v3628, %v2783
      %v3661 = vsel %vm1682, %v3629, %v2785
      %v3662 = vsel %vm1682, %v3630, %v2787
      %v3663 = vsel %vm1682, %v3631, %v2789
      %v3664 = vsel %vm1682, %v3632, %v2791
      %v3665 = vsel %vm1682, %v3633, %v2793
      %v3666 = vsel %vm1682, %v3634, %v2795
      %v3667 = vsel %vm1682, %v3635, %v2797
      %v3668 = vsel %vm1682, %v3636, %v2799
      %v3669 = vsel %vm1682, %v3637, %v2801
      %v3670 = vsel %vm1682, %v3638, %v2803
      %v3671 = vsel %vm1682, %v3639, %v2805
      %v3672 = vsel %vm1682, %v3640, %v2807
      %v3673 = vsel %vm1682, %v3641, %v2809
      %v3674 = vsel %vm1715, %v3642, %v2875
      %v3675 = vsel %vm1715, %v3643, %v2877
      %v3676 = vsel %vm1715, %v3644, %v2879
      %v3677 = vsel %vm1715, %v3645, %v2881
      %v3678 = vsel %vm1715, %v3646, %v2883
      %v3679 = vsel %vm1715, %v3647, %v2885
      %v3680 = vsel %vm1715, %v3648, %v2887
      %v3681 = vsel %vm1715, %v3649, %v2889
      %v3682 = vsel %vm1715, %v3650, %v2891
      %v3683 = vsel %vm1715, %v3651, %v2893
      %v3684 = vsel %vm1715, %v3652, %v2895
      %v3685 = vsel %vm1715, %v3653, %v2897
      %v3686 = vsel %vm1715, %v3654, %v2899
      %v3687 = vsel %vm1715, %v3655, %v2901
      %v3688 = vsel %vm1715, %v3656, %v2903
      %v3689 = vsel %vm1715, %v3657, %v2905
      %v3690 = vsel %vm1715, %v3658, %v2907
      %v3691 = vsel %vm1715, %v3659, %v2909
      %v3692 = vsel %vm1715, %v3660, %v2911
      %v3693 = vsel %vm1715, %v3661, %v2913
      %v3694 = vsel %vm1715, %v3662, %v2915
      %v3695 = vsel %vm1715, %v3663, %v2917
      %v3696 = vsel %vm1715, %v3664, %v2919
      %v3697 = vsel %vm1715, %v3665, %v2921
      %v3698 = vsel %vm1715, %v3666, %v2923
      %v3699 = vsel %vm1715, %v3667, %v2925
      %v3700 = vsel %vm1715, %v3668, %v2927
      %v3701 = vsel %vm1715, %v3669, %v2929
      %v3702 = vsel %vm1715, %v3670, %v2931
      %v3703 = vsel %vm1715, %v3671, %v2933
      %v3704 = vsel %vm1715, %v3672, %v2935
      %v3705 = vsel %vm1715, %v3673, %v2937
      %v3706 = vsel %vm1748, %v3674, %v3003
      %v3707 = vsel %vm1748, %v3675, %v3005
      %v3708 = vsel %vm1748, %v3676, %v3007
      %v3709 = vsel %vm1748, %v3677, %v3009
      %v3710 = vsel %vm1748, %v3678, %v3011
      %v3711 = vsel %vm1748, %v3679, %v3013
      %v3712 = vsel %vm1748, %v3680, %v3015
      %v3713 = vsel %vm1748, %v3681, %v3017
      %v3714 = vsel %vm1748, %v3682, %v3019
      %v3715 = vsel %vm1748, %v3683, %v3021
      %v3716 = vsel %vm1748, %v3684, %v3023
      %v3717 = vsel %vm1748, %v3685, %v3025
      %v3718 = vsel %vm1748, %v3686, %v3027
      %v3719 = vsel %vm1748, %v3687, %v3029
      %v3720 = vsel %vm1748, %v3688, %v3031
      %v3721 = vsel %vm1748, %v3689, %v3033
      %v3722 = vsel %vm1748, %v3690, %v3035
      %v3723 = vsel %vm1748, %v3691, %v3037
      %v3724 = vsel %vm1748, %v3692, %v3039
      %v3725 = vsel %vm1748, %v3693, %v3041
      %v3726 = vsel %vm1748, %v3694, %v3043
      %v3727 = vsel %vm1748, %v3695, %v3045
      %v3728 = vsel %vm1748, %v3696, %v3047
      %v3729 = vsel %vm1748, %v3697, %v3049
      %v3730 = vsel %vm1748, %v3698, %v3051
      %v3731 = vsel %vm1748, %v3699, %v3053
      %v3732 = vsel %vm1748, %v3700, %v3055
      %v3733 = vsel %vm1748, %v3701, %v3057
      %v3734 = vsel %vm1748, %v3702, %v3059
      %v3735 = vsel %vm1748, %v3703, %v3061
      %v3736 = vsel %vm1748, %v3704, %v3063
      %v3737 = vsel %vm1748, %v3705, %v3065
      %v3738 = vsel %vm1781, %v3706, %v3131
      %v3739 = vsel %vm1781, %v3707, %v3133
      %v3740 = vsel %vm1781, %v3708, %v3135
      %v3741 = vsel %vm1781, %v3709, %v3137
      %v3742 = vsel %vm1781, %v3710, %v3139
      %v3743 = vsel %vm1781, %v3711, %v3141
      %v3744 = vsel %vm1781, %v3712, %v3143
      %v3745 = vsel %vm1781, %v3713, %v3145
      %v3746 = vsel %vm1781, %v3714, %v3147
      %v3747 = vsel %vm1781, %v3715, %v3149
      %v3748 = vsel %vm1781, %v3716, %v3151
      %v3749 = vsel %vm1781, %v3717, %v3153
      %v3750 = vsel %vm1781, %v3718, %v3155
      %v3751 = vsel %vm1781, %v3719, %v3157
      %v3752 = vsel %vm1781, %v3720, %v3159
      %v3753 = vsel %vm1781, %v3721, %v3161
      %v3754 = vsel %vm1781, %v3722, %v3163
      %v3755 = vsel %vm1781, %v3723, %v3165
      %v3756 = vsel %vm1781, %v3724, %v3167
      %v3757 = vsel %vm1781, %v3725, %v3169
      %v3758 = vsel %vm1781, %v3726, %v3171
      %v3759 = vsel %vm1781, %v3727, %v3173
      %v3760 = vsel %vm1781, %v3728, %v3175
      %v3761 = vsel %vm1781, %v3729, %v3177
      %v3762 = vsel %vm1781, %v3730, %v3179
      %v3763 = vsel %vm1781, %v3731, %v3181
      %v3764 = vsel %vm1781, %v3732, %v3183
      %v3765 = vsel %vm1781, %v3733, %v3185
      %v3766 = vsel %vm1781, %v3734, %v3187
      %v3767 = vsel %vm1781, %v3735, %v3189
      %v3768 = vsel %vm1781, %v3736, %v3191
      %v3769 = vsel %vm1781, %v3737, %v3193
      %v3770 = vsel %vm1814, %v3738, %v3259
      %v3771 = vsel %vm1814, %v3739, %v3261
      %v3772 = vsel %vm1814, %v3740, %v3263
      %v3773 = vsel %vm1814, %v3741, %v3265
      %v3774 = vsel %vm1814, %v3742, %v3267
      %v3775 = vsel %vm1814, %v3743, %v3269
      %v3776 = vsel %vm1814, %v3744, %v3271
      %v3777 = vsel %vm1814, %v3745, %v3273
      %v3778 = vsel %vm1814, %v3746, %v3275
      %v3779 = vsel %vm1814, %v3747, %v3277
      %v3780 = vsel %vm1814, %v3748, %v3279
      %v3781 = vsel %vm1814, %v3749, %v3281
      %v3782 = vsel %vm1814, %v3750, %v3283
      %v3783 = vsel %vm1814, %v3751, %v3285
      %v3784 = vsel %vm1814, %v3752, %v3287
      %v3785 = vsel %vm1814, %v3753, %v3289
      %v3786 = vsel %vm1814, %v3754, %v3291
      %v3787 = vsel %vm1814, %v3755, %v3293
      %v3788 = vsel %vm1814, %v3756, %v3295
      %v3789 = vsel %vm1814, %v3757, %v3297
      %v3790 = vsel %vm1814, %v3758, %v3299
      %v3791 = vsel %vm1814, %v3759, %v3301
      %v3792 = vsel %vm1814, %v3760, %v3303
      %v3793 = vsel %vm1814, %v3761, %v3305
      %v3794 = vsel %vm1814, %v3762, %v3307
      %v3795 = vsel %vm1814, %v3763, %v3309
      %v3796 = vsel %vm1814, %v3764, %v3311
      %v3797 = vsel %vm1814, %v3765, %v3313
      %v3798 = vsel %vm1814, %v3766, %v3315
      %v3799 = vsel %vm1814, %v3767, %v3317
      %v3800 = vsel %vm1814, %v3768, %v3319
      %v3801 = vsel %vm1814, %v3769, %v3321
      %v3802 = vsel %vm1847, %v3770, %v3387
      %v3803 = vsel %vm1847, %v3771, %v3389
      %v3804 = vsel %vm1847, %v3772, %v3391
      %v3805 = vsel %vm1847, %v3773, %v3393
      %v3806 = vsel %vm1847, %v3774, %v3395
      %v3807 = vsel %vm1847, %v3775, %v3397
      %v3808 = vsel %vm1847, %v3776, %v3399
      %v3809 = vsel %vm1847, %v3777, %v3401
      %v3810 = vsel %vm1847, %v3778, %v3403
      %v3811 = vsel %vm1847, %v3779, %v3405
      %v3812 = vsel %vm1847, %v3780, %v3407
      %v3813 = vsel %vm1847, %v3781, %v3409
      %v3814 = vsel %vm1847, %v3782, %v3411
      %v3815 = vsel %vm1847, %v3783, %v3413
      %v3816 = vsel %vm1847, %v3784, %v3415
      %v3817 = vsel %vm1847, %v3785, %v3417
      %v3818 = vsel %vm1847, %v3786, %v3419
      %v3819 = vsel %vm1847, %v3787, %v3421
      %v3820 = vsel %vm1847, %v3788, %v3423
      %v3821 = vsel %vm1847, %v3789, %v3425
      %v3822 = vsel %vm1847, %v3790, %v3427
      %v3823 = vsel %vm1847, %v3791, %v3429
      %v3824 = vsel %vm1847, %v3792, %v3431
      %v3825 = vsel %vm1847, %v3793, %v3433
      %v3826 = vsel %vm1847, %v3794, %v3435
      %v3827 = vsel %vm1847, %v3795, %v3437
      %v3828 = vsel %vm1847, %v3796, %v3439
      %v3829 = vsel %vm1847, %v3797, %v3441
      %v3830 = vsel %vm1847, %v3798, %v3443
      %v3831 = vsel %vm1847, %v3799, %v3445
      %v3832 = vsel %vm1847, %v3800, %v3447
      %v3833 = vsel %vm1847, %v3801, %v3449
      %v3834 = vsel %vm1880, %v3802, %v3515
      %v3835 = vsel %vm1880, %v3803, %v3517
      %v3836 = vsel %vm1880, %v3804, %v3519
      %v3837 = vsel %vm1880, %v3805, %v3521
      %v3838 = vsel %vm1880, %v3806, %v3523
      %v3839 = vsel %vm1880, %v3807, %v3525
      %v3840 = vsel %vm1880, %v3808, %v3527
      %v3841 = vsel %vm1880, %v3809, %v3529
      %v3842 = vsel %vm1880, %v3810, %v3531
      %v3843 = vsel %vm1880, %v3811, %v3533
      %v3844 = vsel %vm1880, %v3812, %v3535
      %v3845 = vsel %vm1880, %v3813, %v3537
      %v3846 = vsel %vm1880, %v3814, %v3539
      %v3847 = vsel %vm1880, %v3815, %v3541
      %v3848 = vsel %vm1880, %v3816, %v3543
      %v3849 = vsel %vm1880, %v3817, %v3545
      %v3850 = vsel %vm1880, %v3818, %v3547
      %v3851 = vsel %vm1880, %v3819, %v3549
      %v3852 = vsel %vm1880, %v3820, %v3551
      %v3853 = vsel %vm1880, %v3821, %v3553
      %v3854 = vsel %vm1880, %v3822, %v3555
      %v3855 = vsel %vm1880, %v3823, %v3557
      %v3856 = vsel %vm1880, %v3824, %v3559
      %v3857 = vsel %vm1880, %v3825, %v3561
      %v3858 = vsel %vm1880, %v3826, %v3563
      %v3859 = vsel %vm1880, %v3827, %v3565
      %v3860 = vsel %vm1880, %v3828, %v3567
      %v3861 = vsel %vm1880, %v3829, %v3569
      %v3862 = vsel %vm1880, %v3830, %v3571
      %v3863 = vsel %vm1880, %v3831, %v3573
      %v3864 = vsel %vm1880, %v3832, %v3575
      %v3865 = vsel %vm1880, %v3833, %v3577
      %v3866 = vpack.c.bf16 %v3835, %v3834
      %v3867 = vpack.c.bf16 %v3837, %v3836
      %v3868 = vpack.c.bf16 %v3839, %v3838
      %v3869 = vpack.c.bf16 %v3841, %v3840
      %v3870 = vpack.c.bf16 %v3843, %v3842
      %v3871 = vpack.c.bf16 %v3845, %v3844
      %v3872 = vpack.c.bf16 %v3847, %v3846
      %v3873 = vpack.c.bf16 %v3849, %v3848
      %v3874 = vpack.c.bf16 %v3851, %v3850
      %v3875 = vpack.c.bf16 %v3853, %v3852
      %v3876 = vpack.c.bf16 %v3855, %v3854
      %v3877 = vpack.c.bf16 %v3857, %v3856
      %v3878 = vpack.c.bf16 %v3859, %v3858
      %v3879 = vpack.c.bf16 %v3861, %v3860
      %v3880 = vpack.c.bf16 %v3863, %v3862
      %v3881 = vpack.c.bf16 %v3865, %v3864
      %v3882 = vld [vmem:[%s3] sm:$0xf]
      %v3883 = vld [vmem:[%s3 + $0x4] sm:$0xf]
      %v3884 = vld [vmem:[%s3 + $0x8] sm:$0xf]
      %v3885 = vld [vmem:[%s3 + $0xc] sm:$0xf]
      %v3886 = vld [vmem:[%s3 + $0x10] sm:$0x3]
      %v3887 = vld [vmem:[%s4] sm:$0x1]
      %v3889 = vlaneseq
      %v3890 = vshrl.u32 %v3889, 7
      %v3891 = vsub.s32 0, %v3890
      %v3892 = vrot.slane %v3887, %v3891
      %v3899 = vunpack.c.l.b16 %v3882
      %v3900 = vunpack.c.l.b16 %v3883
      %v3901 = vunpack.c.l.b16 %v3884
      %v3902 = vunpack.c.l.b16 %v3885
      %v3903 = vunpack.c.l.b16 %v3886
      %v3904 = vpack.c.b16 %v3900, %v3899
      %v3905 = vpack.c.b16 %v3902, %v3901
      %v3906 = vpack.c.b16 %v3903, %v3903
      %v3910 = vsel %vm1956, %v3866, 0
      %v3913 = vsel %vm1956, %v3867, 0
      %v3916 = vsel %vm1956, %v3868, 0
      %v3919 = vsel %vm1956, %v3869, 0
      %v3922 = vsel %vm1956, %v3870, 0
      %v3925 = vsel %vm1956, %v3871, 0
      %v3928 = vsel %vm1956, %v3872, 0
      %v3931 = vsel %vm1956, %v3873, 0
      %v3934 = vsel %vm1956, %v3874, 0
      %v3937 = vsel %vm1956, %v3875, 0
      %v3940 = vsel %vm1956, %v3876, 0
      %v3943 = vsel %vm1956, %v3877, 0
      %v3946 = vsel %vm1956, %v3878, 0
      %v3949 = vsel %vm1956, %v3879, 0
      %v3952 = vsel %vm1956, %v3880, 0
      %v3955 = vsel %vm1956, %v3881, 0
      %v3958 = vsel %vm2005, %v3906, 0
      %3960 = vmatprep.subr.bf16.mxu0 0
      %3961 = vmatpush1.bf16.msra.mxu0 %v3904
      %3962 = vmatprep.subr.bf16.mxu0 0
      %3963 = vmatpush1.bf16.msra.mxu0 %v3905
      %3964 = vmatprep.subr.bf16.mxu0 0
      %3965 = vmatpush1.bf16.msra.mxu0 %v3958
      %3966 = vmatprep.subr.bf16.mxu0 0
      %3967 = vmatpush1.bf16.msra.mxu0 0
      %3968 = vmatprep.subr.bf16.mxu0 0
      %3969 = vmatpush1.bf16.msra.mxu0 0
      %3970 = vmatprep.subr.bf16.mxu0 0
      %3971 = vmatpush1.bf16.msra.mxu0 0
      %3972 = vmatprep.subr.bf16.mxu0 0
      %3973 = vmatpush1.bf16.msra.mxu0 0
      %3974 = vmatprep.subr.bf16.mxu0 0
      %3975 = vmatpush1.bf16.msra.mxu0 0
      %3976 = vmatprep.subr.bf16.mxu0 0
      %3977 = vmatpush1.bf16.msra.mxu0 0
      %3978 = vmatprep.subr.bf16.mxu0 0
      %3979 = vmatpush1.bf16.msra.mxu0 0
      %3980 = vmatprep.subr.bf16.mxu0 0
      %3981 = vmatpush1.bf16.msra.mxu0 0
      %3982 = vmatprep.subr.bf16.mxu0 0
      %3983 = vmatpush1.bf16.msra.mxu0 0
      %3984 = vmatprep.subr.bf16.mxu0 0
      %3985 = vmatpush1.bf16.msra.mxu0 0
      %3986 = vmatprep.subr.bf16.mxu0 0
      %3987 = vmatpush1.bf16.msra.mxu0 0
      %3988 = vmatprep.subr.bf16.mxu0 0
      %3989 = vmatpush1.bf16.msra.mxu0 0
      %3990 = vmatprep.subr.bf16.mxu0 0
      %3991 = vmatpush1.bf16.msra.mxu0 0
      %3992 = vmatprep.mubr.bf16.mxu0 0
      %3993 = vmatmul.mubr.bf16.gmra.mrb[0].mxu0 %v3910
      %v3994 = vpop.f32.mrb[0].mxu0
      %v3995 = vadd.f32 %v3892, %v3994
      %v3996 = vpop.f32.mrb[0].mxu0
      %v3997 = vpop.f32.mrb[0].mxu0
      %v3998 = vadd.f32 %v3892, %v3997
      %v3999 = vpop.f32.mrb[0].mxu0
      %4000 = vmatprep.mubr.bf16.mxu0 0
      %4001 = vmatmul.mubr.bf16.gmra.mrb[0].mxu0 %v3913
      %v4002 = vpop.f32.mrb[0].mxu0
      %v4003 = vadd.f32 %v3892, %v4002
      %v4004 = vpop.f32.mrb[0].mxu0
      %v4005 = vpop.f32.mrb[0].mxu0
      %v4006 = vadd.f32 %v3892, %v4005
      %v4007 = vpop.f32.mrb[0].mxu0
      %4008 = vmatprep.mubr.bf16.mxu0 0
      %4009 = vmatmul.mubr.bf16.gmra.mrb[0].mxu0 %v3916
      %v4010 = vpop.f32.mrb[0].mxu0
      %v4011 = vadd.f32 %v3892, %v4010
      %v4012 = vpop.f32.mrb[0].mxu0
      %v4013 = vpop.f32.mrb[0].mxu0
      %v4014 = vadd.f32 %v3892, %v4013
      %v4015 = vpop.f32.mrb[0].mxu0
      %4016 = vmatprep.mubr.bf16.mxu0 0
      %4017 = vmatmul.mubr.bf16.gmra.mrb[0].mxu0 %v3919
      %v4018 = vpop.f32.mrb[0].mxu0
      %v4019 = vadd.f32 %v3892, %v4018
      %v4020 = vpop.f32.mrb[0].mxu0
      %v4021 = vpop.f32.mrb[0].mxu0
      %v4022 = vadd.f32 %v3892, %v4021
      %v4023 = vpop.f32.mrb[0].mxu0
      %4024 = vmatprep.mubr.bf16.mxu0 0
      %4025 = vmatmul.mubr.bf16.gmra.mrb[0].mxu0 %v3922
      %v4026 = vpop.f32.mrb[0].mxu0
      %v4027 = vadd.f32 %v3892, %v4026
      %v4028 = vpop.f32.mrb[0].mxu0
      %v4029 = vpop.f32.mrb[0].mxu0
      %v4030 = vadd.f32 %v3892, %v4029
      %v4031 = vpop.f32.mrb[0].mxu0
      %4032 = vmatprep.mubr.bf16.mxu0 0
      %4033 = vmatmul.mubr.bf16.gmra.mrb[0].mxu0 %v3925
      %v4034 = vpop.f32.mrb[0].mxu0
      %v4035 = vadd.f32 %v3892, %v4034
      %v4036 = vpop.f32.mrb[0].mxu0
      %v4037 = vpop.f32.mrb[0].mxu0
      %v4038 = vadd.f32 %v3892, %v4037
      %v4039 = vpop.f32.mrb[0].mxu0
      %4040 = vmatprep.mubr.bf16.mxu0 0
      %4041 = vmatmul.mubr.bf16.gmra.mrb[0].mxu0 %v3928
      %v4042 = vpop.f32.mrb[0].mxu0
      %v4043 = vadd.f32 %v3892, %v4042
      %v4044 = vpop.f32.mrb[0].mxu0
      %v4045 = vpop.f32.mrb[0].mxu0
      %v4046 = vadd.f32 %v3892, %v4045
      %v4047 = vpop.f32.mrb[0].mxu0
      %4048 = vmatprep.mubr.bf16.mxu0 0
      %4049 = vmatmul.mubr.bf16.gmra.mrb[0].mxu0 %v3931
      %v4050 = vpop.f32.mrb[0].mxu0
      %v4051 = vadd.f32 %v3892, %v4050
      %v4052 = vpop.f32.mrb[0].mxu0
      %v4053 = vpop.f32.mrb[0].mxu0
      %v4054 = vadd.f32 %v3892, %v4053
      %v4055 = vpop.f32.mrb[0].mxu0
      %4056 = vmatprep.mubr.bf16.mxu0 0
      %4057 = vmatmul.mubr.bf16.gmra.mrb[0].mxu0 %v3934
      %v4058 = vpop.f32.mrb[0].mxu0
      %v4059 = vadd.f32 %v3892, %v4058
      %v4060 = vpop.f32.mrb[0].mxu0
      %v4061 = vpop.f32.mrb[0].mxu0
      %v4062 = vadd.f32 %v3892, %v4061
      %v4063 = vpop.f32.mrb[0].mxu0
      %4064 = vmatprep.mubr.bf16.mxu0 0
      %4065 = vmatmul.mubr.bf16.gmra.mrb[0].mxu0 %v3937
      %v4066 = vpop.f32.mrb[0].mxu0
      %v4067 = vadd.f32 %v3892, %v4066
      %v4068 = vpop.f32.mrb[0].mxu0
      %v4069 = vpop.f32.mrb[0].mxu0
      %v4070 = vadd.f32 %v3892, %v4069
      %v4071 = vpop.f32.mrb[0].mxu0
      %4072 = vmatprep.mubr.bf16.mxu0 0
      %4073 = vmatmul.mubr.bf16.gmra.mrb[0].mxu0 %v3940
      %v4074 = vpop.f32.mrb[0].mxu0
      %v4075 = vadd.f32 %v3892, %v4074
      %v4076 = vpop.f32.mrb[0].mxu0
      %v4077 = vpop.f32.mrb[0].mxu0
      %v4078 = vadd.f32 %v3892, %v4077
      %v4079 = vpop.f32.mrb[0].mxu0
      %4080 = vmatprep.mubr.bf16.mxu0 0
      %4081 = vmatmul.mubr.bf16.gmra.mrb[0].mxu0 %v3943
      %v4082 = vpop.f32.mrb[0].mxu0
      %v4083 = vadd.f32 %v3892, %v4082
      %v4084 = vpop.f32.mrb[0].mxu0
      %v4085 = vpop.f32.mrb[0].mxu0
      %v4086 = vadd.f32 %v3892, %v4085
      %v4087 = vpop.f32.mrb[0].mxu0
      %4088 = vmatprep.mubr.bf16.mxu0 0
      %4089 = vmatmul.mubr.bf16.gmra.mrb[0].mxu0 %v3946
      %v4090 = vpop.f32.mrb[0].mxu0
      %v4091 = vadd.f32 %v3892, %v4090
      %v4092 = vpop.f32.mrb[0].mxu0
      %v4093 = vpop.f32.mrb[0].mxu0
      %v4094 = vadd.f32 %v3892, %v4093
      %v4095 = vpop.f32.mrb[0].mxu0
      %4096 = vmatprep.mubr.bf16.mxu0 0
      %4097 = vmatmul.mubr.bf16.gmra.mrb[0].mxu0 %v3949
      %v4098 = vpop.f32.mrb[0].mxu0
      %v4099 = vadd.f32 %v3892, %v4098
      %v4100 = vpop.f32.mrb[0].mxu0
      %v4101 = vpop.f32.mrb[0].mxu0
      %v4102 = vadd.f32 %v3892, %v4101
      %v4103 = vpop.f32.mrb[0].mxu0
      %4104 = vmatprep.mubr.bf16.mxu0 0
      %4105 = vmatmul.mubr.bf16.gmra.mrb[0].mxu0 %v3952
      %v4106 = vpop.f32.mrb[0].mxu0
      %v4107 = vadd.f32 %v3892, %v4106
      %v4108 = vpop.f32.mrb[0].mxu0
      %v4109 = vpop.f32.mrb[0].mxu0
      %v4110 = vadd.f32 %v3892, %v4109
      %v4111 = vpop.f32.mrb[0].mxu0
      %4112 = vmatprep.mubr.bf16.mxu0 0
      %4113 = vmatmul.mubr.bf16.gmra.mrb[0].mxu0 %v3955
      %v4114 = vpop.f32.mrb[0].mxu0
      %v4115 = vadd.f32 %v3892, %v4114
      %v4116 = vpop.f32.mrb[0].mxu0
      %v4117 = vpop.f32.mrb[0].mxu0
      %v4118 = vadd.f32 %v3892, %v4117
      %v4119 = vpop.f32.mrb[0].mxu0
      %4120 = vdwg.mxu0
      %v4121 = vadd.f32 %v3995, %v272
      %v4122 = vadd.f32 %v3998, %v273
      %v4123 = vadd.f32 %v4003, %v274
      %v4124 = vadd.f32 %v4006, %v275
      %v4125 = vadd.f32 %v4011, %v276
      %v4126 = vadd.f32 %v4014, %v277
      %v4127 = vadd.f32 %v4019, %v278
      %v4128 = vadd.f32 %v4022, %v279
      %v4129 = vadd.f32 %v4027, %v280
      %v4130 = vadd.f32 %v4030, %v281
      %v4131 = vadd.f32 %v4035, %v282
      %v4132 = vadd.f32 %v4038, %v283
      %v4133 = vadd.f32 %v4043, %v284
      %v4134 = vadd.f32 %v4046, %v285
      %v4135 = vadd.f32 %v4051, %v286
      %v4136 = vadd.f32 %v4054, %v287
      %v4137 = vadd.f32 %v4059, %v288
      %v4138 = vadd.f32 %v4062, %v289
      %v4139 = vadd.f32 %v4067, %v290
      %v4140 = vadd.f32 %v4070, %v291
      %v4141 = vadd.f32 %v4075, %v292
      %v4142 = vadd.f32 %v4078, %v293
      %v4143 = vadd.f32 %v4083, %v294
      %v4144 = vadd.f32 %v4086, %v295
      %v4145 = vadd.f32 %v4091, %v296
      %v4146 = vadd.f32 %v4094, %v297
      %v4147 = vadd.f32 %v4099, %v298
      %v4148 = vadd.f32 %v4102, %v299
      %v4149 = vadd.f32 %v4107, %v300
      %v4150 = vadd.f32 %v4110, %v301
      %v4151 = vadd.f32 %v4115, %v302
      %v4152 = vadd.f32 %v4118, %v303
      %vm4153 = vcmp.ge.f32.partialorder %v4121, 0.0
      %vm4154 = vcmp.ge.f32.partialorder %v4122, 0.0
      %vm4155 = vcmp.ge.f32.partialorder %v4123, 0.0
      %vm4156 = vcmp.ge.f32.partialorder %v4124, 0.0
      %vm4157 = vcmp.ge.f32.partialorder %v4125, 0.0
      %vm4158 = vcmp.ge.f32.partialorder %v4126, 0.0
      %vm4159 = vcmp.ge.f32.partialorder %v4127, 0.0
      %vm4160 = vcmp.ge.f32.partialorder %v4128, 0.0
      %vm4161 = vcmp.ge.f32.partialorder %v4129, 0.0
      %vm4162 = vcmp.ge.f32.partialorder %v4130, 0.0
      %vm4163 = vcmp.ge.f32.partialorder %v4131, 0.0
      %vm4164 = vcmp.ge.f32.partialorder %v4132, 0.0
      %vm4165 = vcmp.ge.f32.partialorder %v4133, 0.0
      %vm4166 = vcmp.ge.f32.partialorder %v4134, 0.0
      %vm4167 = vcmp.ge.f32.partialorder %v4135, 0.0
      %vm4168 = vcmp.ge.f32.partialorder %v4136, 0.0
      %vm4169 = vcmp.ge.f32.partialorder %v4137, 0.0
      %vm4170 = vcmp.ge.f32.partialorder %v4138, 0.0
      %vm4171 = vcmp.ge.f32.partialorder %v4139, 0.0
      %vm4172 = vcmp.ge.f32.partialorder %v4140, 0.0
      %vm4173 = vcmp.ge.f32.partialorder %v4141, 0.0
      %vm4174 = vcmp.ge.f32.partialorder %v4142, 0.0
      %vm4175 = vcmp.ge.f32.partialorder %v4143, 0.0
      %vm4176 = vcmp.ge.f32.partialorder %v4144, 0.0
      %vm4177 = vcmp.ge.f32.partialorder %v4145, 0.0
      %vm4178 = vcmp.ge.f32.partialorder %v4146, 0.0
      %vm4179 = vcmp.ge.f32.partialorder %v4147, 0.0
      %vm4180 = vcmp.ge.f32.partialorder %v4148, 0.0
      %vm4181 = vcmp.ge.f32.partialorder %v4149, 0.0
      %vm4182 = vcmp.ge.f32.partialorder %v4150, 0.0
      %vm4183 = vcmp.ge.f32.partialorder %v4151, 0.0
      %vm4184 = vcmp.ge.f32.partialorder %v4152, 0.0
      %v4185 = vmul.f32 %v4121, 0.01
      %v4186 = vmul.f32 %v4122, 0.01
      %v4187 = vmul.f32 %v4123, 0.01
      %v4188 = vmul.f32 %v4124, 0.01
      %v4189 = vmul.f32 %v4125, 0.01
      %v4190 = vmul.f32 %v4126, 0.01
      %v4191 = vmul.f32 %v4127, 0.01
      %v4192 = vmul.f32 %v4128, 0.01
      %v4193 = vmul.f32 %v4129, 0.01
      %v4194 = vmul.f32 %v4130, 0.01
      %v4195 = vmul.f32 %v4131, 0.01
      %v4196 = vmul.f32 %v4132, 0.01
      %v4197 = vmul.f32 %v4133, 0.01
      %v4198 = vmul.f32 %v4134, 0.01
      %v4199 = vmul.f32 %v4135, 0.01
      %v4200 = vmul.f32 %v4136, 0.01
      %v4201 = vmul.f32 %v4137, 0.01
      %v4202 = vmul.f32 %v4138, 0.01
      %v4203 = vmul.f32 %v4139, 0.01
      %v4204 = vmul.f32 %v4140, 0.01
      %v4205 = vmul.f32 %v4141, 0.01
      %v4206 = vmul.f32 %v4142, 0.01
      %v4207 = vmul.f32 %v4143, 0.01
      %v4208 = vmul.f32 %v4144, 0.01
      %v4209 = vmul.f32 %v4145, 0.01
      %v4210 = vmul.f32 %v4146, 0.01
      %v4211 = vmul.f32 %v4147, 0.01
      %v4212 = vmul.f32 %v4148, 0.01
      %v4213 = vmul.f32 %v4149, 0.01
      %v4214 = vmul.f32 %v4150, 0.01
      %v4215 = vmul.f32 %v4151, 0.01
      %v4216 = vmul.f32 %v4152, 0.01
      %v4217 = vsel %vm4153, %v4121, %v4185
      %v4218 = vsel %vm4154, %v4122, %v4186
      %v4219 = vsel %vm4155, %v4123, %v4187
      %v4220 = vsel %vm4156, %v4124, %v4188
      %v4221 = vsel %vm4157, %v4125, %v4189
      %v4222 = vsel %vm4158, %v4126, %v4190
      %v4223 = vsel %vm4159, %v4127, %v4191
      %v4224 = vsel %vm4160, %v4128, %v4192
      %v4225 = vsel %vm4161, %v4129, %v4193
      %v4226 = vsel %vm4162, %v4130, %v4194
      %v4227 = vsel %vm4163, %v4131, %v4195
      %v4228 = vsel %vm4164, %v4132, %v4196
      %v4229 = vsel %vm4165, %v4133, %v4197
      %v4230 = vsel %vm4166, %v4134, %v4198
      %v4231 = vsel %vm4167, %v4135, %v4199
      %v4232 = vsel %vm4168, %v4136, %v4200
      %v4233 = vsel %vm4169, %v4137, %v4201
      %v4234 = vsel %vm4170, %v4138, %v4202
      %v4235 = vsel %vm4171, %v4139, %v4203
      %v4236 = vsel %vm4172, %v4140, %v4204
      %v4237 = vsel %vm4173, %v4141, %v4205
      %v4238 = vsel %vm4174, %v4142, %v4206
      %v4239 = vsel %vm4175, %v4143, %v4207
      %v4240 = vsel %vm4176, %v4144, %v4208
      %v4241 = vsel %vm4177, %v4145, %v4209
      %v4242 = vsel %vm4178, %v4146, %v4210
      %v4243 = vsel %vm4179, %v4147, %v4211
      %v4244 = vsel %vm4180, %v4148, %v4212
      %v4245 = vsel %vm4181, %v4149, %v4213
      %v4246 = vsel %vm4182, %v4150, %v4214
      %v4247 = vsel %vm4183, %v4151, %v4215
      %v4248 = vsel %vm4184, %v4152, %v4216
      %4249 = vst.msk [vmem:[%s224] sm:$0xff] %vm226, %v4217
      %4250 = vst.msk [vmem:[%s224 + $0x8] sm:$0xff] %vm226, %v4218
      %4251 = vst.msk [vmem:[%s224 + $0x10] sm:$0xff] %vm226, %v4219
      %4252 = vst.msk [vmem:[%s224 + $0x18] sm:$0xff] %vm226, %v4220
      %4253 = vst.msk [vmem:[%s224 + $0x20] sm:$0xff] %vm226, %v4221
      %4254 = vst.msk [vmem:[%s224 + $0x28] sm:$0xff] %vm226, %v4222
      %4255 = vst.msk [vmem:[%s224 + $0x30] sm:$0xff] %vm226, %v4223
      %4256 = vst.msk [vmem:[%s224 + $0x38] sm:$0xff] %vm226, %v4224
      %4257 = vst.msk [vmem:[%s224 + $0x40] sm:$0xff] %vm226, %v4225
      %4258 = vst.msk [vmem:[%s224 + $0x48] sm:$0xff] %vm226, %v4226
      %4259 = vst.msk [vmem:[%s224 + $0x50] sm:$0xff] %vm226, %v4227
      %4260 = vst.msk [vmem:[%s224 + $0x58] sm:$0xff] %vm226, %v4228
      %4261 = vst.msk [vmem:[%s224 + $0x60] sm:$0xff] %vm226, %v4229
      %4262 = vst.msk [vmem:[%s224 + $0x68] sm:$0xff] %vm226, %v4230
      %4263 = vst.msk [vmem:[%s224 + $0x70] sm:$0xff] %vm226, %v4231
      %4264 = vst.msk [vmem:[%s224 + $0x78] sm:$0xff] %vm226, %v4232
      %4265 = vst.msk [vmem:[%s224 + $0x80] sm:$0xff] %vm226, %v4233
      %4266 = vst.msk [vmem:[%s224 + $0x88] sm:$0xff] %vm226, %v4234
      %4267 = vst.msk [vmem:[%s224 + $0x90] sm:$0xff] %vm226, %v4235
      %4268 = vst.msk [vmem:[%s224 + $0x98] sm:$0xff] %vm226, %v4236
      %4269 = vst.msk [vmem:[%s224 + $0xa0] sm:$0xff] %vm226, %v4237
      %4270 = vst.msk [vmem:[%s224 + $0xa8] sm:$0xff] %vm226, %v4238
      %4271 = vst.msk [vmem:[%s224 + $0xb0] sm:$0xff] %vm226, %v4239
      %4272 = vst.msk [vmem:[%s224 + $0xb8] sm:$0xff] %vm226, %v4240
      %4273 = vst.msk [vmem:[%s224 + $0xc0] sm:$0xff] %vm226, %v4241
      %4274 = vst.msk [vmem:[%s224 + $0xc8] sm:$0xff] %vm226, %v4242
      %4275 = vst.msk [vmem:[%s224 + $0xd0] sm:$0xff] %vm226, %v4243
      %4276 = vst.msk [vmem:[%s224 + $0xd8] sm:$0xff] %vm226, %v4244
      %4277 = vst.msk [vmem:[%s224 + $0xe0] sm:$0xff] %vm226, %v4245
      %4278 = vst.msk [vmem:[%s224 + $0xe8] sm:$0xff] %vm226, %v4246
      %4279 = vst.msk [vmem:[%s224 + $0xf0] sm:$0xff] %vm226, %v4247
      %4280 = vst.msk [vmem:[%s224 + $0xf8] sm:$0xff] %vm226, %v4248
      %p4281 = scmp.lt.s32.totalorder %s16, 1
      %s4282 = scalar_select %p4281, %s16, 1
      %s4283 = smul.addr %s4282, 32
      %s4284 = smul.addr %s4283, 8
      %s4285 = scalar_lea.vmem %s5, %s4284
      // Predicated region
      $region41: #{tpu_custom_call.1} parent=39 // pred_check
        %p4286 = pneg %p144
      $region42: #{tpu_custom_call.1} parent=39 // pred_check_branch
        %4288 = sbr.rel (%p4286) target = $region44
      $region43: #{tpu_custom_call.1} parent=39 // pred_region
        _
      $region44: #{tpu_custom_call.1} parent=39 // pred_fallthru
        _
    $region40: #{tpu_custom_call.1} parent=5 // pred_fallthru
      _
    %p4289 = scmp.le.s32.totalorder 2, %s11
    // Predicated region
    $region45: #{tpu_custom_call.1} parent=5 // pred_check
      %p4290 = pneg %p4289
    $region46: #{tpu_custom_call.1} parent=5 // pred_check_branch
      %4292 = sbr.rel (%p4290) target = $region48
    $region47: #{tpu_custom_call.1} parent=5 // pred_region
      %s4293 = ssub.s32 %s11, 2
      // Predicated region
      $region49: #{tpu_custom_call.1} parent=47 // pred_check
        %p4294 = pneg %p150
      $region50: #{tpu_custom_call.1} parent=47 // pred_check_branch
        %4296 = sbr.rel (%p4294) target = $region52
      $region51: #{tpu_custom_call.1} parent=47 // pred_region
        %p4297 = scmp.lt.s32.totalorder %s17, 1
        %s4298 = scalar_select %p4297, %s17, 1
        %s4299 = smul.addr %s4298, 32
        %s4300 = smul.addr %s4299, 8
        %s4301 = scalar_lea.vmem %s5, %s4300
      $region52: #{tpu_custom_call.1} parent=47 // pred_fallthru
        _
    $region48: #{tpu_custom_call.1} parent=5 // pred_fallthru
      _
  $region6: #{tpu_custom_call.1} parent=0 // loop_footer
    %s15 = sadd.s32 1, %s11
  $region7: #{tpu_custom_call.1} parent=0 // loop_footer_branch
    %10 = sbr.rel target = $region3
  $region8: #{tpu_custom_call.1} parent=0 // loop_exit
    _

</llo_original>
